<compile_context>
chip_gen: v7x
topology: tpu7x:2x2x1
jax: 0.10.0
libtpu: 0.0.40
codegen_flags: <defaults>
</compile_context>

<pallas_src>
import numpy as np
import jax
import jax.numpy as jnp
from jax.experimental import pallas as pl
from jax.experimental.pallas import tpu as pltpu

# ---------------- configuration (small shapes consistent with the module) -----
BATCH = 2
IMAGE_FEATURE_DIM = 16      # cnn feature channels (module default 256)
STATE_DIM = 32              # GGNN state_dim (> channels -> exercises zero pad)
OUTPUT_DIM = 4              # logits over OUTPUT_DIM**2 local bins (module: 15)
MAX_POLY_LEN = 8
NUM_NODES = 2 * MAX_POLY_LEN
N_EDGE_TYPES = 3
GGNN_N_STEPS = 3
GGNN_GRID = 16              # spatial size of the cnn feature map (module: 112)
CONV_K = 15
CONV_PAD = 7


# ---------------- Pallas kernel 1: extract_local_feature (15x15 conv) ---------
# grid = (B, H//tH, Cout//tCout, KH).  kh is a grid reduction axis ("arbitrary")
# with an f32 VMEM accumulator scratch; only the 15-tap kw loop stays in the
# body.  Weights are tiled (1, K, Cin, tCout) per kh / per Cout tile, the output
# is a (tH, W, tCout) row strip, and matmul operands are bf16.
def _conv15_kernel(xp_ref, w_ref, b_ref, out_ref, acc_ref):
    # xp_ref : (1, Hp, Wp, Cin)   padded NHWC input for one batch element (bf16)
    # w_ref  : (1, K, Cin, tCout) one kh-slice of the HWIO conv weight (bf16)
    # b_ref  : (1, tCout)         bias (f32)
    # out_ref: (1, tH, W, tCout)  output row strip (f32)
    # acc_ref: (tH*W, tCout)      f32 accumulator, carried across the kh axis
    ht = pl.program_id(1)
    kh = pl.program_id(3)

    tH, W, tCout = out_ref.shape[1], out_ref.shape[2], out_ref.shape[3]
    K = w_ref.shape[1]
    Cin = w_ref.shape[2]

    @pl.when(kh == 0)
    def _():
        acc_ref[...] = jnp.zeros_like(acc_ref)

    # padded input rows [ht*tH + kh, ht*tH + kh + tH) -- one slice per kh step
    row0 = ht * tH + kh
    slab = xp_ref[0, pl.ds(row0, tH), :, :]                    # (tH, Wp, Cin) bf16

    acc = acc_ref[...]
    for kw in range(K):                                        # 15 static taps
        patch = slab[:, kw:kw + W, :].reshape(tH * W, Cin)
        acc = acc + jnp.dot(patch, w_ref[0, kw],
                            preferred_element_type=jnp.float32)
    acc_ref[...] = acc

    @pl.when(kh == pl.num_programs(3) - 1)
    def _():
        out_ref[0] = (acc_ref[...] + b_ref[...]).reshape(tH, W, tCout)


def extract_local_feature(x_nchw, conv_w, conv_b):
    B, C, H, W = x_nchw.shape
    Cout = conv_w.shape[3]
    t_cout = Cout if Cout <= 128 else 128                      # lane-aligned Cout tile
    t_h = 8 if H % 8 == 0 else H                               # output row strip

    x = jnp.transpose(x_nchw, (0, 2, 3, 1)).astype(jnp.bfloat16)   # NCHW -> NHWC, bf16
    xp = jnp.pad(x, ((0, 0), (CONV_PAD, CONV_PAD), (CONV_PAD, CONV_PAD), (0, 0)))
    Hp, Wp = H + 2 * CONV_PAD, W + 2 * CONV_PAD
    w_bf = conv_w.astype(jnp.bfloat16)

    grid = (B, H // t_h, Cout // t_cout, CONV_K)
    return pl.pallas_call(
        _conv15_kernel,
        out_shape=jax.ShapeDtypeStruct((B, H, W, Cout), jnp.float32),
        grid=grid,
        in_specs=[
            pl.BlockSpec((1, Hp, Wp, C), lambda b, ht, ct, kh: (b, 0, 0, 0)),
            pl.BlockSpec((1, CONV_K, C, t_cout), lambda b, ht, ct, kh: (kh, 0, 0, ct)),
            pl.BlockSpec((1, t_cout), lambda b, ht, ct, kh: (0, ct)),
        ],
        out_specs=pl.BlockSpec((1, t_h, W, t_cout), lambda b, ht, ct, kh: (b, ht, 0, ct)),
        scratch_shapes=[pltpu.VMEM((t_h * W, t_cout), jnp.float32)],
        compiler_params=pltpu.CompilerParams(
            dimension_semantics=("parallel", "parallel", "parallel", "arbitrary"),
            vmem_limit_bytes=48 * 1024 * 1024),
    )(xp, w_bf, conv_b)


# ---------------- Pallas kernel 2: GGNN inference (propagate + GRU + head) ----
# Single invocation (no grid): the whole batch fits VMEM; state is (B*N, S).
# Edge-type first layers are fused into one (S, 3S) matmul; the (N, 3N)
# adjacency bmm is replaced by a per-edge sum of (N,N)@(N,S) products; the two
# GRU gate linears are fused (both take `curr` in the reference module).
def _ggnn_kernel(feat_ref, fadj_ref, badj_ref,
                 inW1s, inb1s, inW2s, inb2s,
                 outW1s, outb1s, outW2s, outb2s,
                 gW, gb, toW, tob, tcW, tcb,
                 oW1, ob1, oW2, ob2,
                 logits_ref):
    B, N, S = feat_ref.shape
    BN = B * N
    bf, f32 = jnp.bfloat16, jnp.float32

    h = feat_ref[...].reshape(BN, S).astype(f32)          # (BN, S) f32 state
    fadj = fadj_ref[...]                                  # (B, N, 3N) bf16
    badj = badj_ref[...]                                  # (B, N, 3N) bf16

    for _ in range(GGNN_N_STEPS):
        hb = h.astype(bf)
        # fused first layers of the 3 in/out edge-type MLPs: one (BN,S)x(S,3S) each
        t_in = jnp.tanh(jnp.dot(hb, inW1s[...], preferred_element_type=f32) + inb1s[...])
        t_out = jnp.tanh(jnp.dot(hb, outW1s[...], preferred_element_type=f32) + outb1s[...])

        fwd = jnp.zeros((B, N, S), f32)
        bwd = jnp.zeros((B, N, S), f32)
        for e in range(N_EDGE_TYPES):
            in_e = (jnp.dot(t_in[:, e * S:(e + 1) * S].astype(bf), inW2s[e],
                            preferred_element_type=f32) + inb2s[e])          # (BN, S)
            out_e = (jnp.dot(t_out[:, e * S:(e + 1) * S].astype(bf), outW2s[e],
                             preferred_element_type=f32) + outb2s[e])        # (BN, S)
            fadj_e = fadj[:, :, e * N:(e + 1) * N]                           # (B, N, N)
            badj_e = badj[:, :, e * N:(e + 1) * N]
            fwd = fwd + jnp.einsum('bnm,bms->bns', fadj_e,
                                   in_e.reshape(B, N, S).astype(bf),
                                   preferred_element_type=f32)
            bwd = bwd + jnp.einsum('bnm,bms->bns', badj_e,
                                   out_e.reshape(B, N, S).astype(bf),
                                   preferred_element_type=f32)

        curr = jnp.concatenate([fwd.reshape(BN, S), bwd.reshape(BN, S)], axis=1)  # (BN,2S)
        currb = curr.astype(bf)
        # fused gate linear: gW = gates_other_h_fc.W + gates_curr_h_fc.W (both take curr)
        pre_gates = jnp.dot(currb, gW[...], preferred_element_type=f32) + gb[...]
        gates = pl.reciprocal(1.0 + jnp.exp(-pre_gates), approx=True)     # sigmoid via EUP
        update_gate = gates[:, :S]
        reset_gate = gates[:, S:]
        t_other = jnp.dot(currb, toW[...], preferred_element_type=f32) + tob[...]
        t_curr = jnp.dot((reset_gate * h).astype(bf), tcW[...],
                         preferred_element_type=f32) + tcb[...]
        transformed = jnp.tanh(t_other + t_curr)
        h = h + update_gate * (transformed - h)

    hidden = jnp.tanh(jnp.dot(h.astype(bf), oW1[...], preferred_element_type=f32) + ob1[...])
    logits = jnp.dot(hidden.astype(bf), oW2[...], preferred_element_type=f32) + ob2[...]
    logits_ref[...] = logits.reshape(logits_ref.shape)


def ggnn_inference(init_input, forward_adj, backward_adj, params):
    B, N, S = init_input.shape
    K2 = params['oW2'].shape[1]
    K2_pad = -(-K2 // 128) * 128        # lane-dense logits store; sliced back outside
    bf = jnp.bfloat16

    def cat3_w(w):   # (3, S, S) -> (S, 3S)
        return jnp.concatenate([w[e] for e in range(N_EDGE_TYPES)], axis=1).astype(bf)

    def cat3_b(b):   # (3, 1, S) -> (1, 3S)
        return jnp.concatenate([b[e] for e in range(N_EDGE_TYPES)], axis=1)

    weights = [
        cat3_w(params['inW1']), cat3_b(params['inb1']),
        params['inW2'].astype(bf), params['inb2'],
        cat3_w(params['outW1']), cat3_b(params['outb1']),
        params['outW2'].astype(bf), params['outb2'],
        (params['goW'] + params['gcW']).astype(bf), params['gob'] + params['gcb'],
        params['toW'].astype(bf), params['tob'],
        params['tcW'].astype(bf), params['tcb'],
        params['oW1'].astype(bf), params['ob1'],
        jnp.pad(params['oW2'], ((0, 0), (0, K2_pad - K2))).astype(bf),
        jnp.pad(params['ob2'], ((0, 0), (0, K2_pad - K2))),
    ]

    logits_pad = pl.pallas_call(
        _ggnn_kernel,
        out_shape=jax.ShapeDtypeStruct((B, N, K2_pad), jnp.float32),
    )(init_input.astype(jnp.float32),
      forward_adj.astype(bf), backward_adj.astype(bf), *weights)
    return logits_pad[:, :, :K2]


# ---------------- deterministic parameter init --------------------------------
def _linear(key, fan_in, shape):
    bound = 1.0 / np.sqrt(fan_in)
    return jax.random.uniform(key, shape, jnp.float32, -bound, bound)


def init_params(key):
    S, C, K2 = STATE_DIM, IMAGE_FEATURE_DIM, OUTPUT_DIM * OUTPUT_DIM
    keys = iter(jax.random.split(key, 64))
    p = {}
    # nn.Conv2d(C, C, kernel_size=15, padding=7, bias=True) -> HWIO weights
    p['conv_w'] = _linear(next(keys), C * CONV_K * CONV_K, (CONV_K, CONV_K, C, C))
    p['conv_b'] = _linear(next(keys), C * CONV_K * CONV_K, (1, C))

    def stack3(fan_in, shape):
        return jnp.stack([_linear(next(keys), fan_in, shape) for _ in range(3)], 0)

    # in_state_{0,1,2} / out_state_{0,1,2}: Linear -> tanh -> Linear, weights (in, out)
    p['inW1'] = stack3(S, (S, S)); p['inb1'] = stack3(S, (1, S))
    p['inW2'] = stack3(S, (S, S)); p['inb2'] = stack3(S, (1, S))
    p['outW1'] = stack3(S, (S, S)); p['outb1'] = stack3(S, (1, S))
    p['outW2'] = stack3(S, (S, S)); p['outb2'] = stack3(S, (1, S))
    # GRU gating / transform linears
    p['goW'] = _linear(next(keys), 2 * S, (2 * S, 2 * S)); p['gob'] = _linear(next(keys), 2 * S, (1, 2 * S))
    p['gcW'] = _linear(next(keys), 2 * S, (2 * S, 2 * S)); p['gcb'] = _linear(next(keys), 2 * S, (1, 2 * S))
    p['toW'] = _linear(next(keys), 2 * S, (2 * S, S));     p['tob'] = _linear(next(keys), 2 * S, (1, S))
    p['tcW'] = _linear(next(keys), S, (S, S));             p['tcb'] = _linear(next(keys), S, (1, S))
    # ggnn_output_layer: Linear(S,S) -> tanh -> Linear(S, output_dim**2)
    p['oW1'] = _linear(next(keys), S, (S, S));             p['ob1'] = _linear(next(keys), S, (1, S))
    p['oW2'] = _linear(next(keys), S, (S, K2));            p['ob2'] = _linear(next(keys), S, (1, K2))
    return p


# ---------------- forward pass -------------------------------------------------
def poly_ggnn_forward(x, ggnn_adj, ggnn_feature_idx, ggnn_init_poly, params):
    """
    x:                (B, IMAGE_FEATURE_DIM, G, G) NCHW, stands in for the encoder output
    ggnn_adj:         (B, NUM_NODES, 2 * N_EDGE_TYPES * NUM_NODES)
    ggnn_feature_idx: (B, NUM_NODES) int indices into the flattened G*G feature map
    ggnn_init_poly:   (B, NUM_NODES, 2) float
    """
    # TODO(synk): SkipResnet50 / GgnnFeatureEncoder and utils.prepare_ggnn_component are
    # external modules; `x` stands in for concat_feats and graph inputs are given directly.
    B = x.shape[0]
    cnn_feats = extract_local_feature(x, params['conv_w'], params['conv_b'])   # (B,G,G,C) NHWC
    C = cnn_feats.shape[-1]
    # == cnn_feats.permute(0,2,3,1).view(-1, G*G, C) in the torch code
    cnn_flat = cnn_feats.reshape(B, GGNN_GRID * GGNN_GRID, C)
    feat = jnp.take_along_axis(cnn_flat,
                               ggnn_feature_idx[:, :, None].astype(jnp.int32), axis=1)
    if STATE_DIM - C > 0:
        feat = jnp.concatenate(
            [feat, jnp.zeros((B, NUM_NODES, STATE_DIM - C), jnp.float32)], axis=2)

    fwd_adj = ggnn_adj[:, :, :NUM_NODES * N_EDGE_TYPES]
    bwd_adj = ggnn_adj[:, :, NUM_NODES * N_EDGE_TYPES:]
    ggnn_logits = ggnn_inference(feat, fwd_adj, bwd_adj, params)   # (B, N, OUTPUT_DIM**2)

    # inference-time decode (torch.no_grad block)
    sampled = jnp.argmax(ggnn_logits, axis=-1)                     # (B, N)
    # TODO(synk): utils.local_prediction_2xy reproduced as (idx % D - D//2, idx // D - D//2).
    pred_x = (sampled % OUTPUT_DIM - OUTPUT_DIM // 2).astype(jnp.float32)
    pred_y = (sampled // OUTPUT_DIM - OUTPUT_DIM // 2).astype(jnp.float32)
    results = jnp.stack([ggnn_init_poly[:, :, 0] + pred_x,
                         ggnn_init_poly[:, :, 1] + pred_y], axis=2)
    # TODO(synk): utils.mask_and_flatten_poly (per-sample numpy masking/flatten) not reproduced.
    return {'cnn_feats': cnn_feats, 'ggnn_logits': ggnn_logits, 'pred_polys': results}


# ---------------- pure-JAX reference (same bf16 casts) for validation ----------
def poly_ggnn_reference(x_nchw, ggnn_adj, feature_idx, params):
    bf, f32 = jnp.bfloat16, jnp.float32
    B = x_nchw.shape[0]
    x = jnp.transpose(x_nchw, (0, 2, 3, 1)).astype(bf)
    cnn = jax.lax.conv_general_dilated(
        x, params['conv_w'].astype(bf), window_strides=(1, 1),
        padding=((CONV_PAD, CONV_PAD), (CONV_PAD, CONV_PAD)),
        dimension_numbers=('NHWC', 'HWIO', 'NHWC'),
        preferred_element_type=f32) + params['conv_b'].reshape(1, 1, 1, -1)
    C = cnn.shape[-1]
    cnn_flat = cnn.reshape(B, GGNN_GRID * GGNN_GRID, C)
    feat = jnp.take_along_axis(cnn_flat, feature_idx[:, :, None].astype(jnp.int32), axis=1)
    if STATE_DIM > C:
        feat = jnp.concatenate([feat, jnp.zeros((B, NUM_NODES, STATE_DIM - C), f32)], axis=2)
    fadj = ggnn_adj[:, :, :NUM_NODES * N_EDGE_TYPES]
    badj = ggnn_adj[:, :, NUM_NODES * N_EDGE_TYPES:]

    def lin(v, W, b):
        return jnp.einsum('bns,st->bnt', v.astype(bf), W.astype(bf),
                          preferred_element_type=f32) + b

    S = STATE_DIM
    h = feat
    for _ in range(GGNN_N_STEPS):
        ins = jnp.concatenate(
            [lin(jnp.tanh(lin(h, params['inW1'][e], params['inb1'][e])),
                 params['inW2'][e], params['inb2'][e]) for e in range(N_EDGE_TYPES)], axis=1)
        outs = jnp.concatenate(
            [lin(jnp.tanh(lin(h, params['outW1'][e], params['outb1'][e])),
                 params['outW2'][e], params['outb2'][e]) for e in range(N_EDGE_TYPES)], axis=1)
        fwd = jnp.einsum('bnm,bms->bns', fadj.astype(bf), ins.astype(bf),
                         preferred_element_type=f32)
        bwd = jnp.einsum('bnm,bms->bns', badj.astype(bf), outs.astype(bf),
                         preferred_element_type=f32)
        curr = jnp.concatenate([fwd, bwd], axis=2)
        gates = jax.nn.sigmoid(lin(curr, params['goW'], params['gob'])
                               + lin(curr, params['gcW'], params['gcb']))
        update, reset = gates[..., :S], gates[..., S:]
        transformed = jnp.tanh(lin(curr, params['toW'], params['tob'])
                               + lin(reset * h, params['tcW'], params['tcb']))
        h = h + update * (transformed - h)
    hidden = jnp.tanh(lin(h, params['oW1'], params['ob1']))
    logits = lin(hidden, params['oW2'], params['ob2'])
    return {'cnn_feats': cnn, 'ggnn_logits': logits}


def build_adjacency(B, N, n_edge_types):
    # Deterministic stand-in for prepare_ggnn_component's adjacency (polygon ring graph).
    fwd = np.zeros((N, n_edge_types * N), np.float32)
    bwd = np.zeros((N, n_edge_types * N), np.float32)
    for i in range(N):
        for e in range(n_edge_types):
            j = (i + e + 1) % N
            fwd[i, e * N + j] = 1.0
            bwd[j, e * N + i] = 1.0
    adj = np.concatenate([fwd, bwd], axis=1)              # (N, 2*3*N)
    return jnp.asarray(np.tile(adj[None], (B, 1, 1)))


if __name__ == "__main__":
    key = jax.random.PRNGKey(0)
    k_param, k_x, k_idx, k_poly = jax.random.split(key, 4)
    params = init_params(k_param)

    x = jax.random.normal(k_x, (BATCH, IMAGE_FEATURE_DIM, GGNN_GRID, GGNN_GRID), jnp.float32)
    ggnn_adj = build_adjacency(BATCH, NUM_NODES, N_EDGE_TYPES)
    ggnn_feature_idx = jax.random.randint(k_idx, (BATCH, NUM_NODES), 0, GGNN_GRID * GGNN_GRID)
    ggnn_init_poly = jax.random.randint(
        k_poly, (BATCH, NUM_NODES, 2), 0, GGNN_GRID).astype(jnp.float32)

    out = poly_ggnn_forward(x, ggnn_adj, ggnn_feature_idx, ggnn_init_poly, params)
    jax.block_until_ready(out['ggnn_logits'])
    jax.block_until_ready(out['pred_polys'])

    # numerical check against a pure-JAX reference (same bf16 operand casts)
    ref = poly_ggnn_reference(x, ggnn_adj, ggnn_feature_idx, params)
    np.testing.assert_allclose(np.asarray(out['cnn_feats']), np.asarray(ref['cnn_feats']),
                               atol=5e-2, rtol=5e-2)
    np.testing.assert_allclose(np.asarray(out['ggnn_logits']), np.asarray(ref['ggnn_logits']),
                               atol=5e-2, rtol=5e-2)

    assert out['ggnn_logits'].shape == (BATCH, NUM_NODES, OUTPUT_DIM * OUTPUT_DIM)
    assert out['pred_polys'].shape == (BATCH, NUM_NODES, 2)
    print("KERNEL_OK")
</pallas_src>

<mosaic_0001>
module attributes {stable_mosaic.version = 11 : i64} {
  func.func @_conv15_kernel(%arg0: i32, %arg1: i32, %arg2: i32, %arg3: i32, %arg4: memref<1x30x30x16xbf16, #tpu.memory_space<vmem>>, %arg5: memref<1x15x16x16xbf16, #tpu.memory_space<vmem>>, %arg6: memref<1x16xf32, #tpu.memory_space<vmem>>, %arg7: memref<1x8x16x16xf32, #tpu.memory_space<vmem>>, %arg8: memref<128x16xf32, #tpu.memory_space<vmem>>) attributes {dimension_semantics = [#tpu.dimension_semantics<parallel>, #tpu.dimension_semantics<parallel>, #tpu.dimension_semantics<parallel>, #tpu.dimension_semantics<arbitrary>], iteration_bounds = array<i64: 2, 2, 1, 15>, scalar_prefetch = 0 : i64, scratch_operands = 1 : i64, tpu.core_type = #tpu.core_type<tc>, window_params = [{transform_indices = @transform_0, window_bounds = array<i64: 1, 30, 30, 16>}, {transform_indices = @transform_1, window_bounds = array<i64: 1, 15, 16, 16>}, {transform_indices = @transform_2, window_bounds = array<i64: 1, 16>}, {transform_indices = @transform_3, window_bounds = array<i64: 1, 8, 16, 16>}]} {
    %c0_i32 = arith.constant 0 : i32
    %0 = arith.cmpi eq, %arg3, %c0_i32 : i32
    %1 = arith.extui %0 : i1 to i32
    %c0_i32_0 = arith.constant 0 : i32
    %2 = arith.cmpi ne, %1, %c0_i32_0 : i32
    scf.if %2 {
      %cst_68 = arith.constant 0.000000e+00 : f32
      %103 = vector.broadcast %cst_68 : f32 to vector<128x16xf32>
      %c0_69 = arith.constant 0 : index
      %c0_70 = arith.constant 0 : index
      %104 = vector.load %arg8[%c0_69, %c0_70] : memref<128x16xf32, #tpu.memory_space<vmem>>, vector<128x16xf32>
      tpu.vector_store %arg8[%c0_69, %c0_70], %103 {strides = array<i32>} : memref<128x16xf32, #tpu.memory_space<vmem>>, vector<128x16xf32>,
    } else {
    }
    %c8_i32 = arith.constant 8 : i32
    %3 = arith.muli %arg1, %c8_i32 : i32
    %4 = arith.addi %3, %arg3 : i32
    %c0 = arith.constant 0 : index
    %5 = arith.index_cast %4 : i32 to index
    %c0_1 = arith.constant 0 : index
    %c0_2 = arith.constant 0 : index
    %6 = vector.load %arg4[%c0, %5, %c0_1, %c0_2] : memref<1x30x30x16xbf16, #tpu.memory_space<vmem>>, vector<1x8x30x16xbf16>
    %7 = vector.shape_cast %6 : vector<1x8x30x16xbf16> to vector<8x30x16xbf16>
    %c0_3 = arith.constant 0 : index
    %c0_4 = arith.constant 0 : index
    %8 = vector.load %arg8[%c0_3, %c0_4] : memref<128x16xf32, #tpu.memory_space<vmem>>, vector<128x16xf32>
    %9 = vector.extract_strided_slice %7 {offsets = [0, 0, 0], sizes = [8, 16, 16], strides = [1, 1, 1]} : vector<8x30x16xbf16> to vector<8x16x16xbf16>
    %10 = vector.shape_cast %9 : vector<8x16x16xbf16> to vector<128x16xbf16>
    %c0_5 = arith.constant 0 : index
    %c0_6 = arith.constant 0 : index
    %c0_7 = arith.constant 0 : index
    %c0_8 = arith.constant 0 : index
    %11 = vector.load %arg5[%c0_5, %c0_6, %c0_7, %c0_8] : memref<1x15x16x16xbf16, #tpu.memory_space<vmem>>, vector<1x1x16x16xbf16>
    %12 = vector.shape_cast %11 : vector<1x1x16x16xbf16> to vector<16x16xbf16>
    %cst = arith.constant dense<0.000000e+00> : vector<128x16xf32>
    %13 = tpu.matmul %10, %12, %cst {dimension_numbers = #tpu.dot_dimension_numbers<[1], [0], [0], [1], [0, 0, 1, 1], [], []>} : vector<128x16xbf16>, vector<16x16xbf16>, vector<128x16xf32> -> vector<128x16xf32>
    %14 = arith.addf %8, %13 : vector<128x16xf32>
    %15 = vector.extract_strided_slice %7 {offsets = [0, 1, 0], sizes = [8, 16, 16], strides = [1, 1, 1]} : vector<8x30x16xbf16> to vector<8x16x16xbf16>
    %16 = vector.shape_cast %15 : vector<8x16x16xbf16> to vector<128x16xbf16>
    %c0_9 = arith.constant 0 : index
    %c1 = arith.constant 1 : index
    %c0_10 = arith.constant 0 : index
    %c0_11 = arith.constant 0 : index
    %17 = vector.load %arg5[%c0_9, %c1, %c0_10, %c0_11] : memref<1x15x16x16xbf16, #tpu.memory_space<vmem>>, vector<1x1x16x16xbf16>
    %18 = vector.shape_cast %17 : vector<1x1x16x16xbf16> to vector<16x16xbf16>
    %cst_12 = arith.constant dense<0.000000e+00> : vector<128x16xf32>
    %19 = tpu.matmul %16, %18, %cst_12 {dimension_numbers = #tpu.dot_dimension_numbers<[1], [0], [0], [1], [0, 0, 1, 1], [], []>} : vector<128x16xbf16>, vector<16x16xbf16>, vector<128x16xf32> -> vector<128x16xf32>
    %20 = arith.addf %14, %19 : vector<128x16xf32>
    %21 = vector.extract_strided_slice %7 {offsets = [0, 2, 0], sizes = [8, 16, 16], strides = [1, 1, 1]} : vector<8x30x16xbf16> to vector<8x16x16xbf16>
    %22 = vector.shape_cast %21 : vector<8x16x16xbf16> to vector<128x16xbf16>
    %c0_13 = arith.constant 0 : index
    %c2 = arith.constant 2 : index
    %c0_14 = arith.constant 0 : index
    %c0_15 = arith.constant 0 : index
    %23 = vector.load %arg5[%c0_13, %c2, %c0_14, %c0_15] : memref<1x15x16x16xbf16, #tpu.memory_space<vmem>>, vector<1x1x16x16xbf16>
    %24 = vector.shape_cast %23 : vector<1x1x16x16xbf16> to vector<16x16xbf16>
    %cst_16 = arith.constant dense<0.000000e+00> : vector<128x16xf32>
    %25 = tpu.matmul %22, %24, %cst_16 {dimension_numbers = #tpu.dot_dimension_numbers<[1], [0], [0], [1], [0, 0, 1, 1], [], []>} : vector<128x16xbf16>, vector<16x16xbf16>, vector<128x16xf32> -> vector<128x16xf32>
    %26 = arith.addf %20, %25 : vector<128x16xf32>
    %27 = vector.extract_strided_slice %7 {offsets = [0, 3, 0], sizes = [8, 16, 16], strides = [1, 1, 1]} : vector<8x30x16xbf16> to vector<8x16x16xbf16>
    %28 = vector.shape_cast %27 : vector<8x16x16xbf16> to vector<128x16xbf16>
    %c0_17 = arith.constant 0 : index
    %c3 = arith.constant 3 : index
    %c0_18 = arith.constant 0 : index
    %c0_19 = arith.constant 0 : index
    %29 = vector.load %arg5[%c0_17, %c3, %c0_18, %c0_19] : memref<1x15x16x16xbf16, #tpu.memory_space<vmem>>, vector<1x1x16x16xbf16>
    %30 = vector.shape_cast %29 : vector<1x1x16x16xbf16> to vector<16x16xbf16>
    %cst_20 = arith.constant dense<0.000000e+00> : vector<128x16xf32>
    %31 = tpu.matmul %28, %30, %cst_20 {dimension_numbers = #tpu.dot_dimension_numbers<[1], [0], [0], [1], [0, 0, 1, 1], [], []>} : vector<128x16xbf16>, vector<16x16xbf16>, vector<128x16xf32> -> vector<128x16xf32>
    %32 = arith.addf %26, %31 : vector<128x16xf32>
    %33 = vector.extract_strided_slice %7 {offsets = [0, 4, 0], sizes = [8, 16, 16], strides = [1, 1, 1]} : vector<8x30x16xbf16> to vector<8x16x16xbf16>
    %34 = vector.shape_cast %33 : vector<8x16x16xbf16> to vector<128x16xbf16>
    %c0_21 = arith.constant 0 : index
    %c4 = arith.constant 4 : index
    %c0_22 = arith.constant 0 : index
    %c0_23 = arith.constant 0 : index
    %35 = vector.load %arg5[%c0_21, %c4, %c0_22, %c0_23] : memref<1x15x16x16xbf16, #tpu.memory_space<vmem>>, vector<1x1x16x16xbf16>
    %36 = vector.shape_cast %35 : vector<1x1x16x16xbf16> to vector<16x16xbf16>
    %cst_24 = arith.constant dense<0.000000e+00> : vector<128x16xf32>
    %37 = tpu.matmul %34, %36, %cst_24 {dimension_numbers = #tpu.dot_dimension_numbers<[1], [0], [0], [1], [0, 0, 1, 1], [], []>} : vector<128x16xbf16>, vector<16x16xbf16>, vector<128x16xf32> -> vector<128x16xf32>
    %38 = arith.addf %32, %37 : vector<128x16xf32>
    %39 = vector.extract_strided_slice %7 {offsets = [0, 5, 0], sizes = [8, 16, 16], strides = [1, 1, 1]} : vector<8x30x16xbf16> to vector<8x16x16xbf16>
    %40 = vector.shape_cast %39 : vector<8x16x16xbf16> to vector<128x16xbf16>
    %c0_25 = arith.constant 0 : index
    %c5 = arith.constant 5 : index
    %c0_26 = arith.constant 0 : index
    %c0_27 = arith.constant 0 : index
    %41 = vector.load %arg5[%c0_25, %c5, %c0_26, %c0_27] : memref<1x15x16x16xbf16, #tpu.memory_space<vmem>>, vector<1x1x16x16xbf16>
    %42 = vector.shape_cast %41 : vector<1x1x16x16xbf16> to vector<16x16xbf16>
    %cst_28 = arith.constant dense<0.000000e+00> : vector<128x16xf32>
    %43 = tpu.matmul %40, %42, %cst_28 {dimension_numbers = #tpu.dot_dimension_numbers<[1], [0], [0], [1], [0, 0, 1, 1], [], []>} : vector<128x16xbf16>, vector<16x16xbf16>, vector<128x16xf32> -> vector<128x16xf32>
    %44 = arith.addf %38, %43 : vector<128x16xf32>
    %45 = vector.extract_strided_slice %7 {offsets = [0, 6, 0], sizes = [8, 16, 16], strides = [1, 1, 1]} : vector<8x30x16xbf16> to vector<8x16x16xbf16>
    %46 = vector.shape_cast %45 : vector<8x16x16xbf16> to vector<128x16xbf16>
    %c0_29 = arith.constant 0 : index
    %c6 = arith.constant 6 : index
    %c0_30 = arith.constant 0 : index
    %c0_31 = arith.constant 0 : index
    %47 = vector.load %arg5[%c0_29, %c6, %c0_30, %c0_31] : memref<1x15x16x16xbf16, #tpu.memory_space<vmem>>, vector<1x1x16x16xbf16>
    %48 = vector.shape_cast %47 : vector<1x1x16x16xbf16> to vector<16x16xbf16>
    %cst_32 = arith.constant dense<0.000000e+00> : vector<128x16xf32>
    %49 = tpu.matmul %46, %48, %cst_32 {dimension_numbers = #tpu.dot_dimension_numbers<[1], [0], [0], [1], [0, 0, 1, 1], [], []>} : vector<128x16xbf16>, vector<16x16xbf16>, vector<128x16xf32> -> vector<128x16xf32>
    %50 = arith.addf %44, %49 : vector<128x16xf32>
    %51 = vector.extract_strided_slice %7 {offsets = [0, 7, 0], sizes = [8, 16, 16], strides = [1, 1, 1]} : vector<8x30x16xbf16> to vector<8x16x16xbf16>
    %52 = vector.shape_cast %51 : vector<8x16x16xbf16> to vector<128x16xbf16>
    %c0_33 = arith.constant 0 : index
    %c7 = arith.constant 7 : index
    %c0_34 = arith.constant 0 : index
    %c0_35 = arith.constant 0 : index
    %53 = vector.load %arg5[%c0_33, %c7, %c0_34, %c0_35] : memref<1x15x16x16xbf16, #tpu.memory_space<vmem>>, vector<1x1x16x16xbf16>
    %54 = vector.shape_cast %53 : vector<1x1x16x16xbf16> to vector<16x16xbf16>
    %cst_36 = arith.constant dense<0.000000e+00> : vector<128x16xf32>
    %55 = tpu.matmul %52, %54, %cst_36 {dimension_numbers = #tpu.dot_dimension_numbers<[1], [0], [0], [1], [0, 0, 1, 1], [], []>} : vector<128x16xbf16>, vector<16x16xbf16>, vector<128x16xf32> -> vector<128x16xf32>
    %56 = arith.addf %50, %55 : vector<128x16xf32>
    %57 = vector.extract_strided_slice %7 {offsets = [0, 8, 0], sizes = [8, 16, 16], strides = [1, 1, 1]} : vector<8x30x16xbf16> to vector<8x16x16xbf16>
    %58 = vector.shape_cast %57 : vector<8x16x16xbf16> to vector<128x16xbf16>
    %c0_37 = arith.constant 0 : index
    %c8 = arith.constant 8 : index
    %c0_38 = arith.constant 0 : index
    %c0_39 = arith.constant 0 : index
    %59 = vector.load %arg5[%c0_37, %c8, %c0_38, %c0_39] : memref<1x15x16x16xbf16, #tpu.memory_space<vmem>>, vector<1x1x16x16xbf16>
    %60 = vector.shape_cast %59 : vector<1x1x16x16xbf16> to vector<16x16xbf16>
    %cst_40 = arith.constant dense<0.000000e+00> : vector<128x16xf32>
    %61 = tpu.matmul %58, %60, %cst_40 {dimension_numbers = #tpu.dot_dimension_numbers<[1], [0], [0], [1], [0, 0, 1, 1], [], []>} : vector<128x16xbf16>, vector<16x16xbf16>, vector<128x16xf32> -> vector<128x16xf32>
    %62 = arith.addf %56, %61 : vector<128x16xf32>
    %63 = vector.extract_strided_slice %7 {offsets = [0, 9, 0], sizes = [8, 16, 16], strides = [1, 1, 1]} : vector<8x30x16xbf16> to vector<8x16x16xbf16>
    %64 = vector.shape_cast %63 : vector<8x16x16xbf16> to vector<128x16xbf16>
    %c0_41 = arith.constant 0 : index
    %c9 = arith.constant 9 : index
    %c0_42 = arith.constant 0 : index
    %c0_43 = arith.constant 0 : index
    %65 = vector.load %arg5[%c0_41, %c9, %c0_42, %c0_43] : memref<1x15x16x16xbf16, #tpu.memory_space<vmem>>, vector<1x1x16x16xbf16>
    %66 = vector.shape_cast %65 : vector<1x1x16x16xbf16> to vector<16x16xbf16>
    %cst_44 = arith.constant dense<0.000000e+00> : vector<128x16xf32>
    %67 = tpu.matmul %64, %66, %cst_44 {dimension_numbers = #tpu.dot_dimension_numbers<[1], [0], [0], [1], [0, 0, 1, 1], [], []>} : vector<128x16xbf16>, vector<16x16xbf16>, vector<128x16xf32> -> vector<128x16xf32>
    %68 = arith.addf %62, %67 : vector<128x16xf32>
    %69 = vector.extract_strided_slice %7 {offsets = [0, 10, 0], sizes = [8, 16, 16], strides = [1, 1, 1]} : vector<8x30x16xbf16> to vector<8x16x16xbf16>
    %70 = vector.shape_cast %69 : vector<8x16x16xbf16> to vector<128x16xbf16>
    %c0_45 = arith.constant 0 : index
    %c10 = arith.constant 10 : index
    %c0_46 = arith.constant 0 : index
    %c0_47 = arith.constant 0 : index
    %71 = vector.load %arg5[%c0_45, %c10, %c0_46, %c0_47] : memref<1x15x16x16xbf16, #tpu.memory_space<vmem>>, vector<1x1x16x16xbf16>
    %72 = vector.shape_cast %71 : vector<1x1x16x16xbf16> to vector<16x16xbf16>
    %cst_48 = arith.constant dense<0.000000e+00> : vector<128x16xf32>
    %73 = tpu.matmul %70, %72, %cst_48 {dimension_numbers = #tpu.dot_dimension_numbers<[1], [0], [0], [1], [0, 0, 1, 1], [], []>} : vector<128x16xbf16>, vector<16x16xbf16>, vector<128x16xf32> -> vector<128x16xf32>
    %74 = arith.addf %68, %73 : vector<128x16xf32>
    %75 = vector.extract_strided_slice %7 {offsets = [0, 11, 0], sizes = [8, 16, 16], strides = [1, 1, 1]} : vector<8x30x16xbf16> to vector<8x16x16xbf16>
    %76 = vector.shape_cast %75 : vector<8x16x16xbf16> to vector<128x16xbf16>
    %c0_49 = arith.constant 0 : index
    %c11 = arith.constant 11 : index
    %c0_50 = arith.constant 0 : index
    %c0_51 = arith.constant 0 : index
    %77 = vector.load %arg5[%c0_49, %c11, %c0_50, %c0_51] : memref<1x15x16x16xbf16, #tpu.memory_space<vmem>>, vector<1x1x16x16xbf16>
    %78 = vector.shape_cast %77 : vector<1x1x16x16xbf16> to vector<16x16xbf16>
    %cst_52 = arith.constant dense<0.000000e+00> : vector<128x16xf32>
    %79 = tpu.matmul %76, %78, %cst_52 {dimension_numbers = #tpu.dot_dimension_numbers<[1], [0], [0], [1], [0, 0, 1, 1], [], []>} : vector<128x16xbf16>, vector<16x16xbf16>, vector<128x16xf32> -> vector<128x16xf32>
    %80 = arith.addf %74, %79 : vector<128x16xf32>
    %81 = vector.extract_strided_slice %7 {offsets = [0, 12, 0], sizes = [8, 16, 16], strides = [1, 1, 1]} : vector<8x30x16xbf16> to vector<8x16x16xbf16>
    %82 = vector.shape_cast %81 : vector<8x16x16xbf16> to vector<128x16xbf16>
    %c0_53 = arith.constant 0 : index
    %c12 = arith.constant 12 : index
    %c0_54 = arith.constant 0 : index
    %c0_55 = arith.constant 0 : index
    %83 = vector.load %arg5[%c0_53, %c12, %c0_54, %c0_55] : memref<1x15x16x16xbf16, #tpu.memory_space<vmem>>, vector<1x1x16x16xbf16>
    %84 = vector.shape_cast %83 : vector<1x1x16x16xbf16> to vector<16x16xbf16>
    %cst_56 = arith.constant dense<0.000000e+00> : vector<128x16xf32>
    %85 = tpu.matmul %82, %84, %cst_56 {dimension_numbers = #tpu.dot_dimension_numbers<[1], [0], [0], [1], [0, 0, 1, 1], [], []>} : vector<128x16xbf16>, vector<16x16xbf16>, vector<128x16xf32> -> vector<128x16xf32>
    %86 = arith.addf %80, %85 : vector<128x16xf32>
    %87 = vector.extract_strided_slice %7 {offsets = [0, 13, 0], sizes = [8, 16, 16], strides = [1, 1, 1]} : vector<8x30x16xbf16> to vector<8x16x16xbf16>
    %88 = vector.shape_cast %87 : vector<8x16x16xbf16> to vector<128x16xbf16>
    %c0_57 = arith.constant 0 : index
    %c13 = arith.constant 13 : index
    %c0_58 = arith.constant 0 : index
    %c0_59 = arith.constant 0 : index
    %89 = vector.load %arg5[%c0_57, %c13, %c0_58, %c0_59] : memref<1x15x16x16xbf16, #tpu.memory_space<vmem>>, vector<1x1x16x16xbf16>
    %90 = vector.shape_cast %89 : vector<1x1x16x16xbf16> to vector<16x16xbf16>
    %cst_60 = arith.constant dense<0.000000e+00> : vector<128x16xf32>
    %91 = tpu.matmul %88, %90, %cst_60 {dimension_numbers = #tpu.dot_dimension_numbers<[1], [0], [0], [1], [0, 0, 1, 1], [], []>} : vector<128x16xbf16>, vector<16x16xbf16>, vector<128x16xf32> -> vector<128x16xf32>
    %92 = arith.addf %86, %91 : vector<128x16xf32>
    %93 = vector.extract_strided_slice %7 {offsets = [0, 14, 0], sizes = [8, 16, 16], strides = [1, 1, 1]} : vector<8x30x16xbf16> to vector<8x16x16xbf16>
    %94 = vector.shape_cast %93 : vector<8x16x16xbf16> to vector<128x16xbf16>
    %c0_61 = arith.constant 0 : index
    %c14 = arith.constant 14 : index
    %c0_62 = arith.constant 0 : index
    %c0_63 = arith.constant 0 : index
    %95 = vector.load %arg5[%c0_61, %c14, %c0_62, %c0_63] : memref<1x15x16x16xbf16, #tpu.memory_space<vmem>>, vector<1x1x16x16xbf16>
    %96 = vector.shape_cast %95 : vector<1x1x16x16xbf16> to vector<16x16xbf16>
    %cst_64 = arith.constant dense<0.000000e+00> : vector<128x16xf32>
    %97 = tpu.matmul %94, %96, %cst_64 {dimension_numbers = #tpu.dot_dimension_numbers<[1], [0], [0], [1], [0, 0, 1, 1], [], []>} : vector<128x16xbf16>, vector<16x16xbf16>, vector<128x16xf32> -> vector<128x16xf32>
    %98 = arith.addf %92, %97 : vector<128x16xf32>
    %c0_65 = arith.constant 0 : index
    %c0_66 = arith.constant 0 : index
    %99 = vector.load %arg8[%c0_65, %c0_66] : memref<128x16xf32, #tpu.memory_space<vmem>>, vector<128x16xf32>
    tpu.vector_store %arg8[%c0_65, %c0_66], %98 {strides = array<i32>} : memref<128x16xf32, #tpu.memory_space<vmem>>, vector<128x16xf32>,
    %c14_i32 = arith.constant 14 : i32
    %100 = arith.cmpi eq, %arg3, %c14_i32 : i32
    %101 = arith.extui %100 : i1 to i32
    %c0_i32_67 = arith.constant 0 : i32
    %102 = arith.cmpi ne, %101, %c0_i32_67 : i32
    scf.if %102 {
      %c0_68 = arith.constant 0 : index
      %c0_69 = arith.constant 0 : index
      %103 = vector.load %arg8[%c0_68, %c0_69] : memref<128x16xf32, #tpu.memory_space<vmem>>, vector<128x16xf32>
      %c0_70 = arith.constant 0 : index
      %c0_71 = arith.constant 0 : index
      %104 = vector.load %arg6[%c0_70, %c0_71] : memref<1x16xf32, #tpu.memory_space<vmem>>, vector<1x16xf32>
      %105 = vector.broadcast %104 : vector<1x16xf32> to vector<128x16xf32>
      %106 = arith.addf %103, %105 : vector<128x16xf32>
      %107 = vector.shape_cast %106 : vector<128x16xf32> to vector<8x16x16xf32>
      %c0_72 = arith.constant 0 : index
      %c0_73 = arith.constant 0 : index
      %c0_74 = arith.constant 0 : index
      %c0_75 = arith.constant 0 : index
      %108 = vector.load %arg7[%c0_72, %c0_73, %c0_74, %c0_75] : memref<1x8x16x16xf32, #tpu.memory_space<vmem>>, vector<1x8x16x16xf32>
      %109 = vector.shape_cast %108 : vector<1x8x16x16xf32> to vector<8x16x16xf32>
      %110 = vector.shape_cast %107 : vector<8x16x16xf32> to vector<1x8x16x16xf32>
      tpu.vector_store %arg7[%c0_72, %c0_73, %c0_74, %c0_75], %110 {strides = array<i32>} : memref<1x8x16x16xf32, #tpu.memory_space<vmem>>, vector<1x8x16x16xf32>,
    } else {
    }
    return
  }
  func.func @transform_0(%arg0: i32, %arg1: i32, %arg2: i32, %arg3: i32) -> (i32, i32, i32, i32) {
    %c0_i32 = arith.constant 0 : i32
    %c0_i32_0 = arith.constant 0 : i32
    %c0_i32_1 = arith.constant 0 : i32
    %c0_i32_2 = arith.constant 0 : i32
    return %arg0, %c0_i32, %c0_i32_0, %c0_i32_1 : i32, i32, i32, i32
  }
  func.func @transform_1(%arg0: i32, %arg1: i32, %arg2: i32, %arg3: i32) -> (i32, i32, i32, i32) {
    %c0_i32 = arith.constant 0 : i32
    %c0_i32_0 = arith.constant 0 : i32
    %c0_i32_1 = arith.constant 0 : i32
    return %arg3, %c0_i32, %c0_i32_0, %arg2 : i32, i32, i32, i32
  }
  func.func @transform_2(%arg0: i32, %arg1: i32, %arg2: i32, %arg3: i32) -> (i32, i32) {
    %c0_i32 = arith.constant 0 : i32
    %c0_i32_0 = arith.constant 0 : i32
    return %c0_i32, %arg2 : i32, i32
  }
  func.func @transform_3(%arg0: i32, %arg1: i32, %arg2: i32, %arg3: i32) -> (i32, i32, i32, i32) {
    %c0_i32 = arith.constant 0 : i32
    %c0_i32_0 = arith.constant 0 : i32
    return %arg0, %arg1, %c0_i32, %arg2 : i32, i32, i32, i32
  }
}

</mosaic_0001>

<llo_original>
// kernel: tpu_custom_call.1
$region0: #{tpu_custom_call.1}
  #allocation0 [shape = 'u32[]', space=smem, size = 0x4, offset = 0x4, fixed_abs, tag = 'smem constant byte address 0x4 - core index']
  #allocation1 [shape = 'u32[144,128]{1,0:T(1,128)}', space=vmem, size = 0x12000, scoped, tag = 'internal scratch']
  #allocation2 [shape = 'f32[128,16]{1,0:T(8,128)}', space=vmem, size = 0x10000, scoped, tag = 'scratch operand']
  %s0 = inlined_call_operand.vmem [shape: bf16[2,30,30,16], index: 0, kind: input, shape index: {}]
  %s1 = inlined_call_operand.hbm [shape: bf16[15,15,16,16], index: 1, kind: input, shape index: {}]
  %s2 = inlined_call_operand.vmem [shape: f32[1,16], index: 2, kind: input, shape index: {}]
  %s3 = inlined_call_operand.hbm [shape: f32[2,16,16,16], index: 3, kind: output, shape index: {}]
  %s4 = sld [smem:[#allocation0]]
  $region57: #{tpu_custom_call.1} parent=0
    _
  %s6 = ssub.s32 1, %s4
  %s7 = scalar_select 0, %s6, %s4
  $region1: #{tpu_custom_call.1} parent=0
    #allocation3 [shape = 'u8[122880]{0}', space=vmem, size = 0x1e000, scoped, tag = 'input window, operand 1']
    #allocation4 [shape = 's32[2]{0}', space=sflag, size = 0x8, scoped, tag = 'scoped memory for tpu_custom_call.1']
    #allocation5 [shape = 's32[2]{0}', space=sflag, size = 0x8, scoped, tag = 'scoped memory for tpu_custom_call.1']
    #allocation6 [shape = 'u8[131072]{0}', space=vmem, size = 0x20000, scoped, tag = 'output window, operand 0']
    %8 = vsyncpa [#allocation4], 0
    %s9 = scalar_lea.sflag [#allocation4], 1
    %10 = vsyncpa %s9, 0
    %11 = vsyncpa [#allocation5], 0
    %s12 = scalar_lea.sflag [#allocation5], 1
    %13 = vsyncpa %s12, 0
    loop: start=0, step=1, limit=62
    $region2: #{tpu_custom_call.1} parent=1 // loop_pre_header
      _
    $region3: #{tpu_custom_call.1} parent=1 // loop_header
      %s15 = sphi 0, %s19
      %p16 = scmp.ge.s32.totalorder %s15, 62
      %s22 = sphi 0, %s48
      %s23 = sphi 0, %s44
      %s24 = sphi 0, %s40
      %s25 = sphi 0, %s36
      %s26 = sphi 0, %s22
      %s27 = sphi 0, %s23
      %s28 = sphi 0, %s24
      %s29 = sphi 0, %s25
      %s30 = sphi 0, %s26
      %s31 = sphi 0, %s27
      %s32 = sphi 0, %s28
      %s33 = sphi 0, %s29
      %s51 = sphi 0, %s53
      %s54 = sphi 0, %s51
      %s55 = sphi 0, %s54
      %s71 = sphi 0, %s55
      %s79 = sphi 0, %s81
      %s82 = sphi 0, %s79
      %s83 = sphi 0, %s82
      %s99 = sphi 0, %s83
      %s105 = sphi 0, %s107
      %s108 = sphi 0, %s105
      %s109 = sphi 0, %s108
      %s125 = sphi 0, %s109
      %s135 = sphi 0, %s137
      %s138 = sphi 0, %s135
      %s139 = sphi 0, %s138
      %s155 = sphi 0, %s139
    $region4: #{tpu_custom_call.1} parent=1 // loop_header_branch
      %18 = sbr.rel (%p16) target = $region8
    $region5: #{tpu_custom_call.1} parent=1 // loop_body
      %s20 = ssub.s32 %s15, 1
      %s21 = ssub.s32 %s15, 2
      %s34 = sadd.s32 1, %s25
      %p35 = scmp.ge.s32.totalorder %s34, 15
      %s36 = scalar_select %p35, 0, %s34
      %s37 = sadd.s32 1, %s24
      %s38 = scalar_select %p35, %s37, %s24
      %p39 = scmp.ge.s32.totalorder %s38, 1
      %s40 = scalar_select %p39, 0, %s38
      %s41 = sadd.s32 1, %s23
      %s42 = scalar_select %p39, %s41, %s23
      %p43 = scmp.ge.s32.totalorder %s42, 2
      %s44 = scalar_select %p43, 0, %s42
      %s45 = sadd.s32 1, %s22
      %s46 = scalar_select %p43, %s45, %s22
      %p47 = scmp.ge.s32.totalorder %s46, 2
      %s48 = scalar_select %p47, 0, %s46
      %s49 = ssub.s32 %s22, %s48
      %p50 = scmp.eq.s32.totalorder %s49, 0
      %s52 = sadd.s32 %s51, 1
      %s53 = scalar_select %p50, %s51, %s52
      %p56 = pneg %p50
      %p57 = scmp.eq.s32.totalorder %s15, 59
      %p58 = por %p56, %p57
      %p59 = scmp.ne.s32.totalorder %s51, %s54
      %p60 = scmp.eq.s32.totalorder %s15, 0
      %p61 = por %p59, %p60
      %p62 = scmp.ne.s32.totalorder %s51, %s54
      %p63 = scmp.eq.s32.totalorder %s20, 59
      %p64 = por %p62, %p63
      %p65 = scmp.ne.s32.totalorder %s54, %s55
      %p66 = scmp.eq.s32.totalorder %s20, 0
      %p67 = por %p65, %p66
      %p68 = scmp.ne.s32.totalorder %s54, %s55
      %p69 = scmp.eq.s32.totalorder %s21, 59
      %p70 = por %p68, %p69
      %p72 = scmp.ne.s32.totalorder %s55, %s71
      %p73 = scmp.eq.s32.totalorder %s21, 0
      %p74 = por %p72, %p73
      %s75 = ssub.s32 %s25, %s36
      %s76 = ssub.s32 %s24, %s40
      %s77 = sor.u32 %s75, %s76
      %p78 = scmp.eq.s32.totalorder %s77, 0
      %s80 = sadd.s32 %s79, 1
      %s81 = scalar_select %p78, %s79, %s80
      %p84 = pneg %p78
      %p85 = scmp.eq.s32.totalorder %s15, 59
      %p86 = por %p84, %p85
      %p87 = scmp.ne.s32.totalorder %s79, %s82
      %p88 = scmp.eq.s32.totalorder %s15, 0
      %p89 = por %p87, %p88
      %p90 = scmp.ne.s32.totalorder %s79, %s82
      %p91 = scmp.eq.s32.totalorder %s20, 59
      %p92 = por %p90, %p91
      %p93 = scmp.ne.s32.totalorder %s82, %s83
      %p94 = scmp.eq.s32.totalorder %s20, 0
      %p95 = por %p93, %p94
      %p96 = scmp.ne.s32.totalorder %s82, %s83
      %p97 = scmp.eq.s32.totalorder %s21, 59
      %p98 = por %p96, %p97
      %p100 = scmp.ne.s32.totalorder %s83, %s99
      %p101 = scmp.eq.s32.totalorder %s21, 0
      %p102 = por %p100, %p101
      %s103 = ssub.s32 %s24, %s40
      %p104 = scmp.eq.s32.totalorder %s103, 0
      %s106 = sadd.s32 %s105, 1
      %s107 = scalar_select %p104, %s105, %s106
      %p110 = pneg %p104
      %p111 = scmp.eq.s32.totalorder %s15, 59
      %p112 = por %p110, %p111
      %p113 = scmp.ne.s32.totalorder %s105, %s108
      %p114 = scmp.eq.s32.totalorder %s15, 0
      %p115 = por %p113, %p114
      %p116 = scmp.ne.s32.totalorder %s105, %s108
      %p117 = scmp.eq.s32.totalorder %s20, 59
      %p118 = por %p116, %p117
      %p119 = scmp.ne.s32.totalorder %s108, %s109
      %p120 = scmp.eq.s32.totalorder %s20, 0
      %p121 = por %p119, %p120
      %p122 = scmp.ne.s32.totalorder %s108, %s109
      %p123 = scmp.eq.s32.totalorder %s21, 59
      %p124 = por %p122, %p123
      %p126 = scmp.ne.s32.totalorder %s109, %s125
      %p127 = scmp.eq.s32.totalorder %s21, 0
      %p128 = por %p126, %p127
      %s129 = ssub.s32 %s22, %s48
      %s130 = ssub.s32 %s23, %s44
      %s131 = sor.u32 %s129, %s130
      %s132 = ssub.s32 %s24, %s40
      %s133 = sor.u32 %s131, %s132
      %p134 = scmp.eq.s32.totalorder %s133, 0
      %s136 = sadd.s32 %s135, 1
      %s137 = scalar_select %p134, %s135, %s136
      %p140 = pneg %p134
      %p141 = scmp.eq.s32.totalorder %s15, 59
      %p142 = por %p140, %p141
      %p143 = scmp.ne.s32.totalorder %s135, %s138
      %p144 = scmp.eq.s32.totalorder %s15, 0
      %p145 = por %p143, %p144
      %p146 = scmp.ne.s32.totalorder %s135, %s138
      %p147 = scmp.eq.s32.totalorder %s20, 59
      %p148 = por %p146, %p147
      %p149 = scmp.ne.s32.totalorder %s138, %s139
      %p150 = scmp.eq.s32.totalorder %s20, 0
      %p151 = por %p149, %p150
      %p152 = scmp.ne.s32.totalorder %s138, %s139
      %p153 = scmp.eq.s32.totalorder %s21, 59
      %p154 = por %p152, %p153
      %p156 = scmp.ne.s32.totalorder %s139, %s155
      %p157 = scmp.eq.s32.totalorder %s21, 0
      %p158 = por %p156, %p157
      %p159 = scmp.le.s32.totalorder 1, %s15
      %p160 = scmp.lt.s32.totalorder %s15, 61
      %p161 = pnand %p159, %p160
      %p162 = pneg %p161
      // Predicated region
      $region9: #{tpu_custom_call.1} parent=5 // pred_check
        _
      $region10: #{tpu_custom_call.1} parent=5 // pred_check_branch
        %164 = sbr.rel (%p161) target = $region12
      $region11: #{tpu_custom_call.1} parent=5 // pred_region
        %s165 = ssub.s32 %s15, 1
        // Predicated region
        $region13: #{tpu_custom_call.1} parent=11 // pred_check
          %p166 = pneg %p121
        $region14: #{tpu_custom_call.1} parent=11 // pred_check_branch
          %168 = sbr.rel (%p166) target = $region16
        $region15: #{tpu_custom_call.1} parent=11 // pred_region
          %p169 = scmp.lt.s32.totalorder %s28, 0
          %s170 = scalar_select %p169, %s28, 0
          %s171 = scalar_lea.vmem %s2, %s170
        $region16: #{tpu_custom_call.1} parent=11 // pred_fallthru
          _
      $region12: #{tpu_custom_call.1} parent=5 // pred_fallthru
        _
      %p172 = scmp.lt.s32.totalorder %s15, 60
      // Predicated region
      $region17: #{tpu_custom_call.1} parent=5 // pred_check
        %p173 = pneg %p172
      $region18: #{tpu_custom_call.1} parent=5 // pred_check_branch
        %175 = sbr.rel (%p173) target = $region20
      $region19: #{tpu_custom_call.1} parent=5 // pred_region
        // Predicated region
        $region21: #{tpu_custom_call.1} parent=19 // pred_check
          %p176 = pneg %p61
        $region22: #{tpu_custom_call.1} parent=19 // pred_check_branch
          %178 = sbr.rel (%p176) target = $region24
        $region23: #{tpu_custom_call.1} parent=19 // pred_region
          %p179 = scmp.lt.s32.totalorder %s22, 1
          %s180 = scalar_select %p179, %s22, 1
          %s181 = smul.addr %s180, 120
          %s182 = smul.addr %s181, 4
          %s183 = scalar_lea.vmem %s0, %s182
        $region24: #{tpu_custom_call.1} parent=19 // pred_fallthru
          _
        // Predicated region
        $region25: #{tpu_custom_call.1} parent=19 // pred_check
          %p184 = pneg %p89
        $region26: #{tpu_custom_call.1} parent=19 // pred_check_branch
          %186 = sbr.rel (%p184) target = $region28
        $region27: #{tpu_custom_call.1} parent=19 // pred_region
          %s187 = sand.u32 %s79, 1
          %s188 = scalar_lea.sflag [#allocation4], %s187
          %s189 = sand.u32 %s79, 1
          %s190 = smul.addr %s189, 120
          %s191 = scalar_lea.vmem [#allocation3], %s190
          %s193 = ssub.s32 1920, 1920
          %194 = vsyncadd %s188, %s193
          %s195 = smul.addr %s25, 30
          %s196 = sadd.s32 %s24, %s195
          %s197 = smul.addr %s196, 64
          %s198 = scalar_lea.hbm %s1, %s197
          %s199 = sshll.u32 %s191, 4
          %s200 = int_to_ptr.vmem [resolvable:$true] %s199
          %205 = dma.hbm_to_vmem [thread:$0]  %s198, 1920, %s200, %s188, 64, 64, 4
        $region28: #{tpu_custom_call.1} parent=19 // pred_fallthru
          _
      $region20: #{tpu_custom_call.1} parent=5 // pred_fallthru
        _
      %p206 = scmp.le.s32.totalorder 1, %s15
      %p207 = scmp.lt.s32.totalorder %s15, 61
      %p208 = pnand %p206, %p207
      %p209 = pneg %p208
      // Predicated region
      $region29: #{tpu_custom_call.1} parent=5 // pred_check
        _
      $region30: #{tpu_custom_call.1} parent=5 // pred_check_branch
        %211 = sbr.rel (%p208) target = $region32
      $region31: #{tpu_custom_call.1} parent=5 // pred_region
        %s212 = ssub.s32 %s15, 1
        %s213 = sand.u32 %s82, 1
        %s214 = scalar_lea.sflag [#allocation4], %s213
        %s215 = sand.u32 %s82, 1
        %s216 = smul.addr %s215, 120
        %s217 = scalar_lea.vmem [#allocation3], %s216
        // Predicated region
        $region33: #{tpu_custom_call.1} parent=31 // pred_check
          %p218 = pneg %p95
        $region34: #{tpu_custom_call.1} parent=31 // pred_check_branch
          %220 = sbr.rel (%p218) target = $region36
        $region35: #{tpu_custom_call.1} parent=31 // pred_region
          %221 = dma.done %s214, 1920
        $region36: #{tpu_custom_call.1} parent=31 // pred_fallthru
          _
        %p222 = scmp.lt.s32.totalorder %s26, 1
        %s223 = scalar_select %p222, %s26, 1
        %s224 = smul.addr %s223, 120
        %s225 = smul.addr %s224, 4
        %s226 = scalar_lea.vmem %s0, %s225
        %p227 = pneg %p67
        %p228 = pneg %p64
        %s229 = sand.u32 %s82, 1
        %s230 = scalar_lea.sflag [#allocation4], %s229
        %s231 = sand.u32 %s82, 1
        %s232 = smul.addr %s231, 120
        %s233 = scalar_lea.vmem [#allocation3], %s232
        %p234 = pneg %p95
        %p235 = pneg %p92
        %p236 = scmp.lt.s32.totalorder %s28, 0
        %s237 = scalar_select %p236, %s28, 0
        %s238 = scalar_lea.vmem %s2, %s237
        %p239 = pneg %p121
        %p240 = pneg %p118
        %p241 = pneg %p151
        %p242 = pneg %p148
        %s243 = sand.u32 %s138, 1
        %s244 = scalar_lea.sflag [#allocation5], %s243
        %s245 = sand.u32 %s138, 1
        %s246 = smul.addr %s245, 128
        %s247 = scalar_lea.vmem [#allocation6], %s246
        %p248 = scmp.lt.s32.totalorder %s26, 1
        %s249 = scalar_select %p248, %s26, 1
        %s250 = smul.addr %s249, 120
        %s251 = smul.addr %s250, 4
        %s252 = scalar_lea.vmem %s0, %s251
        %p253 = scmp.lt.s32.totalorder %s28, 0
        %s254 = scalar_select %p253, %s28, 0
        %s255 = scalar_lea.vmem %s2, %s254
        %s256 = smul.u32 8, %s27
        %p258 = scmp.eq.s32.totalorder %s29, 0
        // Predicated region
        $region37: #{tpu_custom_call.1} parent=31 // pred_check
          %p259 = pneg %p258
        $region38: #{tpu_custom_call.1} parent=31 // pred_check_branch
          %261 = sbr.rel (%p259) target = $region40
        $region39: #{tpu_custom_call.1} parent=31 // pred_region
          %vm262 = vcmask 130048
          %263 = vst.msk [vmem:[#allocation2] sm:$0xff] %vm262, 0.0
          %264 = vst.msk [vmem:[#allocation2 + $0x8] sm:$0xff] %vm262, 0.0
          %265 = vst.msk [vmem:[#allocation2 + $0x10] sm:$0xff] %vm262, 0.0
          %266 = vst.msk [vmem:[#allocation2 + $0x18] sm:$0xff] %vm262, 0.0
          %267 = vst.msk [vmem:[#allocation2 + $0x20] sm:$0xff] %vm262, 0.0
          %268 = vst.msk [vmem:[#allocation2 + $0x28] sm:$0xff] %vm262, 0.0
          %269 = vst.msk [vmem:[#allocation2 + $0x30] sm:$0xff] %vm262, 0.0
          %270 = vst.msk [vmem:[#allocation2 + $0x38] sm:$0xff] %vm262, 0.0
          %271 = vst.msk [vmem:[#allocation2 + $0x40] sm:$0xff] %vm262, 0.0
          %272 = vst.msk [vmem:[#allocation2 + $0x48] sm:$0xff] %vm262, 0.0
          %273 = vst.msk [vmem:[#allocation2 + $0x50] sm:$0xff] %vm262, 0.0
          %274 = vst.msk [vmem:[#allocation2 + $0x58] sm:$0xff] %vm262, 0.0
          %275 = vst.msk [vmem:[#allocation2 + $0x60] sm:$0xff] %vm262, 0.0
          %276 = vst.msk [vmem:[#allocation2 + $0x68] sm:$0xff] %vm262, 0.0
          %277 = vst.msk [vmem:[#allocation2 + $0x70] sm:$0xff] %vm262, 0.0
          %278 = vst.msk [vmem:[#allocation2 + $0x78] sm:$0xff] %vm262, 0.0
        $region40: #{tpu_custom_call.1} parent=31 // pred_fallthru
          _
        %s279 = smul.u32 %s27, 8
        %s280 = sadd.s32 %s279, %s29
        %s281 = smul.u32 %s280, 4
        %s282 = smul.addr %s281, 4
        %s283 = scalar_lea.vmem %s252, %s282
        %v284 = vld [vmem:[%s283] sm:$0xf]
        %v285 = vld [vmem:[%s283 + $0x4] sm:$0xf]
        %v286 = vld [vmem:[%s283 + $0x8] sm:$0xf]
        %v287 = vld [vmem:[%s283 + $0xc] sm:$0x7]
        %v288 = vld [vmem:[%s283 + $0x10] sm:$0xf]
        %v289 = vld [vmem:[%s283 + $0x14] sm:$0xf]
        %v290 = vld [vmem:[%s283 + $0x18] sm:$0xf]
        %v291 = vld [vmem:[%s283 + $0x1c] sm:$0x7]
        %v292 = vld [vmem:[%s283 + $0x20] sm:$0xf]
        %v293 = vld [vmem:[%s283 + $0x24] sm:$0xf]
        %v294 = vld [vmem:[%s283 + $0x28] sm:$0xf]
        %v295 = vld [vmem:[%s283 + $0x2c] sm:$0x7]
        %v296 = vld [vmem:[%s283 + $0x30] sm:$0xf]
        %v297 = vld [vmem:[%s283 + $0x34] sm:$0xf]
        %v298 = vld [vmem:[%s283 + $0x38] sm:$0xf]
        %v299 = vld [vmem:[%s283 + $0x3c] sm:$0x7]
        %v300 = vld [vmem:[%s283 + $0x40] sm:$0xf]
        %v301 = vld [vmem:[%s283 + $0x44] sm:$0xf]
        %v302 = vld [vmem:[%s283 + $0x48] sm:$0xf]
        %v303 = vld [vmem:[%s283 + $0x4c] sm:$0x7]
        %v304 = vld [vmem:[%s283 + $0x50] sm:$0xf]
        %v305 = vld [vmem:[%s283 + $0x54] sm:$0xf]
        %v306 = vld [vmem:[%s283 + $0x58] sm:$0xf]
        %v307 = vld [vmem:[%s283 + $0x5c] sm:$0x7]
        %v308 = vld [vmem:[%s283 + $0x60] sm:$0xf]
        %v309 = vld [vmem:[%s283 + $0x64] sm:$0xf]
        %v310 = vld [vmem:[%s283 + $0x68] sm:$0xf]
        %v311 = vld [vmem:[%s283 + $0x6c] sm:$0x7]
        %v312 = vld [vmem:[%s283 + $0x70] sm:$0xf]
        %v313 = vld [vmem:[%s283 + $0x74] sm:$0xf]
        %v314 = vld [vmem:[%s283 + $0x78] sm:$0xf]
        %v315 = vld [vmem:[%s283 + $0x7c] sm:$0x7]
        %v316 = vld [vmem:[#allocation2] sm:$0xff]
        %v317 = vld [vmem:[#allocation2 + $0x8] sm:$0xff]
        %v318 = vld [vmem:[#allocation2 + $0x10] sm:$0xff]
        %v319 = vld [vmem:[#allocation2 + $0x18] sm:$0xff]
        %v320 = vld [vmem:[#allocation2 + $0x20] sm:$0xff]
        %v321 = vld [vmem:[#allocation2 + $0x28] sm:$0xff]
        %v322 = vld [vmem:[#allocation2 + $0x30] sm:$0xff]
        %v323 = vld [vmem:[#allocation2 + $0x38] sm:$0xff]
        %v324 = vld [vmem:[#allocation2 + $0x40] sm:$0xff]
        %v325 = vld [vmem:[#allocation2 + $0x48] sm:$0xff]
        %v326 = vld [vmem:[#allocation2 + $0x50] sm:$0xff]
        %v327 = vld [vmem:[#allocation2 + $0x58] sm:$0xff]
        %v328 = vld [vmem:[#allocation2 + $0x60] sm:$0xff]
        %v329 = vld [vmem:[#allocation2 + $0x68] sm:$0xff]
        %v330 = vld [vmem:[#allocation2 + $0x70] sm:$0xff]
        %v331 = vld [vmem:[#allocation2 + $0x78] sm:$0xff]
        %v332 = vld [vmem:[%s217] sm:$0xf]
        %v333 = vld [vmem:[%s217 + $0x4] sm:$0xf]
        %v350 = vunpack.c.l.b16 %v284
        %v351 = vunpack.c.l.b16 %v285
        %v352 = vunpack.c.l.b16 %v288
        %v353 = vunpack.c.l.b16 %v289
        %v354 = vunpack.c.l.b16 %v292
        %v355 = vunpack.c.l.b16 %v293
        %v356 = vunpack.c.l.b16 %v296
        %v357 = vunpack.c.l.b16 %v297
        %v358 = vunpack.c.l.b16 %v300
        %v359 = vunpack.c.l.b16 %v301
        %v360 = vunpack.c.l.b16 %v304
        %v361 = vunpack.c.l.b16 %v305
        %v362 = vunpack.c.l.b16 %v308
        %v363 = vunpack.c.l.b16 %v309
        %v364 = vunpack.c.l.b16 %v312
        %v365 = vunpack.c.l.b16 %v313
        %v366 = vpack.c.b16 %v351, %v350
        %v367 = vpack.c.b16 %v353, %v352
        %v368 = vpack.c.b16 %v355, %v354
        %v369 = vpack.c.b16 %v357, %v356
        %v370 = vpack.c.b16 %v359, %v358
        %v371 = vpack.c.b16 %v361, %v360
        %v372 = vpack.c.b16 %v363, %v362
        %v373 = vpack.c.b16 %v365, %v364
        %v376 = vunpack.c.l.b16 %v332
        %v377 = vunpack.c.l.b16 %v333
        %v378 = vpack.c.b16 %v377, %v376
        %vm380 = vcmask 130048
        %v382 = vsel %vm380, %v366, 0
        %v385 = vsel %vm380, %v367, 0
        %v388 = vsel %vm380, %v368, 0
        %v391 = vsel %vm380, %v369, 0
        %v394 = vsel %vm380, %v370, 0
        %v397 = vsel %vm380, %v371, 0
        %v400 = vsel %vm380, %v372, 0
        %v403 = vsel %vm380, %v373, 0
        %405 = vmatprep.subr.bf16.mxu0 0
        %406 = vmatpush1.bf16.msra.mxu0 %v378
        %407 = vmatprep.subr.bf16.mxu0 0
        %408 = vmatpush1.bf16.msra.mxu0 0
        %409 = vmatprep.subr.bf16.mxu0 0
        %410 = vmatpush1.bf16.msra.mxu0 0
        %411 = vmatprep.subr.bf16.mxu0 0
        %412 = vmatpush1.bf16.msra.mxu0 0
        %413 = vmatprep.subr.bf16.mxu0 0
        %414 = vmatpush1.bf16.msra.mxu0 0
        %415 = vmatprep.subr.bf16.mxu0 0
        %416 = vmatpush1.bf16.msra.mxu0 0
        %417 = vmatprep.subr.bf16.mxu0 0
        %418 = vmatpush1.bf16.msra.mxu0 0
        %419 = vmatprep.subr.bf16.mxu0 0
        %420 = vmatpush1.bf16.msra.mxu0 0
        %421 = vmatprep.subr.bf16.mxu0 0
        %422 = vmatpush1.bf16.msra.mxu0 0
        %423 = vmatprep.subr.bf16.mxu0 0
        %424 = vmatpush1.bf16.msra.mxu0 0
        %425 = vmatprep.subr.bf16.mxu0 0
        %426 = vmatpush1.bf16.msra.mxu0 0
        %427 = vmatprep.subr.bf16.mxu0 0
        %428 = vmatpush1.bf16.msra.mxu0 0
        %429 = vmatprep.subr.bf16.mxu0 0
        %430 = vmatpush1.bf16.msra.mxu0 0
        %431 = vmatprep.subr.bf16.mxu0 0
        %432 = vmatpush1.bf16.msra.mxu0 0
        %433 = vmatprep.subr.bf16.mxu0 0
        %434 = vmatpush1.bf16.msra.mxu0 0
        %435 = vmatprep.subr.bf16.mxu0 0
        %436 = vmatpush1.bf16.msra.mxu0 0
        %437 = vmatprep.mubr.bf16.mxu0 0
        %438 = vmatmul.mubr.bf16.gmra.mrb[0].mxu0 %v382
        %v439 = vpop.f32.mrb[0].mxu0
        %v440 = vadd.f32 0.0, %v439
        %v441 = vpop.f32.mrb[0].mxu0
        %v442 = vpop.f32.mrb[0].mxu0
        %v443 = vadd.f32 0.0, %v442
        %v444 = vpop.f32.mrb[0].mxu0
        %445 = vmatprep.mubr.bf16.mxu0 0
        %446 = vmatmul.mubr.bf16.gmra.mrb[0].mxu0 %v385
        %v447 = vpop.f32.mrb[0].mxu0
        %v448 = vadd.f32 0.0, %v447
        %v449 = vpop.f32.mrb[0].mxu0
        %v450 = vpop.f32.mrb[0].mxu0
        %v451 = vadd.f32 0.0, %v450
        %v452 = vpop.f32.mrb[0].mxu0
        %453 = vmatprep.mubr.bf16.mxu0 0
        %454 = vmatmul.mubr.bf16.gmra.mrb[0].mxu0 %v388
        %v455 = vpop.f32.mrb[0].mxu0
        %v456 = vadd.f32 0.0, %v455
        %v457 = vpop.f32.mrb[0].mxu0
        %v458 = vpop.f32.mrb[0].mxu0
        %v459 = vadd.f32 0.0, %v458
        %v460 = vpop.f32.mrb[0].mxu0
        %461 = vmatprep.mubr.bf16.mxu0 0
        %462 = vmatmul.mubr.bf16.gmra.mrb[0].mxu0 %v391
        %v463 = vpop.f32.mrb[0].mxu0
        %v464 = vadd.f32 0.0, %v463
        %v465 = vpop.f32.mrb[0].mxu0
        %v466 = vpop.f32.mrb[0].mxu0
        %v467 = vadd.f32 0.0, %v466
        %v468 = vpop.f32.mrb[0].mxu0
        %469 = vmatprep.mubr.bf16.mxu0 0
        %470 = vmatmul.mubr.bf16.gmra.mrb[0].mxu0 %v394
        %v471 = vpop.f32.mrb[0].mxu0
        %v472 = vadd.f32 0.0, %v471
        %v473 = vpop.f32.mrb[0].mxu0
        %v474 = vpop.f32.mrb[0].mxu0
        %v475 = vadd.f32 0.0, %v474
        %v476 = vpop.f32.mrb[0].mxu0
        %477 = vmatprep.mubr.bf16.mxu0 0
        %478 = vmatmul.mubr.bf16.gmra.mrb[0].mxu0 %v397
        %v479 = vpop.f32.mrb[0].mxu0
        %v480 = vadd.f32 0.0, %v479
        %v481 = vpop.f32.mrb[0].mxu0
        %v482 = vpop.f32.mrb[0].mxu0
        %v483 = vadd.f32 0.0, %v482
        %v484 = vpop.f32.mrb[0].mxu0
        %485 = vmatprep.mubr.bf16.mxu0 0
        %486 = vmatmul.mubr.bf16.gmra.mrb[0].mxu0 %v400
        %v487 = vpop.f32.mrb[0].mxu0
        %v488 = vadd.f32 0.0, %v487
        %v489 = vpop.f32.mrb[0].mxu0
        %v490 = vpop.f32.mrb[0].mxu0
        %v491 = vadd.f32 0.0, %v490
        %v492 = vpop.f32.mrb[0].mxu0
        %493 = vmatprep.mubr.bf16.mxu0 0
        %494 = vmatmul.mubr.bf16.gmra.mrb[0].mxu0 %v403
        %v495 = vpop.f32.mrb[0].mxu0
        %v496 = vadd.f32 0.0, %v495
        %v497 = vpop.f32.mrb[0].mxu0
        %v498 = vpop.f32.mrb[0].mxu0
        %v499 = vadd.f32 0.0, %v498
        %v500 = vpop.f32.mrb[0].mxu0
        %501 = vdwg.mxu0
        %v502 = vadd.f32 %v316, %v440
        %v503 = vadd.f32 %v317, %v443
        %v504 = vadd.f32 %v318, %v448
        %v505 = vadd.f32 %v319, %v451
        %v506 = vadd.f32 %v320, %v456
        %v507 = vadd.f32 %v321, %v459
        %v508 = vadd.f32 %v322, %v464
        %v509 = vadd.f32 %v323, %v467
        %v510 = vadd.f32 %v324, %v472
        %v511 = vadd.f32 %v325, %v475
        %v512 = vadd.f32 %v326, %v480
        %v513 = vadd.f32 %v327, %v483
        %v514 = vadd.f32 %v328, %v488
        %v515 = vadd.f32 %v329, %v491
        %v516 = vadd.f32 %v330, %v496
        %v517 = vadd.f32 %v331, %v499
        %vm518 = vsmask.f32 3328
        %vm519 = vsmask.f32 7440
        %vm520 = vmor %vm518, %vm519
        %v522 = vshrl.u32 %v284, 16
        %v524 = vrot.slane %v522, 4
        %v525 = vshll.u32 %v284, 16
        %v527 = vrot.slane %v525, 5
        %v528 = vor.u32 %v524, %v527
        %v529 = vrot.slane %v528, 4
        %v531 = vshll.u32 %v285, 16
        %v533 = vrot.slane %v531, 5
        %v534 = vsel %vm520, %v529, %v533
        %v535 = vshrl.u32 %v285, 16
        %v537 = vrot.slane %v535, 4
        %v538 = vor.u32 %v537, %v533
        %v539 = vrot.slane %v538, 4
        %v541 = vshll.u32 %v286, 16
        %v543 = vrot.slane %v541, 5
        %v544 = vsel %vm520, %v539, %v543
        %v546 = vshrl.u32 %v288, 16
        %v548 = vrot.slane %v546, 4
        %v549 = vshll.u32 %v288, 16
        %v551 = vrot.slane %v549, 5
        %v552 = vor.u32 %v548, %v551
        %v553 = vrot.slane %v552, 4
        %v555 = vshll.u32 %v289, 16
        %v557 = vrot.slane %v555, 5
        %v558 = vsel %vm520, %v553, %v557
        %v559 = vshrl.u32 %v289, 16
        %v561 = vrot.slane %v559, 4
        %v562 = vor.u32 %v561, %v557
        %v563 = vrot.slane %v562, 4
        %v565 = vshll.u32 %v290, 16
        %v567 = vrot.slane %v565, 5
        %v568 = vsel %vm520, %v563, %v567
        %v570 = vshrl.u32 %v292, 16
        %v572 = vrot.slane %v570, 4
        %v573 = vshll.u32 %v292, 16
        %v575 = vrot.slane %v573, 5
        %v576 = vor.u32 %v572, %v575
        %v577 = vrot.slane %v576, 4
        %v579 = vshll.u32 %v293, 16
        %v581 = vrot.slane %v579, 5
        %v582 = vsel %vm520, %v577, %v581
        %v583 = vshrl.u32 %v293, 16
        %v585 = vrot.slane %v583, 4
        %v586 = vor.u32 %v585, %v581
        %v587 = vrot.slane %v586, 4
        %v589 = vshll.u32 %v294, 16
        %v591 = vrot.slane %v589, 5
        %v592 = vsel %vm520, %v587, %v591
        %v594 = vshrl.u32 %v296, 16
        %v596 = vrot.slane %v594, 4
        %v597 = vshll.u32 %v296, 16
        %v599 = vrot.slane %v597, 5
        %v600 = vor.u32 %v596, %v599
        %v601 = vrot.slane %v600, 4
        %v603 = vshll.u32 %v297, 16
        %v605 = vrot.slane %v603, 5
        %v606 = vsel %vm520, %v601, %v605
        %v607 = vshrl.u32 %v297, 16
        %v609 = vrot.slane %v607, 4
        %v610 = vor.u32 %v609, %v605
        %v611 = vrot.slane %v610, 4
        %v613 = vshll.u32 %v298, 16
        %v615 = vrot.slane %v613, 5
        %v616 = vsel %vm520, %v611, %v615
        %v618 = vshrl.u32 %v300, 16
        %v620 = vrot.slane %v618, 4
        %v621 = vshll.u32 %v300, 16
        %v623 = vrot.slane %v621, 5
        %v624 = vor.u32 %v620, %v623
        %v625 = vrot.slane %v624, 4
        %v627 = vshll.u32 %v301, 16
        %v629 = vrot.slane %v627, 5
        %v630 = vsel %vm520, %v625, %v629
        %v631 = vshrl.u32 %v301, 16
        %v633 = vrot.slane %v631, 4
        %v634 = vor.u32 %v633, %v629
        %v635 = vrot.slane %v634, 4
        %v637 = vshll.u32 %v302, 16
        %v639 = vrot.slane %v637, 5
        %v640 = vsel %vm520, %v635, %v639
        %v642 = vshrl.u32 %v304, 16
        %v644 = vrot.slane %v642, 4
        %v645 = vshll.u32 %v304, 16
        %v647 = vrot.slane %v645, 5
        %v648 = vor.u32 %v644, %v647
        %v649 = vrot.slane %v648, 4
        %v651 = vshll.u32 %v305, 16
        %v653 = vrot.slane %v651, 5
        %v654 = vsel %vm520, %v649, %v653
        %v655 = vshrl.u32 %v305, 16
        %v657 = vrot.slane %v655, 4
        %v658 = vor.u32 %v657, %v653
        %v659 = vrot.slane %v658, 4
        %v661 = vshll.u32 %v306, 16
        %v663 = vrot.slane %v661, 5
        %v664 = vsel %vm520, %v659, %v663
        %v666 = vshrl.u32 %v308, 16
        %v668 = vrot.slane %v666, 4
        %v669 = vshll.u32 %v308, 16
        %v671 = vrot.slane %v669, 5
        %v672 = vor.u32 %v668, %v671
        %v673 = vrot.slane %v672, 4
        %v675 = vshll.u32 %v309, 16
        %v677 = vrot.slane %v675, 5
        %v678 = vsel %vm520, %v673, %v677
        %v679 = vshrl.u32 %v309, 16
        %v681 = vrot.slane %v679, 4
        %v682 = vor.u32 %v681, %v677
        %v683 = vrot.slane %v682, 4
        %v685 = vshll.u32 %v310, 16
        %v687 = vrot.slane %v685, 5
        %v688 = vsel %vm520, %v683, %v687
        %v690 = vshrl.u32 %v312, 16
        %v692 = vrot.slane %v690, 4
        %v693 = vshll.u32 %v312, 16
        %v695 = vrot.slane %v693, 5
        %v696 = vor.u32 %v692, %v695
        %v697 = vrot.slane %v696, 4
        %v699 = vshll.u32 %v313, 16
        %v701 = vrot.slane %v699, 5
        %v702 = vsel %vm520, %v697, %v701
        %v703 = vshrl.u32 %v313, 16
        %v705 = vrot.slane %v703, 4
        %v706 = vor.u32 %v705, %v701
        %v707 = vrot.slane %v706, 4
        %v709 = vshll.u32 %v314, 16
        %v711 = vrot.slane %v709, 5
        %v712 = vsel %vm520, %v707, %v711
        %s713 = scalar_lea.vmem %s217, 8 [#allocation3]
        %v714 = vld [vmem:[%s713] sm:$0xf]
        %v715 = vld [vmem:[%s713 + $0x4] sm:$0xf]
        %v716 = vunpack.c.l.b16 %v534
        %v717 = vunpack.c.l.b16 %v544
        %v718 = vunpack.c.l.b16 %v558
        %v719 = vunpack.c.l.b16 %v568
        %v720 = vunpack.c.l.b16 %v582
        %v721 = vunpack.c.l.b16 %v592
        %v722 = vunpack.c.l.b16 %v606
        %v723 = vunpack.c.l.b16 %v616
        %v724 = vunpack.c.l.b16 %v630
        %v725 = vunpack.c.l.b16 %v640
        %v726 = vunpack.c.l.b16 %v654
        %v727 = vunpack.c.l.b16 %v664
        %v728 = vunpack.c.l.b16 %v678
        %v729 = vunpack.c.l.b16 %v688
        %v730 = vunpack.c.l.b16 %v702
        %v731 = vunpack.c.l.b16 %v712
        %v732 = vpack.c.b16 %v717, %v716
        %v733 = vpack.c.b16 %v719, %v718
        %v734 = vpack.c.b16 %v721, %v720
        %v735 = vpack.c.b16 %v723, %v722
        %v736 = vpack.c.b16 %v725, %v724
        %v737 = vpack.c.b16 %v727, %v726
        %v738 = vpack.c.b16 %v729, %v728
        %v739 = vpack.c.b16 %v731, %v730
        %v742 = vunpack.c.l.b16 %v714
        %v743 = vunpack.c.l.b16 %v715
        %v744 = vpack.c.b16 %v743, %v742
        %v747 = vsel %vm380, %v732, 0
        %v750 = vsel %vm380, %v733, 0
        %v753 = vsel %vm380, %v734, 0
        %v756 = vsel %vm380, %v735, 0
        %v759 = vsel %vm380, %v736, 0
        %v762 = vsel %vm380, %v737, 0
        %v765 = vsel %vm380, %v738, 0
        %v768 = vsel %vm380, %v739, 0
        %770 = vmatprep.subr.bf16.mxu0 0
        %771 = vmatpush1.bf16.msra.mxu0 %v744
        %772 = vmatprep.subr.bf16.mxu0 0
        %773 = vmatpush1.bf16.msra.mxu0 0
        %774 = vmatprep.subr.bf16.mxu0 0
        %775 = vmatpush1.bf16.msra.mxu0 0
        %776 = vmatprep.subr.bf16.mxu0 0
        %777 = vmatpush1.bf16.msra.mxu0 0
        %778 = vmatprep.subr.bf16.mxu0 0
        %779 = vmatpush1.bf16.msra.mxu0 0
        %780 = vmatprep.subr.bf16.mxu0 0
        %781 = vmatpush1.bf16.msra.mxu0 0
        %782 = vmatprep.subr.bf16.mxu0 0
        %783 = vmatpush1.bf16.msra.mxu0 0
        %784 = vmatprep.subr.bf16.mxu0 0
        %785 = vmatpush1.bf16.msra.mxu0 0
        %786 = vmatprep.subr.bf16.mxu0 0
        %787 = vmatpush1.bf16.msra.mxu0 0
        %788 = vmatprep.subr.bf16.mxu0 0
        %789 = vmatpush1.bf16.msra.mxu0 0
        %790 = vmatprep.subr.bf16.mxu0 0
        %791 = vmatpush1.bf16.msra.mxu0 0
        %792 = vmatprep.subr.bf16.mxu0 0
        %793 = vmatpush1.bf16.msra.mxu0 0
        %794 = vmatprep.subr.bf16.mxu0 0
        %795 = vmatpush1.bf16.msra.mxu0 0
        %796 = vmatprep.subr.bf16.mxu0 0
        %797 = vmatpush1.bf16.msra.mxu0 0
        %798 = vmatprep.subr.bf16.mxu0 0
        %799 = vmatpush1.bf16.msra.mxu0 0
        %800 = vmatprep.subr.bf16.mxu0 0
        %801 = vmatpush1.bf16.msra.mxu0 0
        %802 = vmatprep.mubr.bf16.mxu0 0
        %803 = vmatmul.mubr.bf16.gmra.mrb[0].mxu0 %v747
        %v804 = vpop.f32.mrb[0].mxu0
        %v805 = vadd.f32 0.0, %v804
        %v806 = vpop.f32.mrb[0].mxu0
        %v807 = vpop.f32.mrb[0].mxu0
        %v808 = vadd.f32 0.0, %v807
        %v809 = vpop.f32.mrb[0].mxu0
        %810 = vmatprep.mubr.bf16.mxu0 0
        %811 = vmatmul.mubr.bf16.gmra.mrb[0].mxu0 %v750
        %v812 = vpop.f32.mrb[0].mxu0
        %v813 = vadd.f32 0.0, %v812
        %v814 = vpop.f32.mrb[0].mxu0
        %v815 = vpop.f32.mrb[0].mxu0
        %v816 = vadd.f32 0.0, %v815
        %v817 = vpop.f32.mrb[0].mxu0
        %818 = vmatprep.mubr.bf16.mxu0 0
        %819 = vmatmul.mubr.bf16.gmra.mrb[0].mxu0 %v753
        %v820 = vpop.f32.mrb[0].mxu0
        %v821 = vadd.f32 0.0, %v820
        %v822 = vpop.f32.mrb[0].mxu0
        %v823 = vpop.f32.mrb[0].mxu0
        %v824 = vadd.f32 0.0, %v823
        %v825 = vpop.f32.mrb[0].mxu0
        %826 = vmatprep.mubr.bf16.mxu0 0
        %827 = vmatmul.mubr.bf16.gmra.mrb[0].mxu0 %v756
        %v828 = vpop.f32.mrb[0].mxu0
        %v829 = vadd.f32 0.0, %v828
        %v830 = vpop.f32.mrb[0].mxu0
        %v831 = vpop.f32.mrb[0].mxu0
        %v832 = vadd.f32 0.0, %v831
        %v833 = vpop.f32.mrb[0].mxu0
        %834 = vmatprep.mubr.bf16.mxu0 0
        %835 = vmatmul.mubr.bf16.gmra.mrb[0].mxu0 %v759
        %v836 = vpop.f32.mrb[0].mxu0
        %v837 = vadd.f32 0.0, %v836
        %v838 = vpop.f32.mrb[0].mxu0
        %v839 = vpop.f32.mrb[0].mxu0
        %v840 = vadd.f32 0.0, %v839
        %v841 = vpop.f32.mrb[0].mxu0
        %842 = vmatprep.mubr.bf16.mxu0 0
        %843 = vmatmul.mubr.bf16.gmra.mrb[0].mxu0 %v762
        %v844 = vpop.f32.mrb[0].mxu0
        %v845 = vadd.f32 0.0, %v844
        %v846 = vpop.f32.mrb[0].mxu0
        %v847 = vpop.f32.mrb[0].mxu0
        %v848 = vadd.f32 0.0, %v847
        %v849 = vpop.f32.mrb[0].mxu0
        %850 = vmatprep.mubr.bf16.mxu0 0
        %851 = vmatmul.mubr.bf16.gmra.mrb[0].mxu0 %v765
        %v852 = vpop.f32.mrb[0].mxu0
        %v853 = vadd.f32 0.0, %v852
        %v854 = vpop.f32.mrb[0].mxu0
        %v855 = vpop.f32.mrb[0].mxu0
        %v856 = vadd.f32 0.0, %v855
        %v857 = vpop.f32.mrb[0].mxu0
        %858 = vmatprep.mubr.bf16.mxu0 0
        %859 = vmatmul.mubr.bf16.gmra.mrb[0].mxu0 %v768
        %v860 = vpop.f32.mrb[0].mxu0
        %v861 = vadd.f32 0.0, %v860
        %v862 = vpop.f32.mrb[0].mxu0
        %v863 = vpop.f32.mrb[0].mxu0
        %v864 = vadd.f32 0.0, %v863
        %v865 = vpop.f32.mrb[0].mxu0
        %866 = vdwg.mxu0
        %v867 = vadd.f32 %v502, %v805
        %v868 = vadd.f32 %v503, %v808
        %v869 = vadd.f32 %v504, %v813
        %v870 = vadd.f32 %v505, %v816
        %v871 = vadd.f32 %v506, %v821
        %v872 = vadd.f32 %v507, %v824
        %v873 = vadd.f32 %v508, %v829
        %v874 = vadd.f32 %v509, %v832
        %v875 = vadd.f32 %v510, %v837
        %v876 = vadd.f32 %v511, %v840
        %v877 = vadd.f32 %v512, %v845
        %v878 = vadd.f32 %v513, %v848
        %v879 = vadd.f32 %v514, %v853
        %v880 = vadd.f32 %v515, %v856
        %v881 = vadd.f32 %v516, %v861
        %v882 = vadd.f32 %v517, %v864
        %vm891 = vcmask 1042432
        %vm892 = vcmask 1046532
        %vm893 = vmor %vm891, %vm892
        %v894 = vrot.slane %v284, 5
        %v895 = vrot.slane %v894, 4
        %v896 = vrot.slane %v285, 5
        %v897 = vsel %vm893, %v895, %v896
        %v898 = vrot.slane %v896, 4
        %v899 = vrot.slane %v286, 5
        %v900 = vsel %vm893, %v898, %v899
        %v901 = vrot.slane %v288, 5
        %v902 = vrot.slane %v901, 4
        %v903 = vrot.slane %v289, 5
        %v904 = vsel %vm893, %v902, %v903
        %v905 = vrot.slane %v903, 4
        %v906 = vrot.slane %v290, 5
        %v907 = vsel %vm893, %v905, %v906
        %v908 = vrot.slane %v292, 5
        %v909 = vrot.slane %v908, 4
        %v910 = vrot.slane %v293, 5
        %v911 = vsel %vm893, %v909, %v910
        %v912 = vrot.slane %v910, 4
        %v913 = vrot.slane %v294, 5
        %v914 = vsel %vm893, %v912, %v913
        %v915 = vrot.slane %v296, 5
        %v916 = vrot.slane %v915, 4
        %v917 = vrot.slane %v297, 5
        %v918 = vsel %vm893, %v916, %v917
        %v919 = vrot.slane %v917, 4
        %v920 = vrot.slane %v298, 5
        %v921 = vsel %vm893, %v919, %v920
        %v922 = vrot.slane %v300, 5
        %v923 = vrot.slane %v922, 4
        %v924 = vrot.slane %v301, 5
        %v925 = vsel %vm893, %v923, %v924
        %v926 = vrot.slane %v924, 4
        %v927 = vrot.slane %v302, 5
        %v928 = vsel %vm893, %v926, %v927
        %v929 = vrot.slane %v304, 5
        %v930 = vrot.slane %v929, 4
        %v931 = vrot.slane %v305, 5
        %v932 = vsel %vm893, %v930, %v931
        %v933 = vrot.slane %v931, 4
        %v934 = vrot.slane %v306, 5
        %v935 = vsel %vm893, %v933, %v934
        %v936 = vrot.slane %v308, 5
        %v937 = vrot.slane %v936, 4
        %v938 = vrot.slane %v309, 5
        %v939 = vsel %vm893, %v937, %v938
        %v940 = vrot.slane %v938, 4
        %v941 = vrot.slane %v310, 5
        %v942 = vsel %vm893, %v940, %v941
        %v943 = vrot.slane %v312, 5
        %v944 = vrot.slane %v943, 4
        %v945 = vrot.slane %v313, 5
        %v946 = vsel %vm893, %v944, %v945
        %v947 = vrot.slane %v945, 4
        %v948 = vrot.slane %v314, 5
        %v949 = vsel %vm893, %v947, %v948
        %s950 = scalar_lea.vmem %s217, 16 [#allocation3]
        %v951 = vld [vmem:[%s950] sm:$0xf]
        %v952 = vld [vmem:[%s950 + $0x4] sm:$0xf]
        %v953 = vunpack.c.l.b16 %v897
        %v954 = vunpack.c.l.b16 %v900
        %v955 = vunpack.c.l.b16 %v904
        %v956 = vunpack.c.l.b16 %v907
        %v957 = vunpack.c.l.b16 %v911
        %v958 = vunpack.c.l.b16 %v914
        %v959 = vunpack.c.l.b16 %v918
        %v960 = vunpack.c.l.b16 %v921
        %v961 = vunpack.c.l.b16 %v925
        %v962 = vunpack.c.l.b16 %v928
        %v963 = vunpack.c.l.b16 %v932
        %v964 = vunpack.c.l.b16 %v935
        %v965 = vunpack.c.l.b16 %v939
        %v966 = vunpack.c.l.b16 %v942
        %v967 = vunpack.c.l.b16 %v946
        %v968 = vunpack.c.l.b16 %v949
        %v969 = vpack.c.b16 %v954, %v953
        %v970 = vpack.c.b16 %v956, %v955
        %v971 = vpack.c.b16 %v958, %v957
        %v972 = vpack.c.b16 %v960, %v959
        %v973 = vpack.c.b16 %v962, %v961
        %v974 = vpack.c.b16 %v964, %v963
        %v975 = vpack.c.b16 %v966, %v965
        %v976 = vpack.c.b16 %v968, %v967
        %v979 = vunpack.c.l.b16 %v951
        %v980 = vunpack.c.l.b16 %v952
        %v981 = vpack.c.b16 %v980, %v979
        %v984 = vsel %vm380, %v969, 0
        %v987 = vsel %vm380, %v970, 0
        %v990 = vsel %vm380, %v971, 0
        %v993 = vsel %vm380, %v972, 0
        %v996 = vsel %vm380, %v973, 0
        %v999 = vsel %vm380, %v974, 0
        %v1002 = vsel %vm380, %v975, 0
        %v1005 = vsel %vm380, %v976, 0
        %1007 = vmatprep.subr.bf16.mxu0 0
        %1008 = vmatpush1.bf16.msra.mxu0 %v981
        %1009 = vmatprep.subr.bf16.mxu0 0
        %1010 = vmatpush1.bf16.msra.mxu0 0
        %1011 = vmatprep.subr.bf16.mxu0 0
        %1012 = vmatpush1.bf16.msra.mxu0 0
        %1013 = vmatprep.subr.bf16.mxu0 0
        %1014 = vmatpush1.bf16.msra.mxu0 0
        %1015 = vmatprep.subr.bf16.mxu0 0
        %1016 = vmatpush1.bf16.msra.mxu0 0
        %1017 = vmatprep.subr.bf16.mxu0 0
        %1018 = vmatpush1.bf16.msra.mxu0 0
        %1019 = vmatprep.subr.bf16.mxu0 0
        %1020 = vmatpush1.bf16.msra.mxu0 0
        %1021 = vmatprep.subr.bf16.mxu0 0
        %1022 = vmatpush1.bf16.msra.mxu0 0
        %1023 = vmatprep.subr.bf16.mxu0 0
        %1024 = vmatpush1.bf16.msra.mxu0 0
        %1025 = vmatprep.subr.bf16.mxu0 0
        %1026 = vmatpush1.bf16.msra.mxu0 0
        %1027 = vmatprep.subr.bf16.mxu0 0
        %1028 = vmatpush1.bf16.msra.mxu0 0
        %1029 = vmatprep.subr.bf16.mxu0 0
        %1030 = vmatpush1.bf16.msra.mxu0 0
        %1031 = vmatprep.subr.bf16.mxu0 0
        %1032 = vmatpush1.bf16.msra.mxu0 0
        %1033 = vmatprep.subr.bf16.mxu0 0
        %1034 = vmatpush1.bf16.msra.mxu0 0
        %1035 = vmatprep.subr.bf16.mxu0 0
        %1036 = vmatpush1.bf16.msra.mxu0 0
        %1037 = vmatprep.subr.bf16.mxu0 0
        %1038 = vmatpush1.bf16.msra.mxu0 0
        %1039 = vmatprep.mubr.bf16.mxu0 0
        %1040 = vmatmul.mubr.bf16.gmra.mrb[0].mxu0 %v984
        %v1041 = vpop.f32.mrb[0].mxu0
        %v1042 = vadd.f32 0.0, %v1041
        %v1043 = vpop.f32.mrb[0].mxu0
        %v1044 = vpop.f32.mrb[0].mxu0
        %v1045 = vadd.f32 0.0, %v1044
        %v1046 = vpop.f32.mrb[0].mxu0
        %1047 = vmatprep.mubr.bf16.mxu0 0
        %1048 = vmatmul.mubr.bf16.gmra.mrb[0].mxu0 %v987
        %v1049 = vpop.f32.mrb[0].mxu0
        %v1050 = vadd.f32 0.0, %v1049
        %v1051 = vpop.f32.mrb[0].mxu0
        %v1052 = vpop.f32.mrb[0].mxu0
        %v1053 = vadd.f32 0.0, %v1052
        %v1054 = vpop.f32.mrb[0].mxu0
        %1055 = vmatprep.mubr.bf16.mxu0 0
        %1056 = vmatmul.mubr.bf16.gmra.mrb[0].mxu0 %v990
        %v1057 = vpop.f32.mrb[0].mxu0
        %v1058 = vadd.f32 0.0, %v1057
        %v1059 = vpop.f32.mrb[0].mxu0
        %v1060 = vpop.f32.mrb[0].mxu0
        %v1061 = vadd.f32 0.0, %v1060
        %v1062 = vpop.f32.mrb[0].mxu0
        %1063 = vmatprep.mubr.bf16.mxu0 0
        %1064 = vmatmul.mubr.bf16.gmra.mrb[0].mxu0 %v993
        %v1065 = vpop.f32.mrb[0].mxu0
        %v1066 = vadd.f32 0.0, %v1065
        %v1067 = vpop.f32.mrb[0].mxu0
        %v1068 = vpop.f32.mrb[0].mxu0
        %v1069 = vadd.f32 0.0, %v1068
        %v1070 = vpop.f32.mrb[0].mxu0
        %1071 = vmatprep.mubr.bf16.mxu0 0
        %1072 = vmatmul.mubr.bf16.gmra.mrb[0].mxu0 %v996
        %v1073 = vpop.f32.mrb[0].mxu0
        %v1074 = vadd.f32 0.0, %v1073
        %v1075 = vpop.f32.mrb[0].mxu0
        %v1076 = vpop.f32.mrb[0].mxu0
        %v1077 = vadd.f32 0.0, %v1076
        %v1078 = vpop.f32.mrb[0].mxu0
        %1079 = vmatprep.mubr.bf16.mxu0 0
        %1080 = vmatmul.mubr.bf16.gmra.mrb[0].mxu0 %v999
        %v1081 = vpop.f32.mrb[0].mxu0
        %v1082 = vadd.f32 0.0, %v1081
        %v1083 = vpop.f32.mrb[0].mxu0
        %v1084 = vpop.f32.mrb[0].mxu0
        %v1085 = vadd.f32 0.0, %v1084
        %v1086 = vpop.f32.mrb[0].mxu0
        %1087 = vmatprep.mubr.bf16.mxu0 0
        %1088 = vmatmul.mubr.bf16.gmra.mrb[0].mxu0 %v1002
        %v1089 = vpop.f32.mrb[0].mxu0
        %v1090 = vadd.f32 0.0, %v1089
        %v1091 = vpop.f32.mrb[0].mxu0
        %v1092 = vpop.f32.mrb[0].mxu0
        %v1093 = vadd.f32 0.0, %v1092
        %v1094 = vpop.f32.mrb[0].mxu0
        %1095 = vmatprep.mubr.bf16.mxu0 0
        %1096 = vmatmul.mubr.bf16.gmra.mrb[0].mxu0 %v1005
        %v1097 = vpop.f32.mrb[0].mxu0
        %v1098 = vadd.f32 0.0, %v1097
        %v1099 = vpop.f32.mrb[0].mxu0
        %v1100 = vpop.f32.mrb[0].mxu0
        %v1101 = vadd.f32 0.0, %v1100
        %v1102 = vpop.f32.mrb[0].mxu0
        %1103 = vdwg.mxu0
        %v1104 = vadd.f32 %v867, %v1042
        %v1105 = vadd.f32 %v868, %v1045
        %v1106 = vadd.f32 %v869, %v1050
        %v1107 = vadd.f32 %v870, %v1053
        %v1108 = vadd.f32 %v871, %v1058
        %v1109 = vadd.f32 %v872, %v1061
        %v1110 = vadd.f32 %v873, %v1066
        %v1111 = vadd.f32 %v874, %v1069
        %v1112 = vadd.f32 %v875, %v1074
        %v1113 = vadd.f32 %v876, %v1077
        %v1114 = vadd.f32 %v877, %v1082
        %v1115 = vadd.f32 %v878, %v1085
        %v1116 = vadd.f32 %v879, %v1090
        %v1117 = vadd.f32 %v880, %v1093
        %v1118 = vadd.f32 %v881, %v1098
        %v1119 = vadd.f32 %v882, %v1101
        %vm1120 = vsmask.f32 2304
        %vm1121 = vsmask.f32 6416
        %vm1122 = vmor %vm1120, %vm1121
        %v1123 = vrot.slane %v522, 5
        %v1124 = vrot.slane %v525, 6
        %v1125 = vor.u32 %v1123, %v1124
        %v1126 = vrot.slane %v1125, 4
        %v1127 = vrot.slane %v535, 5
        %v1128 = vrot.slane %v531, 6
        %v1129 = vor.u32 %v1127, %v1128
        %v1130 = vsel %vm1122, %v1126, %v1129
        %v1131 = vrot.slane %v1129, 4
        %v1132 = vshrl.u32 %v286, 16
        %v1134 = vrot.slane %v1132, 5
        %v1135 = vrot.slane %v541, 6
        %v1136 = vor.u32 %v1134, %v1135
        %v1137 = vsel %vm1122, %v1131, %v1136
        %v1138 = vrot.slane %v546, 5
        %v1139 = vrot.slane %v549, 6
        %v1140 = vor.u32 %v1138, %v1139
        %v1141 = vrot.slane %v1140, 4
        %v1142 = vrot.slane %v559, 5
        %v1143 = vrot.slane %v555, 6
        %v1144 = vor.u32 %v1142, %v1143
        %v1145 = vsel %vm1122, %v1141, %v1144
        %v1146 = vrot.slane %v1144, 4
        %v1147 = vshrl.u32 %v290, 16
        %v1149 = vrot.slane %v1147, 5
        %v1150 = vrot.slane %v565, 6
        %v1151 = vor.u32 %v1149, %v1150
        %v1152 = vsel %vm1122, %v1146, %v1151
        %v1153 = vrot.slane %v570, 5
        %v1154 = vrot.slane %v573, 6
        %v1155 = vor.u32 %v1153, %v1154
        %v1156 = vrot.slane %v1155, 4
        %v1157 = vrot.slane %v583, 5
        %v1158 = vrot.slane %v579, 6
        %v1159 = vor.u32 %v1157, %v1158
        %v1160 = vsel %vm1122, %v1156, %v1159
        %v1161 = vrot.slane %v1159, 4
        %v1162 = vshrl.u32 %v294, 16
        %v1164 = vrot.slane %v1162, 5
        %v1165 = vrot.slane %v589, 6
        %v1166 = vor.u32 %v1164, %v1165
        %v1167 = vsel %vm1122, %v1161, %v1166
        %v1168 = vrot.slane %v594, 5
        %v1169 = vrot.slane %v597, 6
        %v1170 = vor.u32 %v1168, %v1169
        %v1171 = vrot.slane %v1170, 4
        %v1172 = vrot.slane %v607, 5
        %v1173 = vrot.slane %v603, 6
        %v1174 = vor.u32 %v1172, %v1173
        %v1175 = vsel %vm1122, %v1171, %v1174
        %v1176 = vrot.slane %v1174, 4
        %v1177 = vshrl.u32 %v298, 16
        %v1179 = vrot.slane %v1177, 5
        %v1180 = vrot.slane %v613, 6
        %v1181 = vor.u32 %v1179, %v1180
        %v1182 = vsel %vm1122, %v1176, %v1181
        %v1183 = vrot.slane %v618, 5
        %v1184 = vrot.slane %v621, 6
        %v1185 = vor.u32 %v1183, %v1184
        %v1186 = vrot.slane %v1185, 4
        %v1187 = vrot.slane %v631, 5
        %v1188 = vrot.slane %v627, 6
        %v1189 = vor.u32 %v1187, %v1188
        %v1190 = vsel %vm1122, %v1186, %v1189
        %v1191 = vrot.slane %v1189, 4
        %v1192 = vshrl.u32 %v302, 16
        %v1194 = vrot.slane %v1192, 5
        %v1195 = vrot.slane %v637, 6
        %v1196 = vor.u32 %v1194, %v1195
        %v1197 = vsel %vm1122, %v1191, %v1196
        %v1198 = vrot.slane %v642, 5
        %v1199 = vrot.slane %v645, 6
        %v1200 = vor.u32 %v1198, %v1199
        %v1201 = vrot.slane %v1200, 4
        %v1202 = vrot.slane %v655, 5
        %v1203 = vrot.slane %v651, 6
        %v1204 = vor.u32 %v1202, %v1203
        %v1205 = vsel %vm1122, %v1201, %v1204
        %v1206 = vrot.slane %v1204, 4
        %v1207 = vshrl.u32 %v306, 16
        %v1209 = vrot.slane %v1207, 5
        %v1210 = vrot.slane %v661, 6
        %v1211 = vor.u32 %v1209, %v1210
        %v1212 = vsel %vm1122, %v1206, %v1211
        %v1213 = vrot.slane %v666, 5
        %v1214 = vrot.slane %v669, 6
        %v1215 = vor.u32 %v1213, %v1214
        %v1216 = vrot.slane %v1215, 4
        %v1217 = vrot.slane %v679, 5
        %v1218 = vrot.slane %v675, 6
        %v1219 = vor.u32 %v1217, %v1218
        %v1220 = vsel %vm1122, %v1216, %v1219
        %v1221 = vrot.slane %v1219, 4
        %v1222 = vshrl.u32 %v310, 16
        %v1224 = vrot.slane %v1222, 5
        %v1225 = vrot.slane %v685, 6
        %v1226 = vor.u32 %v1224, %v1225
        %v1227 = vsel %vm1122, %v1221, %v1226
        %v1228 = vrot.slane %v690, 5
        %v1229 = vrot.slane %v693, 6
        %v1230 = vor.u32 %v1228, %v1229
        %v1231 = vrot.slane %v1230, 4
        %v1232 = vrot.slane %v703, 5
        %v1233 = vrot.slane %v699, 6
        %v1234 = vor.u32 %v1232, %v1233
        %v1235 = vsel %vm1122, %v1231, %v1234
        %v1236 = vrot.slane %v1234, 4
        %v1237 = vshrl.u32 %v314, 16
        %v1239 = vrot.slane %v1237, 5
        %v1240 = vrot.slane %v709, 6
        %v1241 = vor.u32 %v1239, %v1240
        %v1242 = vsel %vm1122, %v1236, %v1241
        %s1243 = scalar_lea.vmem %s217, 24 [#allocation3]
        %v1244 = vld [vmem:[%s1243] sm:$0xf]
        %v1245 = vld [vmem:[%s1243 + $0x4] sm:$0xf]
        %v1246 = vunpack.c.l.b16 %v1130
        %v1247 = vunpack.c.l.b16 %v1137
        %v1248 = vunpack.c.l.b16 %v1145
        %v1249 = vunpack.c.l.b16 %v1152
        %v1250 = vunpack.c.l.b16 %v1160
        %v1251 = vunpack.c.l.b16 %v1167
        %v1252 = vunpack.c.l.b16 %v1175
        %v1253 = vunpack.c.l.b16 %v1182
        %v1254 = vunpack.c.l.b16 %v1190
        %v1255 = vunpack.c.l.b16 %v1197
        %v1256 = vunpack.c.l.b16 %v1205
        %v1257 = vunpack.c.l.b16 %v1212
        %v1258 = vunpack.c.l.b16 %v1220
        %v1259 = vunpack.c.l.b16 %v1227
        %v1260 = vunpack.c.l.b16 %v1235
        %v1261 = vunpack.c.l.b16 %v1242
        %v1262 = vpack.c.b16 %v1247, %v1246
        %v1263 = vpack.c.b16 %v1249, %v1248
        %v1264 = vpack.c.b16 %v1251, %v1250
        %v1265 = vpack.c.b16 %v1253, %v1252
        %v1266 = vpack.c.b16 %v1255, %v1254
        %v1267 = vpack.c.b16 %v1257, %v1256
        %v1268 = vpack.c.b16 %v1259, %v1258
        %v1269 = vpack.c.b16 %v1261, %v1260
        %v1272 = vunpack.c.l.b16 %v1244
        %v1273 = vunpack.c.l.b16 %v1245
        %v1274 = vpack.c.b16 %v1273, %v1272
        %v1277 = vsel %vm380, %v1262, 0
        %v1280 = vsel %vm380, %v1263, 0
        %v1283 = vsel %vm380, %v1264, 0
        %v1286 = vsel %vm380, %v1265, 0
        %v1289 = vsel %vm380, %v1266, 0
        %v1292 = vsel %vm380, %v1267, 0
        %v1295 = vsel %vm380, %v1268, 0
        %v1298 = vsel %vm380, %v1269, 0
        %1300 = vmatprep.subr.bf16.mxu0 0
        %1301 = vmatpush1.bf16.msra.mxu0 %v1274
        %1302 = vmatprep.subr.bf16.mxu0 0
        %1303 = vmatpush1.bf16.msra.mxu0 0
        %1304 = vmatprep.subr.bf16.mxu0 0
        %1305 = vmatpush1.bf16.msra.mxu0 0
        %1306 = vmatprep.subr.bf16.mxu0 0
        %1307 = vmatpush1.bf16.msra.mxu0 0
        %1308 = vmatprep.subr.bf16.mxu0 0
        %1309 = vmatpush1.bf16.msra.mxu0 0
        %1310 = vmatprep.subr.bf16.mxu0 0
        %1311 = vmatpush1.bf16.msra.mxu0 0
        %1312 = vmatprep.subr.bf16.mxu0 0
        %1313 = vmatpush1.bf16.msra.mxu0 0
        %1314 = vmatprep.subr.bf16.mxu0 0
        %1315 = vmatpush1.bf16.msra.mxu0 0
        %1316 = vmatprep.subr.bf16.mxu0 0
        %1317 = vmatpush1.bf16.msra.mxu0 0
        %1318 = vmatprep.subr.bf16.mxu0 0
        %1319 = vmatpush1.bf16.msra.mxu0 0
        %1320 = vmatprep.subr.bf16.mxu0 0
        %1321 = vmatpush1.bf16.msra.mxu0 0
        %1322 = vmatprep.subr.bf16.mxu0 0
        %1323 = vmatpush1.bf16.msra.mxu0 0
        %1324 = vmatprep.subr.bf16.mxu0 0
        %1325 = vmatpush1.bf16.msra.mxu0 0
        %1326 = vmatprep.subr.bf16.mxu0 0
        %1327 = vmatpush1.bf16.msra.mxu0 0
        %1328 = vmatprep.subr.bf16.mxu0 0
        %1329 = vmatpush1.bf16.msra.mxu0 0
        %1330 = vmatprep.subr.bf16.mxu0 0
        %1331 = vmatpush1.bf16.msra.mxu0 0
        %1332 = vmatprep.mubr.bf16.mxu0 0
        %1333 = vmatmul.mubr.bf16.gmra.mrb[0].mxu0 %v1277
        %v1334 = vpop.f32.mrb[0].mxu0
        %v1335 = vadd.f32 0.0, %v1334
        %v1336 = vpop.f32.mrb[0].mxu0
        %v1337 = vpop.f32.mrb[0].mxu0
        %v1338 = vadd.f32 0.0, %v1337
        %v1339 = vpop.f32.mrb[0].mxu0
        %1340 = vmatprep.mubr.bf16.mxu0 0
        %1341 = vmatmul.mubr.bf16.gmra.mrb[0].mxu0 %v1280
        %v1342 = vpop.f32.mrb[0].mxu0
        %v1343 = vadd.f32 0.0, %v1342
        %v1344 = vpop.f32.mrb[0].mxu0
        %v1345 = vpop.f32.mrb[0].mxu0
        %v1346 = vadd.f32 0.0, %v1345
        %v1347 = vpop.f32.mrb[0].mxu0
        %1348 = vmatprep.mubr.bf16.mxu0 0
        %1349 = vmatmul.mubr.bf16.gmra.mrb[0].mxu0 %v1283
        %v1350 = vpop.f32.mrb[0].mxu0
        %v1351 = vadd.f32 0.0, %v1350
        %v1352 = vpop.f32.mrb[0].mxu0
        %v1353 = vpop.f32.mrb[0].mxu0
        %v1354 = vadd.f32 0.0, %v1353
        %v1355 = vpop.f32.mrb[0].mxu0
        %1356 = vmatprep.mubr.bf16.mxu0 0
        %1357 = vmatmul.mubr.bf16.gmra.mrb[0].mxu0 %v1286
        %v1358 = vpop.f32.mrb[0].mxu0
        %v1359 = vadd.f32 0.0, %v1358
        %v1360 = vpop.f32.mrb[0].mxu0
        %v1361 = vpop.f32.mrb[0].mxu0
        %v1362 = vadd.f32 0.0, %v1361
        %v1363 = vpop.f32.mrb[0].mxu0
        %1364 = vmatprep.mubr.bf16.mxu0 0
        %1365 = vmatmul.mubr.bf16.gmra.mrb[0].mxu0 %v1289
        %v1366 = vpop.f32.mrb[0].mxu0
        %v1367 = vadd.f32 0.0, %v1366
        %v1368 = vpop.f32.mrb[0].mxu0
        %v1369 = vpop.f32.mrb[0].mxu0
        %v1370 = vadd.f32 0.0, %v1369
        %v1371 = vpop.f32.mrb[0].mxu0
        %1372 = vmatprep.mubr.bf16.mxu0 0
        %1373 = vmatmul.mubr.bf16.gmra.mrb[0].mxu0 %v1292
        %v1374 = vpop.f32.mrb[0].mxu0
        %v1375 = vadd.f32 0.0, %v1374
        %v1376 = vpop.f32.mrb[0].mxu0
        %v1377 = vpop.f32.mrb[0].mxu0
        %v1378 = vadd.f32 0.0, %v1377
        %v1379 = vpop.f32.mrb[0].mxu0
        %1380 = vmatprep.mubr.bf16.mxu0 0
        %1381 = vmatmul.mubr.bf16.gmra.mrb[0].mxu0 %v1295
        %v1382 = vpop.f32.mrb[0].mxu0
        %v1383 = vadd.f32 0.0, %v1382
        %v1384 = vpop.f32.mrb[0].mxu0
        %v1385 = vpop.f32.mrb[0].mxu0
        %v1386 = vadd.f32 0.0, %v1385
        %v1387 = vpop.f32.mrb[0].mxu0
        %1388 = vmatprep.mubr.bf16.mxu0 0
        %1389 = vmatmul.mubr.bf16.gmra.mrb[0].mxu0 %v1298
        %v1390 = vpop.f32.mrb[0].mxu0
        %v1391 = vadd.f32 0.0, %v1390
        %v1392 = vpop.f32.mrb[0].mxu0
        %v1393 = vpop.f32.mrb[0].mxu0
        %v1394 = vadd.f32 0.0, %v1393
        %v1395 = vpop.f32.mrb[0].mxu0
        %1396 = vdwg.mxu0
        %v1397 = vadd.f32 %v1104, %v1335
        %v1398 = vadd.f32 %v1105, %v1338
        %v1399 = vadd.f32 %v1106, %v1343
        %v1400 = vadd.f32 %v1107, %v1346
        %v1401 = vadd.f32 %v1108, %v1351
        %v1402 = vadd.f32 %v1109, %v1354
        %v1403 = vadd.f32 %v1110, %v1359
        %v1404 = vadd.f32 %v1111, %v1362
        %v1405 = vadd.f32 %v1112, %v1367
        %v1406 = vadd.f32 %v1113, %v1370
        %v1407 = vadd.f32 %v1114, %v1375
        %v1408 = vadd.f32 %v1115, %v1378
        %v1409 = vadd.f32 %v1116, %v1383
        %v1410 = vadd.f32 %v1117, %v1386
        %v1411 = vadd.f32 %v1118, %v1391
        %v1412 = vadd.f32 %v1119, %v1394
        %vm1413 = vcmask 1041408
        %vm1414 = vcmask 1045508
        %vm1415 = vmor %vm1413, %vm1414
        %v1416 = vrot.slane %v284, 6
        %v1417 = vrot.slane %v1416, 4
        %v1418 = vrot.slane %v285, 6
        %v1419 = vsel %vm1415, %v1417, %v1418
        %v1420 = vrot.slane %v1418, 4
        %v1421 = vrot.slane %v286, 6
        %v1422 = vsel %vm1415, %v1420, %v1421
        %v1423 = vrot.slane %v288, 6
        %v1424 = vrot.slane %v1423, 4
        %v1425 = vrot.slane %v289, 6
        %v1426 = vsel %vm1415, %v1424, %v1425
        %v1427 = vrot.slane %v1425, 4
        %v1428 = vrot.slane %v290, 6
        %v1429 = vsel %vm1415, %v1427, %v1428
        %v1430 = vrot.slane %v292, 6
        %v1431 = vrot.slane %v1430, 4
        %v1432 = vrot.slane %v293, 6
        %v1433 = vsel %vm1415, %v1431, %v1432
        %v1434 = vrot.slane %v1432, 4
        %v1435 = vrot.slane %v294, 6
        %v1436 = vsel %vm1415, %v1434, %v1435
        %v1437 = vrot.slane %v296, 6
        %v1438 = vrot.slane %v1437, 4
        %v1439 = vrot.slane %v297, 6
        %v1440 = vsel %vm1415, %v1438, %v1439
        %v1441 = vrot.slane %v1439, 4
        %v1442 = vrot.slane %v298, 6
        %v1443 = vsel %vm1415, %v1441, %v1442
        %v1444 = vrot.slane %v300, 6
        %v1445 = vrot.slane %v1444, 4
        %v1446 = vrot.slane %v301, 6
        %v1447 = vsel %vm1415, %v1445, %v1446
        %v1448 = vrot.slane %v1446, 4
        %v1449 = vrot.slane %v302, 6
        %v1450 = vsel %vm1415, %v1448, %v1449
        %v1451 = vrot.slane %v304, 6
        %v1452 = vrot.slane %v1451, 4
        %v1453 = vrot.slane %v305, 6
        %v1454 = vsel %vm1415, %v1452, %v1453
        %v1455 = vrot.slane %v1453, 4
        %v1456 = vrot.slane %v306, 6
        %v1457 = vsel %vm1415, %v1455, %v1456
        %v1458 = vrot.slane %v308, 6
        %v1459 = vrot.slane %v1458, 4
        %v1460 = vrot.slane %v309, 6
        %v1461 = vsel %vm1415, %v1459, %v1460
        %v1462 = vrot.slane %v1460, 4
        %v1463 = vrot.slane %v310, 6
        %v1464 = vsel %vm1415, %v1462, %v1463
        %v1465 = vrot.slane %v312, 6
        %v1466 = vrot.slane %v1465, 4
        %v1467 = vrot.slane %v313, 6
        %v1468 = vsel %vm1415, %v1466, %v1467
        %v1469 = vrot.slane %v1467, 4
        %v1470 = vrot.slane %v314, 6
        %v1471 = vsel %vm1415, %v1469, %v1470
        %s1472 = scalar_lea.vmem %s217, 32 [#allocation3]
        %v1473 = vld [vmem:[%s1472] sm:$0xf]
        %v1474 = vld [vmem:[%s1472 + $0x4] sm:$0xf]
        %v1475 = vunpack.c.l.b16 %v1419
        %v1476 = vunpack.c.l.b16 %v1422
        %v1477 = vunpack.c.l.b16 %v1426
        %v1478 = vunpack.c.l.b16 %v1429
        %v1479 = vunpack.c.l.b16 %v1433
        %v1480 = vunpack.c.l.b16 %v1436
        %v1481 = vunpack.c.l.b16 %v1440
        %v1482 = vunpack.c.l.b16 %v1443
        %v1483 = vunpack.c.l.b16 %v1447
        %v1484 = vunpack.c.l.b16 %v1450
        %v1485 = vunpack.c.l.b16 %v1454
        %v1486 = vunpack.c.l.b16 %v1457
        %v1487 = vunpack.c.l.b16 %v1461
        %v1488 = vunpack.c.l.b16 %v1464
        %v1489 = vunpack.c.l.b16 %v1468
        %v1490 = vunpack.c.l.b16 %v1471
        %v1491 = vpack.c.b16 %v1476, %v1475
        %v1492 = vpack.c.b16 %v1478, %v1477
        %v1493 = vpack.c.b16 %v1480, %v1479
        %v1494 = vpack.c.b16 %v1482, %v1481
        %v1495 = vpack.c.b16 %v1484, %v1483
        %v1496 = vpack.c.b16 %v1486, %v1485
        %v1497 = vpack.c.b16 %v1488, %v1487
        %v1498 = vpack.c.b16 %v1490, %v1489
        %v1501 = vunpack.c.l.b16 %v1473
        %v1502 = vunpack.c.l.b16 %v1474
        %v1503 = vpack.c.b16 %v1502, %v1501
        %v1506 = vsel %vm380, %v1491, 0
        %v1509 = vsel %vm380, %v1492, 0
        %v1512 = vsel %vm380, %v1493, 0
        %v1515 = vsel %vm380, %v1494, 0
        %v1518 = vsel %vm380, %v1495, 0
        %v1521 = vsel %vm380, %v1496, 0
        %v1524 = vsel %vm380, %v1497, 0
        %v1527 = vsel %vm380, %v1498, 0
        %1529 = vmatprep.subr.bf16.mxu0 0
        %1530 = vmatpush1.bf16.msra.mxu0 %v1503
        %1531 = vmatprep.subr.bf16.mxu0 0
        %1532 = vmatpush1.bf16.msra.mxu0 0
        %1533 = vmatprep.subr.bf16.mxu0 0
        %1534 = vmatpush1.bf16.msra.mxu0 0
        %1535 = vmatprep.subr.bf16.mxu0 0
        %1536 = vmatpush1.bf16.msra.mxu0 0
        %1537 = vmatprep.subr.bf16.mxu0 0
        %1538 = vmatpush1.bf16.msra.mxu0 0
        %1539 = vmatprep.subr.bf16.mxu0 0
        %1540 = vmatpush1.bf16.msra.mxu0 0
        %1541 = vmatprep.subr.bf16.mxu0 0
        %1542 = vmatpush1.bf16.msra.mxu0 0
        %1543 = vmatprep.subr.bf16.mxu0 0
        %1544 = vmatpush1.bf16.msra.mxu0 0
        %1545 = vmatprep.subr.bf16.mxu0 0
        %1546 = vmatpush1.bf16.msra.mxu0 0
        %1547 = vmatprep.subr.bf16.mxu0 0
        %1548 = vmatpush1.bf16.msra.mxu0 0
        %1549 = vmatprep.subr.bf16.mxu0 0
        %1550 = vmatpush1.bf16.msra.mxu0 0
        %1551 = vmatprep.subr.bf16.mxu0 0
        %1552 = vmatpush1.bf16.msra.mxu0 0
        %1553 = vmatprep.subr.bf16.mxu0 0
        %1554 = vmatpush1.bf16.msra.mxu0 0
        %1555 = vmatprep.subr.bf16.mxu0 0
        %1556 = vmatpush1.bf16.msra.mxu0 0
        %1557 = vmatprep.subr.bf16.mxu0 0
        %1558 = vmatpush1.bf16.msra.mxu0 0
        %1559 = vmatprep.subr.bf16.mxu0 0
        %1560 = vmatpush1.bf16.msra.mxu0 0
        %1561 = vmatprep.mubr.bf16.mxu0 0
        %1562 = vmatmul.mubr.bf16.gmra.mrb[0].mxu0 %v1506
        %v1563 = vpop.f32.mrb[0].mxu0
        %v1564 = vadd.f32 0.0, %v1563
        %v1565 = vpop.f32.mrb[0].mxu0
        %v1566 = vpop.f32.mrb[0].mxu0
        %v1567 = vadd.f32 0.0, %v1566
        %v1568 = vpop.f32.mrb[0].mxu0
        %1569 = vmatprep.mubr.bf16.mxu0 0
        %1570 = vmatmul.mubr.bf16.gmra.mrb[0].mxu0 %v1509
        %v1571 = vpop.f32.mrb[0].mxu0
        %v1572 = vadd.f32 0.0, %v1571
        %v1573 = vpop.f32.mrb[0].mxu0
        %v1574 = vpop.f32.mrb[0].mxu0
        %v1575 = vadd.f32 0.0, %v1574
        %v1576 = vpop.f32.mrb[0].mxu0
        %1577 = vmatprep.mubr.bf16.mxu0 0
        %1578 = vmatmul.mubr.bf16.gmra.mrb[0].mxu0 %v1512
        %v1579 = vpop.f32.mrb[0].mxu0
        %v1580 = vadd.f32 0.0, %v1579
        %v1581 = vpop.f32.mrb[0].mxu0
        %v1582 = vpop.f32.mrb[0].mxu0
        %v1583 = vadd.f32 0.0, %v1582
        %v1584 = vpop.f32.mrb[0].mxu0
        %1585 = vmatprep.mubr.bf16.mxu0 0
        %1586 = vmatmul.mubr.bf16.gmra.mrb[0].mxu0 %v1515
        %v1587 = vpop.f32.mrb[0].mxu0
        %v1588 = vadd.f32 0.0, %v1587
        %v1589 = vpop.f32.mrb[0].mxu0
        %v1590 = vpop.f32.mrb[0].mxu0
        %v1591 = vadd.f32 0.0, %v1590
        %v1592 = vpop.f32.mrb[0].mxu0
        %1593 = vmatprep.mubr.bf16.mxu0 0
        %1594 = vmatmul.mubr.bf16.gmra.mrb[0].mxu0 %v1518
        %v1595 = vpop.f32.mrb[0].mxu0
        %v1596 = vadd.f32 0.0, %v1595
        %v1597 = vpop.f32.mrb[0].mxu0
        %v1598 = vpop.f32.mrb[0].mxu0
        %v1599 = vadd.f32 0.0, %v1598
        %v1600 = vpop.f32.mrb[0].mxu0
        %1601 = vmatprep.mubr.bf16.mxu0 0
        %1602 = vmatmul.mubr.bf16.gmra.mrb[0].mxu0 %v1521
        %v1603 = vpop.f32.mrb[0].mxu0
        %v1604 = vadd.f32 0.0, %v1603
        %v1605 = vpop.f32.mrb[0].mxu0
        %v1606 = vpop.f32.mrb[0].mxu0
        %v1607 = vadd.f32 0.0, %v1606
        %v1608 = vpop.f32.mrb[0].mxu0
        %1609 = vmatprep.mubr.bf16.mxu0 0
        %1610 = vmatmul.mubr.bf16.gmra.mrb[0].mxu0 %v1524
        %v1611 = vpop.f32.mrb[0].mxu0
        %v1612 = vadd.f32 0.0, %v1611
        %v1613 = vpop.f32.mrb[0].mxu0
        %v1614 = vpop.f32.mrb[0].mxu0
        %v1615 = vadd.f32 0.0, %v1614
        %v1616 = vpop.f32.mrb[0].mxu0
        %1617 = vmatprep.mubr.bf16.mxu0 0
        %1618 = vmatmul.mubr.bf16.gmra.mrb[0].mxu0 %v1527
        %v1619 = vpop.f32.mrb[0].mxu0
        %v1620 = vadd.f32 0.0, %v1619
        %v1621 = vpop.f32.mrb[0].mxu0
        %v1622 = vpop.f32.mrb[0].mxu0
        %v1623 = vadd.f32 0.0, %v1622
        %v1624 = vpop.f32.mrb[0].mxu0
        %1625 = vdwg.mxu0
        %v1626 = vadd.f32 %v1397, %v1564
        %v1627 = vadd.f32 %v1398, %v1567
        %v1628 = vadd.f32 %v1399, %v1572
        %v1629 = vadd.f32 %v1400, %v1575
        %v1630 = vadd.f32 %v1401, %v1580
        %v1631 = vadd.f32 %v1402, %v1583
        %v1632 = vadd.f32 %v1403, %v1588
        %v1633 = vadd.f32 %v1404, %v1591
        %v1634 = vadd.f32 %v1405, %v1596
        %v1635 = vadd.f32 %v1406, %v1599
        %v1636 = vadd.f32 %v1407, %v1604
        %v1637 = vadd.f32 %v1408, %v1607
        %v1638 = vadd.f32 %v1409, %v1612
        %v1639 = vadd.f32 %v1410, %v1615
        %v1640 = vadd.f32 %v1411, %v1620
        %v1641 = vadd.f32 %v1412, %v1623
        %vm1642 = vsmask.f32 1280
        %vm1643 = vsmask.f32 5392
        %vm1644 = vmor %vm1642, %vm1643
        %v1645 = vrot.slane %v522, 6
        %v1646 = vrot.slane %v525, 7
        %v1647 = vor.u32 %v1645, %v1646
        %v1648 = vrot.slane %v1647, 4
        %v1649 = vrot.slane %v535, 6
        %v1650 = vrot.slane %v531, 7
        %v1651 = vor.u32 %v1649, %v1650
        %v1652 = vsel %vm1644, %v1648, %v1651
        %v1653 = vrot.slane %v1651, 4
        %v1654 = vrot.slane %v1132, 6
        %v1655 = vrot.slane %v541, 7
        %v1656 = vor.u32 %v1654, %v1655
        %v1657 = vsel %vm1644, %v1653, %v1656
        %v1658 = vrot.slane %v546, 6
        %v1659 = vrot.slane %v549, 7
        %v1660 = vor.u32 %v1658, %v1659
        %v1661 = vrot.slane %v1660, 4
        %v1662 = vrot.slane %v559, 6
        %v1663 = vrot.slane %v555, 7
        %v1664 = vor.u32 %v1662, %v1663
        %v1665 = vsel %vm1644, %v1661, %v1664
        %v1666 = vrot.slane %v1664, 4
        %v1667 = vrot.slane %v1147, 6
        %v1668 = vrot.slane %v565, 7
        %v1669 = vor.u32 %v1667, %v1668
        %v1670 = vsel %vm1644, %v1666, %v1669
        %v1671 = vrot.slane %v570, 6
        %v1672 = vrot.slane %v573, 7
        %v1673 = vor.u32 %v1671, %v1672
        %v1674 = vrot.slane %v1673, 4
        %v1675 = vrot.slane %v583, 6
        %v1676 = vrot.slane %v579, 7
        %v1677 = vor.u32 %v1675, %v1676
        %v1678 = vsel %vm1644, %v1674, %v1677
        %v1679 = vrot.slane %v1677, 4
        %v1680 = vrot.slane %v1162, 6
        %v1681 = vrot.slane %v589, 7
        %v1682 = vor.u32 %v1680, %v1681
        %v1683 = vsel %vm1644, %v1679, %v1682
        %v1684 = vrot.slane %v594, 6
        %v1685 = vrot.slane %v597, 7
        %v1686 = vor.u32 %v1684, %v1685
        %v1687 = vrot.slane %v1686, 4
        %v1688 = vrot.slane %v607, 6
        %v1689 = vrot.slane %v603, 7
        %v1690 = vor.u32 %v1688, %v1689
        %v1691 = vsel %vm1644, %v1687, %v1690
        %v1692 = vrot.slane %v1690, 4
        %v1693 = vrot.slane %v1177, 6
        %v1694 = vrot.slane %v613, 7
        %v1695 = vor.u32 %v1693, %v1694
        %v1696 = vsel %vm1644, %v1692, %v1695
        %v1697 = vrot.slane %v618, 6
        %v1698 = vrot.slane %v621, 7
        %v1699 = vor.u32 %v1697, %v1698
        %v1700 = vrot.slane %v1699, 4
        %v1701 = vrot.slane %v631, 6
        %v1702 = vrot.slane %v627, 7
        %v1703 = vor.u32 %v1701, %v1702
        %v1704 = vsel %vm1644, %v1700, %v1703
        %v1705 = vrot.slane %v1703, 4
        %v1706 = vrot.slane %v1192, 6
        %v1707 = vrot.slane %v637, 7
        %v1708 = vor.u32 %v1706, %v1707
        %v1709 = vsel %vm1644, %v1705, %v1708
        %v1710 = vrot.slane %v642, 6
        %v1711 = vrot.slane %v645, 7
        %v1712 = vor.u32 %v1710, %v1711
        %v1713 = vrot.slane %v1712, 4
        %v1714 = vrot.slane %v655, 6
        %v1715 = vrot.slane %v651, 7
        %v1716 = vor.u32 %v1714, %v1715
        %v1717 = vsel %vm1644, %v1713, %v1716
        %v1718 = vrot.slane %v1716, 4
        %v1719 = vrot.slane %v1207, 6
        %v1720 = vrot.slane %v661, 7
        %v1721 = vor.u32 %v1719, %v1720
        %v1722 = vsel %vm1644, %v1718, %v1721
        %v1723 = vrot.slane %v666, 6
        %v1724 = vrot.slane %v669, 7
        %v1725 = vor.u32 %v1723, %v1724
        %v1726 = vrot.slane %v1725, 4
        %v1727 = vrot.slane %v679, 6
        %v1728 = vrot.slane %v675, 7
        %v1729 = vor.u32 %v1727, %v1728
        %v1730 = vsel %vm1644, %v1726, %v1729
        %v1731 = vrot.slane %v1729, 4
        %v1732 = vrot.slane %v1222, 6
        %v1733 = vrot.slane %v685, 7
        %v1734 = vor.u32 %v1732, %v1733
        %v1735 = vsel %vm1644, %v1731, %v1734
        %v1736 = vrot.slane %v690, 6
        %v1737 = vrot.slane %v693, 7
        %v1738 = vor.u32 %v1736, %v1737
        %v1739 = vrot.slane %v1738, 4
        %v1740 = vrot.slane %v703, 6
        %v1741 = vrot.slane %v699, 7
        %v1742 = vor.u32 %v1740, %v1741
        %v1743 = vsel %vm1644, %v1739, %v1742
        %v1744 = vrot.slane %v1742, 4
        %v1745 = vrot.slane %v1237, 6
        %v1746 = vrot.slane %v709, 7
        %v1747 = vor.u32 %v1745, %v1746
        %v1748 = vsel %vm1644, %v1744, %v1747
        %s1749 = scalar_lea.vmem %s217, 40 [#allocation3]
        %v1750 = vld [vmem:[%s1749] sm:$0xf]
        %v1751 = vld [vmem:[%s1749 + $0x4] sm:$0xf]
        %v1752 = vunpack.c.l.b16 %v1652
        %v1753 = vunpack.c.l.b16 %v1657
        %v1754 = vunpack.c.l.b16 %v1665
        %v1755 = vunpack.c.l.b16 %v1670
        %v1756 = vunpack.c.l.b16 %v1678
        %v1757 = vunpack.c.l.b16 %v1683
        %v1758 = vunpack.c.l.b16 %v1691
        %v1759 = vunpack.c.l.b16 %v1696
        %v1760 = vunpack.c.l.b16 %v1704
        %v1761 = vunpack.c.l.b16 %v1709
        %v1762 = vunpack.c.l.b16 %v1717
        %v1763 = vunpack.c.l.b16 %v1722
        %v1764 = vunpack.c.l.b16 %v1730
        %v1765 = vunpack.c.l.b16 %v1735
        %v1766 = vunpack.c.l.b16 %v1743
        %v1767 = vunpack.c.l.b16 %v1748
        %v1768 = vpack.c.b16 %v1753, %v1752
        %v1769 = vpack.c.b16 %v1755, %v1754
        %v1770 = vpack.c.b16 %v1757, %v1756
        %v1771 = vpack.c.b16 %v1759, %v1758
        %v1772 = vpack.c.b16 %v1761, %v1760
        %v1773 = vpack.c.b16 %v1763, %v1762
        %v1774 = vpack.c.b16 %v1765, %v1764
        %v1775 = vpack.c.b16 %v1767, %v1766
        %v1778 = vunpack.c.l.b16 %v1750
        %v1779 = vunpack.c.l.b16 %v1751
        %v1780 = vpack.c.b16 %v1779, %v1778
        %v1783 = vsel %vm380, %v1768, 0
        %v1786 = vsel %vm380, %v1769, 0
        %v1789 = vsel %vm380, %v1770, 0
        %v1792 = vsel %vm380, %v1771, 0
        %v1795 = vsel %vm380, %v1772, 0
        %v1798 = vsel %vm380, %v1773, 0
        %v1801 = vsel %vm380, %v1774, 0
        %v1804 = vsel %vm380, %v1775, 0
        %1806 = vmatprep.subr.bf16.mxu0 0
        %1807 = vmatpush1.bf16.msra.mxu0 %v1780
        %1808 = vmatprep.subr.bf16.mxu0 0
        %1809 = vmatpush1.bf16.msra.mxu0 0
        %1810 = vmatprep.subr.bf16.mxu0 0
        %1811 = vmatpush1.bf16.msra.mxu0 0
        %1812 = vmatprep.subr.bf16.mxu0 0
        %1813 = vmatpush1.bf16.msra.mxu0 0
        %1814 = vmatprep.subr.bf16.mxu0 0
        %1815 = vmatpush1.bf16.msra.mxu0 0
        %1816 = vmatprep.subr.bf16.mxu0 0
        %1817 = vmatpush1.bf16.msra.mxu0 0
        %1818 = vmatprep.subr.bf16.mxu0 0
        %1819 = vmatpush1.bf16.msra.mxu0 0
        %1820 = vmatprep.subr.bf16.mxu0 0
        %1821 = vmatpush1.bf16.msra.mxu0 0
        %1822 = vmatprep.subr.bf16.mxu0 0
        %1823 = vmatpush1.bf16.msra.mxu0 0
        %1824 = vmatprep.subr.bf16.mxu0 0
        %1825 = vmatpush1.bf16.msra.mxu0 0
        %1826 = vmatprep.subr.bf16.mxu0 0
        %1827 = vmatpush1.bf16.msra.mxu0 0
        %1828 = vmatprep.subr.bf16.mxu0 0
        %1829 = vmatpush1.bf16.msra.mxu0 0
        %1830 = vmatprep.subr.bf16.mxu0 0
        %1831 = vmatpush1.bf16.msra.mxu0 0
        %1832 = vmatprep.subr.bf16.mxu0 0
        %1833 = vmatpush1.bf16.msra.mxu0 0
        %1834 = vmatprep.subr.bf16.mxu0 0
        %1835 = vmatpush1.bf16.msra.mxu0 0
        %1836 = vmatprep.subr.bf16.mxu0 0
        %1837 = vmatpush1.bf16.msra.mxu0 0
        %1838 = vmatprep.mubr.bf16.mxu0 0
        %1839 = vmatmul.mubr.bf16.gmra.mrb[0].mxu0 %v1783
        %v1840 = vpop.f32.mrb[0].mxu0
        %v1841 = vadd.f32 0.0, %v1840
        %v1842 = vpop.f32.mrb[0].mxu0
        %v1843 = vpop.f32.mrb[0].mxu0
        %v1844 = vadd.f32 0.0, %v1843
        %v1845 = vpop.f32.mrb[0].mxu0
        %1846 = vmatprep.mubr.bf16.mxu0 0
        %1847 = vmatmul.mubr.bf16.gmra.mrb[0].mxu0 %v1786
        %v1848 = vpop.f32.mrb[0].mxu0
        %v1849 = vadd.f32 0.0, %v1848
        %v1850 = vpop.f32.mrb[0].mxu0
        %v1851 = vpop.f32.mrb[0].mxu0
        %v1852 = vadd.f32 0.0, %v1851
        %v1853 = vpop.f32.mrb[0].mxu0
        %1854 = vmatprep.mubr.bf16.mxu0 0
        %1855 = vmatmul.mubr.bf16.gmra.mrb[0].mxu0 %v1789
        %v1856 = vpop.f32.mrb[0].mxu0
        %v1857 = vadd.f32 0.0, %v1856
        %v1858 = vpop.f32.mrb[0].mxu0
        %v1859 = vpop.f32.mrb[0].mxu0
        %v1860 = vadd.f32 0.0, %v1859
        %v1861 = vpop.f32.mrb[0].mxu0
        %1862 = vmatprep.mubr.bf16.mxu0 0
        %1863 = vmatmul.mubr.bf16.gmra.mrb[0].mxu0 %v1792
        %v1864 = vpop.f32.mrb[0].mxu0
        %v1865 = vadd.f32 0.0, %v1864
        %v1866 = vpop.f32.mrb[0].mxu0
        %v1867 = vpop.f32.mrb[0].mxu0
        %v1868 = vadd.f32 0.0, %v1867
        %v1869 = vpop.f32.mrb[0].mxu0
        %1870 = vmatprep.mubr.bf16.mxu0 0
        %1871 = vmatmul.mubr.bf16.gmra.mrb[0].mxu0 %v1795
        %v1872 = vpop.f32.mrb[0].mxu0
        %v1873 = vadd.f32 0.0, %v1872
        %v1874 = vpop.f32.mrb[0].mxu0
        %v1875 = vpop.f32.mrb[0].mxu0
        %v1876 = vadd.f32 0.0, %v1875
        %v1877 = vpop.f32.mrb[0].mxu0
        %1878 = vmatprep.mubr.bf16.mxu0 0
        %1879 = vmatmul.mubr.bf16.gmra.mrb[0].mxu0 %v1798
        %v1880 = vpop.f32.mrb[0].mxu0
        %v1881 = vadd.f32 0.0, %v1880
        %v1882 = vpop.f32.mrb[0].mxu0
        %v1883 = vpop.f32.mrb[0].mxu0
        %v1884 = vadd.f32 0.0, %v1883
        %v1885 = vpop.f32.mrb[0].mxu0
        %1886 = vmatprep.mubr.bf16.mxu0 0
        %1887 = vmatmul.mubr.bf16.gmra.mrb[0].mxu0 %v1801
        %v1888 = vpop.f32.mrb[0].mxu0
        %v1889 = vadd.f32 0.0, %v1888
        %v1890 = vpop.f32.mrb[0].mxu0
        %v1891 = vpop.f32.mrb[0].mxu0
        %v1892 = vadd.f32 0.0, %v1891
        %v1893 = vpop.f32.mrb[0].mxu0
        %1894 = vmatprep.mubr.bf16.mxu0 0
        %1895 = vmatmul.mubr.bf16.gmra.mrb[0].mxu0 %v1804
        %v1896 = vpop.f32.mrb[0].mxu0
        %v1897 = vadd.f32 0.0, %v1896
        %v1898 = vpop.f32.mrb[0].mxu0
        %v1899 = vpop.f32.mrb[0].mxu0
        %v1900 = vadd.f32 0.0, %v1899
        %v1901 = vpop.f32.mrb[0].mxu0
        %1902 = vdwg.mxu0
        %v1903 = vadd.f32 %v1626, %v1841
        %v1904 = vadd.f32 %v1627, %v1844
        %v1905 = vadd.f32 %v1628, %v1849
        %v1906 = vadd.f32 %v1629, %v1852
        %v1907 = vadd.f32 %v1630, %v1857
        %v1908 = vadd.f32 %v1631, %v1860
        %v1909 = vadd.f32 %v1632, %v1865
        %v1910 = vadd.f32 %v1633, %v1868
        %v1911 = vadd.f32 %v1634, %v1873
        %v1912 = vadd.f32 %v1635, %v1876
        %v1913 = vadd.f32 %v1636, %v1881
        %v1914 = vadd.f32 %v1637, %v1884
        %v1915 = vadd.f32 %v1638, %v1889
        %v1916 = vadd.f32 %v1639, %v1892
        %v1917 = vadd.f32 %v1640, %v1897
        %v1918 = vadd.f32 %v1641, %v1900
        %vm1919 = vcmask 1040384
        %vm1920 = vcmask 1044484
        %vm1921 = vmor %vm1919, %vm1920
        %v1922 = vrot.slane %v284, 7
        %v1923 = vrot.slane %v1922, 4
        %v1924 = vrot.slane %v285, 7
        %v1925 = vsel %vm1921, %v1923, %v1924
        %v1926 = vrot.slane %v1924, 4
        %v1927 = vrot.slane %v286, 7
        %v1928 = vsel %vm1921, %v1926, %v1927
        %v1929 = vrot.slane %v288, 7
        %v1930 = vrot.slane %v1929, 4
        %v1931 = vrot.slane %v289, 7
        %v1932 = vsel %vm1921, %v1930, %v1931
        %v1933 = vrot.slane %v1931, 4
        %v1934 = vrot.slane %v290, 7
        %v1935 = vsel %vm1921, %v1933, %v1934
        %v1936 = vrot.slane %v292, 7
        %v1937 = vrot.slane %v1936, 4
        %v1938 = vrot.slane %v293, 7
        %v1939 = vsel %vm1921, %v1937, %v1938
        %v1940 = vrot.slane %v1938, 4
        %v1941 = vrot.slane %v294, 7
        %v1942 = vsel %vm1921, %v1940, %v1941
        %v1943 = vrot.slane %v296, 7
        %v1944 = vrot.slane %v1943, 4
        %v1945 = vrot.slane %v297, 7
        %v1946 = vsel %vm1921, %v1944, %v1945
        %v1947 = vrot.slane %v1945, 4
        %v1948 = vrot.slane %v298, 7
        %v1949 = vsel %vm1921, %v1947, %v1948
        %v1950 = vrot.slane %v300, 7
        %v1951 = vrot.slane %v1950, 4
        %v1952 = vrot.slane %v301, 7
        %v1953 = vsel %vm1921, %v1951, %v1952
        %v1954 = vrot.slane %v1952, 4
        %v1955 = vrot.slane %v302, 7
        %v1956 = vsel %vm1921, %v1954, %v1955
        %v1957 = vrot.slane %v304, 7
        %v1958 = vrot.slane %v1957, 4
        %v1959 = vrot.slane %v305, 7
        %v1960 = vsel %vm1921, %v1958, %v1959
        %v1961 = vrot.slane %v1959, 4
        %v1962 = vrot.slane %v306, 7
        %v1963 = vsel %vm1921, %v1961, %v1962
        %v1964 = vrot.slane %v308, 7
        %v1965 = vrot.slane %v1964, 4
        %v1966 = vrot.slane %v309, 7
        %v1967 = vsel %vm1921, %v1965, %v1966
        %v1968 = vrot.slane %v1966, 4
        %v1969 = vrot.slane %v310, 7
        %v1970 = vsel %vm1921, %v1968, %v1969
        %v1971 = vrot.slane %v312, 7
        %v1972 = vrot.slane %v1971, 4
        %v1973 = vrot.slane %v313, 7
        %v1974 = vsel %vm1921, %v1972, %v1973
        %v1975 = vrot.slane %v1973, 4
        %v1976 = vrot.slane %v314, 7
        %v1977 = vsel %vm1921, %v1975, %v1976
        %s1978 = scalar_lea.vmem %s217, 48 [#allocation3]
        %v1979 = vld [vmem:[%s1978] sm:$0xf]
        %v1980 = vld [vmem:[%s1978 + $0x4] sm:$0xf]
        %v1981 = vunpack.c.l.b16 %v1925
        %v1982 = vunpack.c.l.b16 %v1928
        %v1983 = vunpack.c.l.b16 %v1932
        %v1984 = vunpack.c.l.b16 %v1935
        %v1985 = vunpack.c.l.b16 %v1939
        %v1986 = vunpack.c.l.b16 %v1942
        %v1987 = vunpack.c.l.b16 %v1946
        %v1988 = vunpack.c.l.b16 %v1949
        %v1989 = vunpack.c.l.b16 %v1953
        %v1990 = vunpack.c.l.b16 %v1956
        %v1991 = vunpack.c.l.b16 %v1960
        %v1992 = vunpack.c.l.b16 %v1963
        %v1993 = vunpack.c.l.b16 %v1967
        %v1994 = vunpack.c.l.b16 %v1970
        %v1995 = vunpack.c.l.b16 %v1974
        %v1996 = vunpack.c.l.b16 %v1977
        %v1997 = vpack.c.b16 %v1982, %v1981
        %v1998 = vpack.c.b16 %v1984, %v1983
        %v1999 = vpack.c.b16 %v1986, %v1985
        %v2000 = vpack.c.b16 %v1988, %v1987
        %v2001 = vpack.c.b16 %v1990, %v1989
        %v2002 = vpack.c.b16 %v1992, %v1991
        %v2003 = vpack.c.b16 %v1994, %v1993
        %v2004 = vpack.c.b16 %v1996, %v1995
        %v2007 = vunpack.c.l.b16 %v1979
        %v2008 = vunpack.c.l.b16 %v1980
        %v2009 = vpack.c.b16 %v2008, %v2007
        %v2012 = vsel %vm380, %v1997, 0
        %v2015 = vsel %vm380, %v1998, 0
        %v2018 = vsel %vm380, %v1999, 0
        %v2021 = vsel %vm380, %v2000, 0
        %v2024 = vsel %vm380, %v2001, 0
        %v2027 = vsel %vm380, %v2002, 0
        %v2030 = vsel %vm380, %v2003, 0
        %v2033 = vsel %vm380, %v2004, 0
        %2035 = vmatprep.subr.bf16.mxu0 0
        %2036 = vmatpush1.bf16.msra.mxu0 %v2009
        %2037 = vmatprep.subr.bf16.mxu0 0
        %2038 = vmatpush1.bf16.msra.mxu0 0
        %2039 = vmatprep.subr.bf16.mxu0 0
        %2040 = vmatpush1.bf16.msra.mxu0 0
        %2041 = vmatprep.subr.bf16.mxu0 0
        %2042 = vmatpush1.bf16.msra.mxu0 0
        %2043 = vmatprep.subr.bf16.mxu0 0
        %2044 = vmatpush1.bf16.msra.mxu0 0
        %2045 = vmatprep.subr.bf16.mxu0 0
        %2046 = vmatpush1.bf16.msra.mxu0 0
        %2047 = vmatprep.subr.bf16.mxu0 0
        %2048 = vmatpush1.bf16.msra.mxu0 0
        %2049 = vmatprep.subr.bf16.mxu0 0
        %2050 = vmatpush1.bf16.msra.mxu0 0
        %2051 = vmatprep.subr.bf16.mxu0 0
        %2052 = vmatpush1.bf16.msra.mxu0 0
        %2053 = vmatprep.subr.bf16.mxu0 0
        %2054 = vmatpush1.bf16.msra.mxu0 0
        %2055 = vmatprep.subr.bf16.mxu0 0
        %2056 = vmatpush1.bf16.msra.mxu0 0
        %2057 = vmatprep.subr.bf16.mxu0 0
        %2058 = vmatpush1.bf16.msra.mxu0 0
        %2059 = vmatprep.subr.bf16.mxu0 0
        %2060 = vmatpush1.bf16.msra.mxu0 0
        %2061 = vmatprep.subr.bf16.mxu0 0
        %2062 = vmatpush1.bf16.msra.mxu0 0
        %2063 = vmatprep.subr.bf16.mxu0 0
        %2064 = vmatpush1.bf16.msra.mxu0 0
        %2065 = vmatprep.subr.bf16.mxu0 0
        %2066 = vmatpush1.bf16.msra.mxu0 0
        %2067 = vmatprep.mubr.bf16.mxu0 0
        %2068 = vmatmul.mubr.bf16.gmra.mrb[0].mxu0 %v2012
        %v2069 = vpop.f32.mrb[0].mxu0
        %v2070 = vadd.f32 0.0, %v2069
        %v2071 = vpop.f32.mrb[0].mxu0
        %v2072 = vpop.f32.mrb[0].mxu0
        %v2073 = vadd.f32 0.0, %v2072
        %v2074 = vpop.f32.mrb[0].mxu0
        %2075 = vmatprep.mubr.bf16.mxu0 0
        %2076 = vmatmul.mubr.bf16.gmra.mrb[0].mxu0 %v2015
        %v2077 = vpop.f32.mrb[0].mxu0
        %v2078 = vadd.f32 0.0, %v2077
        %v2079 = vpop.f32.mrb[0].mxu0
        %v2080 = vpop.f32.mrb[0].mxu0
        %v2081 = vadd.f32 0.0, %v2080
        %v2082 = vpop.f32.mrb[0].mxu0
        %2083 = vmatprep.mubr.bf16.mxu0 0
        %2084 = vmatmul.mubr.bf16.gmra.mrb[0].mxu0 %v2018
        %v2085 = vpop.f32.mrb[0].mxu0
        %v2086 = vadd.f32 0.0, %v2085
        %v2087 = vpop.f32.mrb[0].mxu0
        %v2088 = vpop.f32.mrb[0].mxu0
        %v2089 = vadd.f32 0.0, %v2088
        %v2090 = vpop.f32.mrb[0].mxu0
        %2091 = vmatprep.mubr.bf16.mxu0 0
        %2092 = vmatmul.mubr.bf16.gmra.mrb[0].mxu0 %v2021
        %v2093 = vpop.f32.mrb[0].mxu0
        %v2094 = vadd.f32 0.0, %v2093
        %v2095 = vpop.f32.mrb[0].mxu0
        %v2096 = vpop.f32.mrb[0].mxu0
        %v2097 = vadd.f32 0.0, %v2096
        %v2098 = vpop.f32.mrb[0].mxu0
        %2099 = vmatprep.mubr.bf16.mxu0 0
        %2100 = vmatmul.mubr.bf16.gmra.mrb[0].mxu0 %v2024
        %v2101 = vpop.f32.mrb[0].mxu0
        %v2102 = vadd.f32 0.0, %v2101
        %v2103 = vpop.f32.mrb[0].mxu0
        %v2104 = vpop.f32.mrb[0].mxu0
        %v2105 = vadd.f32 0.0, %v2104
        %v2106 = vpop.f32.mrb[0].mxu0
        %2107 = vmatprep.mubr.bf16.mxu0 0
        %2108 = vmatmul.mubr.bf16.gmra.mrb[0].mxu0 %v2027
        %v2109 = vpop.f32.mrb[0].mxu0
        %v2110 = vadd.f32 0.0, %v2109
        %v2111 = vpop.f32.mrb[0].mxu0
        %v2112 = vpop.f32.mrb[0].mxu0
        %v2113 = vadd.f32 0.0, %v2112
        %v2114 = vpop.f32.mrb[0].mxu0
        %2115 = vmatprep.mubr.bf16.mxu0 0
        %2116 = vmatmul.mubr.bf16.gmra.mrb[0].mxu0 %v2030
        %v2117 = vpop.f32.mrb[0].mxu0
        %v2118 = vadd.f32 0.0, %v2117
        %v2119 = vpop.f32.mrb[0].mxu0
        %v2120 = vpop.f32.mrb[0].mxu0
        %v2121 = vadd.f32 0.0, %v2120
        %v2122 = vpop.f32.mrb[0].mxu0
        %2123 = vmatprep.mubr.bf16.mxu0 0
        %2124 = vmatmul.mubr.bf16.gmra.mrb[0].mxu0 %v2033
        %v2125 = vpop.f32.mrb[0].mxu0
        %v2126 = vadd.f32 0.0, %v2125
        %v2127 = vpop.f32.mrb[0].mxu0
        %v2128 = vpop.f32.mrb[0].mxu0
        %v2129 = vadd.f32 0.0, %v2128
        %v2130 = vpop.f32.mrb[0].mxu0
        %2131 = vdwg.mxu0
        %v2132 = vadd.f32 %v1903, %v2070
        %v2133 = vadd.f32 %v1904, %v2073
        %v2134 = vadd.f32 %v1905, %v2078
        %v2135 = vadd.f32 %v1906, %v2081
        %v2136 = vadd.f32 %v1907, %v2086
        %v2137 = vadd.f32 %v1908, %v2089
        %v2138 = vadd.f32 %v1909, %v2094
        %v2139 = vadd.f32 %v1910, %v2097
        %v2140 = vadd.f32 %v1911, %v2102
        %v2141 = vadd.f32 %v1912, %v2105
        %v2142 = vadd.f32 %v1913, %v2110
        %v2143 = vadd.f32 %v1914, %v2113
        %v2144 = vadd.f32 %v1915, %v2118
        %v2145 = vadd.f32 %v1916, %v2121
        %v2146 = vadd.f32 %v1917, %v2126
        %v2147 = vadd.f32 %v1918, %v2129
        %vm2148 = vsmask.f32 256
        %vm2149 = vsmask.f32 4368
        %vm2150 = vmor %vm2148, %vm2149
        %v2151 = vrot.slane %v522, 7
        %v2152 = vrot.slane %v2151, 4
        %v2153 = vrot.slane %v535, 7
        %v2154 = vor.u32 %v2153, %v531
        %v2155 = vsel %vm2150, %v2152, %v2154
        %v2156 = vrot.slane %v2153, 4
        %v2157 = vrot.slane %v1132, 7
        %v2158 = vor.u32 %v2157, %v541
        %v2159 = vsel %vm2150, %v2156, %v2158
        %v2160 = vrot.slane %v546, 7
        %v2161 = vrot.slane %v2160, 4
        %v2162 = vrot.slane %v559, 7
        %v2163 = vor.u32 %v2162, %v555
        %v2164 = vsel %vm2150, %v2161, %v2163
        %v2165 = vrot.slane %v2162, 4
        %v2166 = vrot.slane %v1147, 7
        %v2167 = vor.u32 %v2166, %v565
        %v2168 = vsel %vm2150, %v2165, %v2167
        %v2169 = vrot.slane %v570, 7
        %v2170 = vrot.slane %v2169, 4
        %v2171 = vrot.slane %v583, 7
        %v2172 = vor.u32 %v2171, %v579
        %v2173 = vsel %vm2150, %v2170, %v2172
        %v2174 = vrot.slane %v2171, 4
        %v2175 = vrot.slane %v1162, 7
        %v2176 = vor.u32 %v2175, %v589
        %v2177 = vsel %vm2150, %v2174, %v2176
        %v2178 = vrot.slane %v594, 7
        %v2179 = vrot.slane %v2178, 4
        %v2180 = vrot.slane %v607, 7
        %v2181 = vor.u32 %v2180, %v603
        %v2182 = vsel %vm2150, %v2179, %v2181
        %v2183 = vrot.slane %v2180, 4
        %v2184 = vrot.slane %v1177, 7
        %v2185 = vor.u32 %v2184, %v613
        %v2186 = vsel %vm2150, %v2183, %v2185
        %v2187 = vrot.slane %v618, 7
        %v2188 = vrot.slane %v2187, 4
        %v2189 = vrot.slane %v631, 7
        %v2190 = vor.u32 %v2189, %v627
        %v2191 = vsel %vm2150, %v2188, %v2190
        %v2192 = vrot.slane %v2189, 4
        %v2193 = vrot.slane %v1192, 7
        %v2194 = vor.u32 %v2193, %v637
        %v2195 = vsel %vm2150, %v2192, %v2194
        %v2196 = vrot.slane %v642, 7
        %v2197 = vrot.slane %v2196, 4
        %v2198 = vrot.slane %v655, 7
        %v2199 = vor.u32 %v2198, %v651
        %v2200 = vsel %vm2150, %v2197, %v2199
        %v2201 = vrot.slane %v2198, 4
        %v2202 = vrot.slane %v1207, 7
        %v2203 = vor.u32 %v2202, %v661
        %v2204 = vsel %vm2150, %v2201, %v2203
        %v2205 = vrot.slane %v666, 7
        %v2206 = vrot.slane %v2205, 4
        %v2207 = vrot.slane %v679, 7
        %v2208 = vor.u32 %v2207, %v675
        %v2209 = vsel %vm2150, %v2206, %v2208
        %v2210 = vrot.slane %v2207, 4
        %v2211 = vrot.slane %v1222, 7
        %v2212 = vor.u32 %v2211, %v685
        %v2213 = vsel %vm2150, %v2210, %v2212
        %v2214 = vrot.slane %v690, 7
        %v2215 = vrot.slane %v2214, 4
        %v2216 = vrot.slane %v703, 7
        %v2217 = vor.u32 %v2216, %v699
        %v2218 = vsel %vm2150, %v2215, %v2217
        %v2219 = vrot.slane %v2216, 4
        %v2220 = vrot.slane %v1237, 7
        %v2221 = vor.u32 %v2220, %v709
        %v2222 = vsel %vm2150, %v2219, %v2221
        %s2223 = scalar_lea.vmem %s217, 56 [#allocation3]
        %v2224 = vld [vmem:[%s2223] sm:$0xf]
        %v2225 = vld [vmem:[%s2223 + $0x4] sm:$0xf]
        %v2226 = vunpack.c.l.b16 %v2155
        %v2227 = vunpack.c.l.b16 %v2159
        %v2228 = vunpack.c.l.b16 %v2164
        %v2229 = vunpack.c.l.b16 %v2168
        %v2230 = vunpack.c.l.b16 %v2173
        %v2231 = vunpack.c.l.b16 %v2177
        %v2232 = vunpack.c.l.b16 %v2182
        %v2233 = vunpack.c.l.b16 %v2186
        %v2234 = vunpack.c.l.b16 %v2191
        %v2235 = vunpack.c.l.b16 %v2195
        %v2236 = vunpack.c.l.b16 %v2200
        %v2237 = vunpack.c.l.b16 %v2204
        %v2238 = vunpack.c.l.b16 %v2209
        %v2239 = vunpack.c.l.b16 %v2213
        %v2240 = vunpack.c.l.b16 %v2218
        %v2241 = vunpack.c.l.b16 %v2222
        %v2242 = vpack.c.b16 %v2227, %v2226
        %v2243 = vpack.c.b16 %v2229, %v2228
        %v2244 = vpack.c.b16 %v2231, %v2230
        %v2245 = vpack.c.b16 %v2233, %v2232
        %v2246 = vpack.c.b16 %v2235, %v2234
        %v2247 = vpack.c.b16 %v2237, %v2236
        %v2248 = vpack.c.b16 %v2239, %v2238
        %v2249 = vpack.c.b16 %v2241, %v2240
        %v2252 = vunpack.c.l.b16 %v2224
        %v2253 = vunpack.c.l.b16 %v2225
        %v2254 = vpack.c.b16 %v2253, %v2252
        %v2257 = vsel %vm380, %v2242, 0
        %v2260 = vsel %vm380, %v2243, 0
        %v2263 = vsel %vm380, %v2244, 0
        %v2266 = vsel %vm380, %v2245, 0
        %v2269 = vsel %vm380, %v2246, 0
        %v2272 = vsel %vm380, %v2247, 0
        %v2275 = vsel %vm380, %v2248, 0
        %v2278 = vsel %vm380, %v2249, 0
        %2280 = vmatprep.subr.bf16.mxu0 0
        %2281 = vmatpush1.bf16.msra.mxu0 %v2254
        %2282 = vmatprep.subr.bf16.mxu0 0
        %2283 = vmatpush1.bf16.msra.mxu0 0
        %2284 = vmatprep.subr.bf16.mxu0 0
        %2285 = vmatpush1.bf16.msra.mxu0 0
        %2286 = vmatprep.subr.bf16.mxu0 0
        %2287 = vmatpush1.bf16.msra.mxu0 0
        %2288 = vmatprep.subr.bf16.mxu0 0
        %2289 = vmatpush1.bf16.msra.mxu0 0
        %2290 = vmatprep.subr.bf16.mxu0 0
        %2291 = vmatpush1.bf16.msra.mxu0 0
        %2292 = vmatprep.subr.bf16.mxu0 0
        %2293 = vmatpush1.bf16.msra.mxu0 0
        %2294 = vmatprep.subr.bf16.mxu0 0
        %2295 = vmatpush1.bf16.msra.mxu0 0
        %2296 = vmatprep.subr.bf16.mxu0 0
        %2297 = vmatpush1.bf16.msra.mxu0 0
        %2298 = vmatprep.subr.bf16.mxu0 0
        %2299 = vmatpush1.bf16.msra.mxu0 0
        %2300 = vmatprep.subr.bf16.mxu0 0
        %2301 = vmatpush1.bf16.msra.mxu0 0
        %2302 = vmatprep.subr.bf16.mxu0 0
        %2303 = vmatpush1.bf16.msra.mxu0 0
        %2304 = vmatprep.subr.bf16.mxu0 0
        %2305 = vmatpush1.bf16.msra.mxu0 0
        %2306 = vmatprep.subr.bf16.mxu0 0
        %2307 = vmatpush1.bf16.msra.mxu0 0
        %2308 = vmatprep.subr.bf16.mxu0 0
        %2309 = vmatpush1.bf16.msra.mxu0 0
        %2310 = vmatprep.subr.bf16.mxu0 0
        %2311 = vmatpush1.bf16.msra.mxu0 0
        %2312 = vmatprep.mubr.bf16.mxu0 0
        %2313 = vmatmul.mubr.bf16.gmra.mrb[0].mxu0 %v2257
        %v2314 = vpop.f32.mrb[0].mxu0
        %v2315 = vadd.f32 0.0, %v2314
        %v2316 = vpop.f32.mrb[0].mxu0
        %v2317 = vpop.f32.mrb[0].mxu0
        %v2318 = vadd.f32 0.0, %v2317
        %v2319 = vpop.f32.mrb[0].mxu0
        %2320 = vmatprep.mubr.bf16.mxu0 0
        %2321 = vmatmul.mubr.bf16.gmra.mrb[0].mxu0 %v2260
        %v2322 = vpop.f32.mrb[0].mxu0
        %v2323 = vadd.f32 0.0, %v2322
        %v2324 = vpop.f32.mrb[0].mxu0
        %v2325 = vpop.f32.mrb[0].mxu0
        %v2326 = vadd.f32 0.0, %v2325
        %v2327 = vpop.f32.mrb[0].mxu0
        %2328 = vmatprep.mubr.bf16.mxu0 0
        %2329 = vmatmul.mubr.bf16.gmra.mrb[0].mxu0 %v2263
        %v2330 = vpop.f32.mrb[0].mxu0
        %v2331 = vadd.f32 0.0, %v2330
        %v2332 = vpop.f32.mrb[0].mxu0
        %v2333 = vpop.f32.mrb[0].mxu0
        %v2334 = vadd.f32 0.0, %v2333
        %v2335 = vpop.f32.mrb[0].mxu0
        %2336 = vmatprep.mubr.bf16.mxu0 0
        %2337 = vmatmul.mubr.bf16.gmra.mrb[0].mxu0 %v2266
        %v2338 = vpop.f32.mrb[0].mxu0
        %v2339 = vadd.f32 0.0, %v2338
        %v2340 = vpop.f32.mrb[0].mxu0
        %v2341 = vpop.f32.mrb[0].mxu0
        %v2342 = vadd.f32 0.0, %v2341
        %v2343 = vpop.f32.mrb[0].mxu0
        %2344 = vmatprep.mubr.bf16.mxu0 0
        %2345 = vmatmul.mubr.bf16.gmra.mrb[0].mxu0 %v2269
        %v2346 = vpop.f32.mrb[0].mxu0
        %v2347 = vadd.f32 0.0, %v2346
        %v2348 = vpop.f32.mrb[0].mxu0
        %v2349 = vpop.f32.mrb[0].mxu0
        %v2350 = vadd.f32 0.0, %v2349
        %v2351 = vpop.f32.mrb[0].mxu0
        %2352 = vmatprep.mubr.bf16.mxu0 0
        %2353 = vmatmul.mubr.bf16.gmra.mrb[0].mxu0 %v2272
        %v2354 = vpop.f32.mrb[0].mxu0
        %v2355 = vadd.f32 0.0, %v2354
        %v2356 = vpop.f32.mrb[0].mxu0
        %v2357 = vpop.f32.mrb[0].mxu0
        %v2358 = vadd.f32 0.0, %v2357
        %v2359 = vpop.f32.mrb[0].mxu0
        %2360 = vmatprep.mubr.bf16.mxu0 0
        %2361 = vmatmul.mubr.bf16.gmra.mrb[0].mxu0 %v2275
        %v2362 = vpop.f32.mrb[0].mxu0
        %v2363 = vadd.f32 0.0, %v2362
        %v2364 = vpop.f32.mrb[0].mxu0
        %v2365 = vpop.f32.mrb[0].mxu0
        %v2366 = vadd.f32 0.0, %v2365
        %v2367 = vpop.f32.mrb[0].mxu0
        %2368 = vmatprep.mubr.bf16.mxu0 0
        %2369 = vmatmul.mubr.bf16.gmra.mrb[0].mxu0 %v2278
        %v2370 = vpop.f32.mrb[0].mxu0
        %v2371 = vadd.f32 0.0, %v2370
        %v2372 = vpop.f32.mrb[0].mxu0
        %v2373 = vpop.f32.mrb[0].mxu0
        %v2374 = vadd.f32 0.0, %v2373
        %v2375 = vpop.f32.mrb[0].mxu0
        %2376 = vdwg.mxu0
        %v2377 = vadd.f32 %v2132, %v2315
        %v2378 = vadd.f32 %v2133, %v2318
        %v2379 = vadd.f32 %v2134, %v2323
        %v2380 = vadd.f32 %v2135, %v2326
        %v2381 = vadd.f32 %v2136, %v2331
        %v2382 = vadd.f32 %v2137, %v2334
        %v2383 = vadd.f32 %v2138, %v2339
        %v2384 = vadd.f32 %v2139, %v2342
        %v2385 = vadd.f32 %v2140, %v2347
        %v2386 = vadd.f32 %v2141, %v2350
        %v2387 = vadd.f32 %v2142, %v2355
        %v2388 = vadd.f32 %v2143, %v2358
        %v2389 = vadd.f32 %v2144, %v2363
        %v2390 = vadd.f32 %v2145, %v2366
        %v2391 = vadd.f32 %v2146, %v2371
        %v2392 = vadd.f32 %v2147, %v2374
        %s2393 = scalar_lea.vmem %s217, 64 [#allocation3]
        %v2394 = vld [vmem:[%s2393] sm:$0xf]
        %v2395 = vld [vmem:[%s2393 + $0x4] sm:$0xf]
        %v2396 = vunpack.c.l.b16 %v286
        %v2397 = vunpack.c.l.b16 %v290
        %v2398 = vunpack.c.l.b16 %v294
        %v2399 = vunpack.c.l.b16 %v298
        %v2400 = vunpack.c.l.b16 %v302
        %v2401 = vunpack.c.l.b16 %v306
        %v2402 = vunpack.c.l.b16 %v310
        %v2403 = vunpack.c.l.b16 %v314
        %v2404 = vpack.c.b16 %v2396, %v351
        %v2405 = vpack.c.b16 %v2397, %v353
        %v2406 = vpack.c.b16 %v2398, %v355
        %v2407 = vpack.c.b16 %v2399, %v357
        %v2408 = vpack.c.b16 %v2400, %v359
        %v2409 = vpack.c.b16 %v2401, %v361
        %v2410 = vpack.c.b16 %v2402, %v363
        %v2411 = vpack.c.b16 %v2403, %v365
        %v2414 = vunpack.c.l.b16 %v2394
        %v2415 = vunpack.c.l.b16 %v2395
        %v2416 = vpack.c.b16 %v2415, %v2414
        %v2419 = vsel %vm380, %v2404, 0
        %v2422 = vsel %vm380, %v2405, 0
        %v2425 = vsel %vm380, %v2406, 0
        %v2428 = vsel %vm380, %v2407, 0
        %v2431 = vsel %vm380, %v2408, 0
        %v2434 = vsel %vm380, %v2409, 0
        %v2437 = vsel %vm380, %v2410, 0
        %v2440 = vsel %vm380, %v2411, 0
        %2442 = vmatprep.subr.bf16.mxu0 0
        %2443 = vmatpush1.bf16.msra.mxu0 %v2416
        %2444 = vmatprep.subr.bf16.mxu0 0
        %2445 = vmatpush1.bf16.msra.mxu0 0
        %2446 = vmatprep.subr.bf16.mxu0 0
        %2447 = vmatpush1.bf16.msra.mxu0 0
        %2448 = vmatprep.subr.bf16.mxu0 0
        %2449 = vmatpush1.bf16.msra.mxu0 0
        %2450 = vmatprep.subr.bf16.mxu0 0
        %2451 = vmatpush1.bf16.msra.mxu0 0
        %2452 = vmatprep.subr.bf16.mxu0 0
        %2453 = vmatpush1.bf16.msra.mxu0 0
        %2454 = vmatprep.subr.bf16.mxu0 0
        %2455 = vmatpush1.bf16.msra.mxu0 0
        %2456 = vmatprep.subr.bf16.mxu0 0
        %2457 = vmatpush1.bf16.msra.mxu0 0
        %2458 = vmatprep.subr.bf16.mxu0 0
        %2459 = vmatpush1.bf16.msra.mxu0 0
        %2460 = vmatprep.subr.bf16.mxu0 0
        %2461 = vmatpush1.bf16.msra.mxu0 0
        %2462 = vmatprep.subr.bf16.mxu0 0
        %2463 = vmatpush1.bf16.msra.mxu0 0
        %2464 = vmatprep.subr.bf16.mxu0 0
        %2465 = vmatpush1.bf16.msra.mxu0 0
        %2466 = vmatprep.subr.bf16.mxu0 0
        %2467 = vmatpush1.bf16.msra.mxu0 0
        %2468 = vmatprep.subr.bf16.mxu0 0
        %2469 = vmatpush1.bf16.msra.mxu0 0
        %2470 = vmatprep.subr.bf16.mxu0 0
        %2471 = vmatpush1.bf16.msra.mxu0 0
        %2472 = vmatprep.subr.bf16.mxu0 0
        %2473 = vmatpush1.bf16.msra.mxu0 0
        %2474 = vmatprep.mubr.bf16.mxu0 0
        %2475 = vmatmul.mubr.bf16.gmra.mrb[0].mxu0 %v2419
        %v2476 = vpop.f32.mrb[0].mxu0
        %v2477 = vadd.f32 0.0, %v2476
        %v2478 = vpop.f32.mrb[0].mxu0
        %v2479 = vpop.f32.mrb[0].mxu0
        %v2480 = vadd.f32 0.0, %v2479
        %v2481 = vpop.f32.mrb[0].mxu0
        %2482 = vmatprep.mubr.bf16.mxu0 0
        %2483 = vmatmul.mubr.bf16.gmra.mrb[0].mxu0 %v2422
        %v2484 = vpop.f32.mrb[0].mxu0
        %v2485 = vadd.f32 0.0, %v2484
        %v2486 = vpop.f32.mrb[0].mxu0
        %v2487 = vpop.f32.mrb[0].mxu0
        %v2488 = vadd.f32 0.0, %v2487
        %v2489 = vpop.f32.mrb[0].mxu0
        %2490 = vmatprep.mubr.bf16.mxu0 0
        %2491 = vmatmul.mubr.bf16.gmra.mrb[0].mxu0 %v2425
        %v2492 = vpop.f32.mrb[0].mxu0
        %v2493 = vadd.f32 0.0, %v2492
        %v2494 = vpop.f32.mrb[0].mxu0
        %v2495 = vpop.f32.mrb[0].mxu0
        %v2496 = vadd.f32 0.0, %v2495
        %v2497 = vpop.f32.mrb[0].mxu0
        %2498 = vmatprep.mubr.bf16.mxu0 0
        %2499 = vmatmul.mubr.bf16.gmra.mrb[0].mxu0 %v2428
        %v2500 = vpop.f32.mrb[0].mxu0
        %v2501 = vadd.f32 0.0, %v2500
        %v2502 = vpop.f32.mrb[0].mxu0
        %v2503 = vpop.f32.mrb[0].mxu0
        %v2504 = vadd.f32 0.0, %v2503
        %v2505 = vpop.f32.mrb[0].mxu0
        %2506 = vmatprep.mubr.bf16.mxu0 0
        %2507 = vmatmul.mubr.bf16.gmra.mrb[0].mxu0 %v2431
        %v2508 = vpop.f32.mrb[0].mxu0
        %v2509 = vadd.f32 0.0, %v2508
        %v2510 = vpop.f32.mrb[0].mxu0
        %v2511 = vpop.f32.mrb[0].mxu0
        %v2512 = vadd.f32 0.0, %v2511
        %v2513 = vpop.f32.mrb[0].mxu0
        %2514 = vmatprep.mubr.bf16.mxu0 0
        %2515 = vmatmul.mubr.bf16.gmra.mrb[0].mxu0 %v2434
        %v2516 = vpop.f32.mrb[0].mxu0
        %v2517 = vadd.f32 0.0, %v2516
        %v2518 = vpop.f32.mrb[0].mxu0
        %v2519 = vpop.f32.mrb[0].mxu0
        %v2520 = vadd.f32 0.0, %v2519
        %v2521 = vpop.f32.mrb[0].mxu0
        %2522 = vmatprep.mubr.bf16.mxu0 0
        %2523 = vmatmul.mubr.bf16.gmra.mrb[0].mxu0 %v2437
        %v2524 = vpop.f32.mrb[0].mxu0
        %v2525 = vadd.f32 0.0, %v2524
        %v2526 = vpop.f32.mrb[0].mxu0
        %v2527 = vpop.f32.mrb[0].mxu0
        %v2528 = vadd.f32 0.0, %v2527
        %v2529 = vpop.f32.mrb[0].mxu0
        %2530 = vmatprep.mubr.bf16.mxu0 0
        %2531 = vmatmul.mubr.bf16.gmra.mrb[0].mxu0 %v2440
        %v2532 = vpop.f32.mrb[0].mxu0
        %v2533 = vadd.f32 0.0, %v2532
        %v2534 = vpop.f32.mrb[0].mxu0
        %v2535 = vpop.f32.mrb[0].mxu0
        %v2536 = vadd.f32 0.0, %v2535
        %v2537 = vpop.f32.mrb[0].mxu0
        %2538 = vdwg.mxu0
        %v2539 = vadd.f32 %v2377, %v2477
        %v2540 = vadd.f32 %v2378, %v2480
        %v2541 = vadd.f32 %v2379, %v2485
        %v2542 = vadd.f32 %v2380, %v2488
        %v2543 = vadd.f32 %v2381, %v2493
        %v2544 = vadd.f32 %v2382, %v2496
        %v2545 = vadd.f32 %v2383, %v2501
        %v2546 = vadd.f32 %v2384, %v2504
        %v2547 = vadd.f32 %v2385, %v2509
        %v2548 = vadd.f32 %v2386, %v2512
        %v2549 = vadd.f32 %v2387, %v2517
        %v2550 = vadd.f32 %v2388, %v2520
        %v2551 = vadd.f32 %v2389, %v2525
        %v2552 = vadd.f32 %v2390, %v2528
        %v2553 = vadd.f32 %v2391, %v2533
        %v2554 = vadd.f32 %v2392, %v2536
        %v2555 = vrot.slane %v1132, 4
        %v2556 = vor.u32 %v2555, %v543
        %v2557 = vrot.slane %v2556, 4
        %v2559 = vshll.u32 %v287, 16
        %v2561 = vrot.slane %v2559, 5
        %v2562 = vsel %vm520, %v2557, %v2561
        %v2563 = vrot.slane %v1147, 4
        %v2564 = vor.u32 %v2563, %v567
        %v2565 = vrot.slane %v2564, 4
        %v2567 = vshll.u32 %v291, 16
        %v2569 = vrot.slane %v2567, 5
        %v2570 = vsel %vm520, %v2565, %v2569
        %v2571 = vrot.slane %v1162, 4
        %v2572 = vor.u32 %v2571, %v591
        %v2573 = vrot.slane %v2572, 4
        %v2575 = vshll.u32 %v295, 16
        %v2577 = vrot.slane %v2575, 5
        %v2578 = vsel %vm520, %v2573, %v2577
        %v2579 = vrot.slane %v1177, 4
        %v2580 = vor.u32 %v2579, %v615
        %v2581 = vrot.slane %v2580, 4
        %v2583 = vshll.u32 %v299, 16
        %v2585 = vrot.slane %v2583, 5
        %v2586 = vsel %vm520, %v2581, %v2585
        %v2587 = vrot.slane %v1192, 4
        %v2588 = vor.u32 %v2587, %v639
        %v2589 = vrot.slane %v2588, 4
        %v2591 = vshll.u32 %v303, 16
        %v2593 = vrot.slane %v2591, 5
        %v2594 = vsel %vm520, %v2589, %v2593
        %v2595 = vrot.slane %v1207, 4
        %v2596 = vor.u32 %v2595, %v663
        %v2597 = vrot.slane %v2596, 4
        %v2599 = vshll.u32 %v307, 16
        %v2601 = vrot.slane %v2599, 5
        %v2602 = vsel %vm520, %v2597, %v2601
        %v2603 = vrot.slane %v1222, 4
        %v2604 = vor.u32 %v2603, %v687
        %v2605 = vrot.slane %v2604, 4
        %v2607 = vshll.u32 %v311, 16
        %v2609 = vrot.slane %v2607, 5
        %v2610 = vsel %vm520, %v2605, %v2609
        %v2611 = vrot.slane %v1237, 4
        %v2612 = vor.u32 %v2611, %v711
        %v2613 = vrot.slane %v2612, 4
        %v2615 = vshll.u32 %v315, 16
        %v2617 = vrot.slane %v2615, 5
        %v2618 = vsel %vm520, %v2613, %v2617
        %s2619 = scalar_lea.vmem %s217, 72 [#allocation3]
        %v2620 = vld [vmem:[%s2619] sm:$0xf]
        %v2621 = vld [vmem:[%s2619 + $0x4] sm:$0xf]
        %v2622 = vunpack.c.l.b16 %v2562
        %v2623 = vunpack.c.l.b16 %v2570
        %v2624 = vunpack.c.l.b16 %v2578
        %v2625 = vunpack.c.l.b16 %v2586
        %v2626 = vunpack.c.l.b16 %v2594
        %v2627 = vunpack.c.l.b16 %v2602
        %v2628 = vunpack.c.l.b16 %v2610
        %v2629 = vunpack.c.l.b16 %v2618
        %v2630 = vpack.c.b16 %v2622, %v717
        %v2631 = vpack.c.b16 %v2623, %v719
        %v2632 = vpack.c.b16 %v2624, %v721
        %v2633 = vpack.c.b16 %v2625, %v723
        %v2634 = vpack.c.b16 %v2626, %v725
        %v2635 = vpack.c.b16 %v2627, %v727
        %v2636 = vpack.c.b16 %v2628, %v729
        %v2637 = vpack.c.b16 %v2629, %v731
        %v2640 = vunpack.c.l.b16 %v2620
        %v2641 = vunpack.c.l.b16 %v2621
        %v2642 = vpack.c.b16 %v2641, %v2640
        %v2645 = vsel %vm380, %v2630, 0
        %v2648 = vsel %vm380, %v2631, 0
        %v2651 = vsel %vm380, %v2632, 0
        %v2654 = vsel %vm380, %v2633, 0
        %v2657 = vsel %vm380, %v2634, 0
        %v2660 = vsel %vm380, %v2635, 0
        %v2663 = vsel %vm380, %v2636, 0
        %v2666 = vsel %vm380, %v2637, 0
        %2668 = vmatprep.subr.bf16.mxu0 0
        %2669 = vmatpush1.bf16.msra.mxu0 %v2642
        %2670 = vmatprep.subr.bf16.mxu0 0
        %2671 = vmatpush1.bf16.msra.mxu0 0
        %2672 = vmatprep.subr.bf16.mxu0 0
        %2673 = vmatpush1.bf16.msra.mxu0 0
        %2674 = vmatprep.subr.bf16.mxu0 0
        %2675 = vmatpush1.bf16.msra.mxu0 0
        %2676 = vmatprep.subr.bf16.mxu0 0
        %2677 = vmatpush1.bf16.msra.mxu0 0
        %2678 = vmatprep.subr.bf16.mxu0 0
        %2679 = vmatpush1.bf16.msra.mxu0 0
        %2680 = vmatprep.subr.bf16.mxu0 0
        %2681 = vmatpush1.bf16.msra.mxu0 0
        %2682 = vmatprep.subr.bf16.mxu0 0
        %2683 = vmatpush1.bf16.msra.mxu0 0
        %2684 = vmatprep.subr.bf16.mxu0 0
        %2685 = vmatpush1.bf16.msra.mxu0 0
        %2686 = vmatprep.subr.bf16.mxu0 0
        %2687 = vmatpush1.bf16.msra.mxu0 0
        %2688 = vmatprep.subr.bf16.mxu0 0
        %2689 = vmatpush1.bf16.msra.mxu0 0
        %2690 = vmatprep.subr.bf16.mxu0 0
        %2691 = vmatpush1.bf16.msra.mxu0 0
        %2692 = vmatprep.subr.bf16.mxu0 0
        %2693 = vmatpush1.bf16.msra.mxu0 0
        %2694 = vmatprep.subr.bf16.mxu0 0
        %2695 = vmatpush1.bf16.msra.mxu0 0
        %2696 = vmatprep.subr.bf16.mxu0 0
        %2697 = vmatpush1.bf16.msra.mxu0 0
        %2698 = vmatprep.subr.bf16.mxu0 0
        %2699 = vmatpush1.bf16.msra.mxu0 0
        %2700 = vmatprep.mubr.bf16.mxu0 0
        %2701 = vmatmul.mubr.bf16.gmra.mrb[0].mxu0 %v2645
        %v2702 = vpop.f32.mrb[0].mxu0
        %v2703 = vadd.f32 0.0, %v2702
        %v2704 = vpop.f32.mrb[0].mxu0
        %v2705 = vpop.f32.mrb[0].mxu0
        %v2706 = vadd.f32 0.0, %v2705
        %v2707 = vpop.f32.mrb[0].mxu0
        %2708 = vmatprep.mubr.bf16.mxu0 0
        %2709 = vmatmul.mubr.bf16.gmra.mrb[0].mxu0 %v2648
        %v2710 = vpop.f32.mrb[0].mxu0
        %v2711 = vadd.f32 0.0, %v2710
        %v2712 = vpop.f32.mrb[0].mxu0
        %v2713 = vpop.f32.mrb[0].mxu0
        %v2714 = vadd.f32 0.0, %v2713
        %v2715 = vpop.f32.mrb[0].mxu0
        %2716 = vmatprep.mubr.bf16.mxu0 0
        %2717 = vmatmul.mubr.bf16.gmra.mrb[0].mxu0 %v2651
        %v2718 = vpop.f32.mrb[0].mxu0
        %v2719 = vadd.f32 0.0, %v2718
        %v2720 = vpop.f32.mrb[0].mxu0
        %v2721 = vpop.f32.mrb[0].mxu0
        %v2722 = vadd.f32 0.0, %v2721
        %v2723 = vpop.f32.mrb[0].mxu0
        %2724 = vmatprep.mubr.bf16.mxu0 0
        %2725 = vmatmul.mubr.bf16.gmra.mrb[0].mxu0 %v2654
        %v2726 = vpop.f32.mrb[0].mxu0
        %v2727 = vadd.f32 0.0, %v2726
        %v2728 = vpop.f32.mrb[0].mxu0
        %v2729 = vpop.f32.mrb[0].mxu0
        %v2730 = vadd.f32 0.0, %v2729
        %v2731 = vpop.f32.mrb[0].mxu0
        %2732 = vmatprep.mubr.bf16.mxu0 0
        %2733 = vmatmul.mubr.bf16.gmra.mrb[0].mxu0 %v2657
        %v2734 = vpop.f32.mrb[0].mxu0
        %v2735 = vadd.f32 0.0, %v2734
        %v2736 = vpop.f32.mrb[0].mxu0
        %v2737 = vpop.f32.mrb[0].mxu0
        %v2738 = vadd.f32 0.0, %v2737
        %v2739 = vpop.f32.mrb[0].mxu0
        %2740 = vmatprep.mubr.bf16.mxu0 0
        %2741 = vmatmul.mubr.bf16.gmra.mrb[0].mxu0 %v2660
        %v2742 = vpop.f32.mrb[0].mxu0
        %v2743 = vadd.f32 0.0, %v2742
        %v2744 = vpop.f32.mrb[0].mxu0
        %v2745 = vpop.f32.mrb[0].mxu0
        %v2746 = vadd.f32 0.0, %v2745
        %v2747 = vpop.f32.mrb[0].mxu0
        %2748 = vmatprep.mubr.bf16.mxu0 0
        %2749 = vmatmul.mubr.bf16.gmra.mrb[0].mxu0 %v2663
        %v2750 = vpop.f32.mrb[0].mxu0
        %v2751 = vadd.f32 0.0, %v2750
        %v2752 = vpop.f32.mrb[0].mxu0
        %v2753 = vpop.f32.mrb[0].mxu0
        %v2754 = vadd.f32 0.0, %v2753
        %v2755 = vpop.f32.mrb[0].mxu0
        %2756 = vmatprep.mubr.bf16.mxu0 0
        %2757 = vmatmul.mubr.bf16.gmra.mrb[0].mxu0 %v2666
        %v2758 = vpop.f32.mrb[0].mxu0
        %v2759 = vadd.f32 0.0, %v2758
        %v2760 = vpop.f32.mrb[0].mxu0
        %v2761 = vpop.f32.mrb[0].mxu0
        %v2762 = vadd.f32 0.0, %v2761
        %v2763 = vpop.f32.mrb[0].mxu0
        %2764 = vdwg.mxu0
        %v2765 = vadd.f32 %v2539, %v2703
        %v2766 = vadd.f32 %v2540, %v2706
        %v2767 = vadd.f32 %v2541, %v2711
        %v2768 = vadd.f32 %v2542, %v2714
        %v2769 = vadd.f32 %v2543, %v2719
        %v2770 = vadd.f32 %v2544, %v2722
        %v2771 = vadd.f32 %v2545, %v2727
        %v2772 = vadd.f32 %v2546, %v2730
        %v2773 = vadd.f32 %v2547, %v2735
        %v2774 = vadd.f32 %v2548, %v2738
        %v2775 = vadd.f32 %v2549, %v2743
        %v2776 = vadd.f32 %v2550, %v2746
        %v2777 = vadd.f32 %v2551, %v2751
        %v2778 = vadd.f32 %v2552, %v2754
        %v2779 = vadd.f32 %v2553, %v2759
        %v2780 = vadd.f32 %v2554, %v2762
        %v2789 = vrot.slane %v899, 4
        %v2790 = vrot.slane %v287, 5
        %v2791 = vsel %vm893, %v2789, %v2790
        %v2792 = vrot.slane %v906, 4
        %v2793 = vrot.slane %v291, 5
        %v2794 = vsel %vm893, %v2792, %v2793
        %v2795 = vrot.slane %v913, 4
        %v2796 = vrot.slane %v295, 5
        %v2797 = vsel %vm893, %v2795, %v2796
        %v2798 = vrot.slane %v920, 4
        %v2799 = vrot.slane %v299, 5
        %v2800 = vsel %vm893, %v2798, %v2799
        %v2801 = vrot.slane %v927, 4
        %v2802 = vrot.slane %v303, 5
        %v2803 = vsel %vm893, %v2801, %v2802
        %v2804 = vrot.slane %v934, 4
        %v2805 = vrot.slane %v307, 5
        %v2806 = vsel %vm893, %v2804, %v2805
        %v2807 = vrot.slane %v941, 4
        %v2808 = vrot.slane %v311, 5
        %v2809 = vsel %vm893, %v2807, %v2808
        %v2810 = vrot.slane %v948, 4
        %v2811 = vrot.slane %v315, 5
        %v2812 = vsel %vm893, %v2810, %v2811
        %s2813 = scalar_lea.vmem %s217, 80 [#allocation3]
        %v2814 = vld [vmem:[%s2813] sm:$0xf]
        %v2815 = vld [vmem:[%s2813 + $0x4] sm:$0xf]
        %v2816 = vunpack.c.l.b16 %v2791
        %v2817 = vunpack.c.l.b16 %v2794
        %v2818 = vunpack.c.l.b16 %v2797
        %v2819 = vunpack.c.l.b16 %v2800
        %v2820 = vunpack.c.l.b16 %v2803
        %v2821 = vunpack.c.l.b16 %v2806
        %v2822 = vunpack.c.l.b16 %v2809
        %v2823 = vunpack.c.l.b16 %v2812
        %v2824 = vpack.c.b16 %v2816, %v954
        %v2825 = vpack.c.b16 %v2817, %v956
        %v2826 = vpack.c.b16 %v2818, %v958
        %v2827 = vpack.c.b16 %v2819, %v960
        %v2828 = vpack.c.b16 %v2820, %v962
        %v2829 = vpack.c.b16 %v2821, %v964
        %v2830 = vpack.c.b16 %v2822, %v966
        %v2831 = vpack.c.b16 %v2823, %v968
        %v2834 = vunpack.c.l.b16 %v2814
        %v2835 = vunpack.c.l.b16 %v2815
        %v2836 = vpack.c.b16 %v2835, %v2834
        %v2839 = vsel %vm380, %v2824, 0
        %v2842 = vsel %vm380, %v2825, 0
        %v2845 = vsel %vm380, %v2826, 0
        %v2848 = vsel %vm380, %v2827, 0
        %v2851 = vsel %vm380, %v2828, 0
        %v2854 = vsel %vm380, %v2829, 0
        %v2857 = vsel %vm380, %v2830, 0
        %v2860 = vsel %vm380, %v2831, 0
        %2862 = vmatprep.subr.bf16.mxu0 0
        %2863 = vmatpush1.bf16.msra.mxu0 %v2836
        %2864 = vmatprep.subr.bf16.mxu0 0
        %2865 = vmatpush1.bf16.msra.mxu0 0
        %2866 = vmatprep.subr.bf16.mxu0 0
        %2867 = vmatpush1.bf16.msra.mxu0 0
        %2868 = vmatprep.subr.bf16.mxu0 0
        %2869 = vmatpush1.bf16.msra.mxu0 0
        %2870 = vmatprep.subr.bf16.mxu0 0
        %2871 = vmatpush1.bf16.msra.mxu0 0
        %2872 = vmatprep.subr.bf16.mxu0 0
        %2873 = vmatpush1.bf16.msra.mxu0 0
        %2874 = vmatprep.subr.bf16.mxu0 0
        %2875 = vmatpush1.bf16.msra.mxu0 0
        %2876 = vmatprep.subr.bf16.mxu0 0
        %2877 = vmatpush1.bf16.msra.mxu0 0
        %2878 = vmatprep.subr.bf16.mxu0 0
        %2879 = vmatpush1.bf16.msra.mxu0 0
        %2880 = vmatprep.subr.bf16.mxu0 0
        %2881 = vmatpush1.bf16.msra.mxu0 0
        %2882 = vmatprep.subr.bf16.mxu0 0
        %2883 = vmatpush1.bf16.msra.mxu0 0
        %2884 = vmatprep.subr.bf16.mxu0 0
        %2885 = vmatpush1.bf16.msra.mxu0 0
        %2886 = vmatprep.subr.bf16.mxu0 0
        %2887 = vmatpush1.bf16.msra.mxu0 0
        %2888 = vmatprep.subr.bf16.mxu0 0
        %2889 = vmatpush1.bf16.msra.mxu0 0
        %2890 = vmatprep.subr.bf16.mxu0 0
        %2891 = vmatpush1.bf16.msra.mxu0 0
        %2892 = vmatprep.subr.bf16.mxu0 0
        %2893 = vmatpush1.bf16.msra.mxu0 0
        %2894 = vmatprep.mubr.bf16.mxu0 0
        %2895 = vmatmul.mubr.bf16.gmra.mrb[0].mxu0 %v2839
        %v2896 = vpop.f32.mrb[0].mxu0
        %v2897 = vadd.f32 0.0, %v2896
        %v2898 = vpop.f32.mrb[0].mxu0
        %v2899 = vpop.f32.mrb[0].mxu0
        %v2900 = vadd.f32 0.0, %v2899
        %v2901 = vpop.f32.mrb[0].mxu0
        %2902 = vmatprep.mubr.bf16.mxu0 0
        %2903 = vmatmul.mubr.bf16.gmra.mrb[0].mxu0 %v2842
        %v2904 = vpop.f32.mrb[0].mxu0
        %v2905 = vadd.f32 0.0, %v2904
        %v2906 = vpop.f32.mrb[0].mxu0
        %v2907 = vpop.f32.mrb[0].mxu0
        %v2908 = vadd.f32 0.0, %v2907
        %v2909 = vpop.f32.mrb[0].mxu0
        %2910 = vmatprep.mubr.bf16.mxu0 0
        %2911 = vmatmul.mubr.bf16.gmra.mrb[0].mxu0 %v2845
        %v2912 = vpop.f32.mrb[0].mxu0
        %v2913 = vadd.f32 0.0, %v2912
        %v2914 = vpop.f32.mrb[0].mxu0
        %v2915 = vpop.f32.mrb[0].mxu0
        %v2916 = vadd.f32 0.0, %v2915
        %v2917 = vpop.f32.mrb[0].mxu0
        %2918 = vmatprep.mubr.bf16.mxu0 0
        %2919 = vmatmul.mubr.bf16.gmra.mrb[0].mxu0 %v2848
        %v2920 = vpop.f32.mrb[0].mxu0
        %v2921 = vadd.f32 0.0, %v2920
        %v2922 = vpop.f32.mrb[0].mxu0
        %v2923 = vpop.f32.mrb[0].mxu0
        %v2924 = vadd.f32 0.0, %v2923
        %v2925 = vpop.f32.mrb[0].mxu0
        %2926 = vmatprep.mubr.bf16.mxu0 0
        %2927 = vmatmul.mubr.bf16.gmra.mrb[0].mxu0 %v2851
        %v2928 = vpop.f32.mrb[0].mxu0
        %v2929 = vadd.f32 0.0, %v2928
        %v2930 = vpop.f32.mrb[0].mxu0
        %v2931 = vpop.f32.mrb[0].mxu0
        %v2932 = vadd.f32 0.0, %v2931
        %v2933 = vpop.f32.mrb[0].mxu0
        %2934 = vmatprep.mubr.bf16.mxu0 0
        %2935 = vmatmul.mubr.bf16.gmra.mrb[0].mxu0 %v2854
        %v2936 = vpop.f32.mrb[0].mxu0
        %v2937 = vadd.f32 0.0, %v2936
        %v2938 = vpop.f32.mrb[0].mxu0
        %v2939 = vpop.f32.mrb[0].mxu0
        %v2940 = vadd.f32 0.0, %v2939
        %v2941 = vpop.f32.mrb[0].mxu0
        %2942 = vmatprep.mubr.bf16.mxu0 0
        %2943 = vmatmul.mubr.bf16.gmra.mrb[0].mxu0 %v2857
        %v2944 = vpop.f32.mrb[0].mxu0
        %v2945 = vadd.f32 0.0, %v2944
        %v2946 = vpop.f32.mrb[0].mxu0
        %v2947 = vpop.f32.mrb[0].mxu0
        %v2948 = vadd.f32 0.0, %v2947
        %v2949 = vpop.f32.mrb[0].mxu0
        %2950 = vmatprep.mubr.bf16.mxu0 0
        %2951 = vmatmul.mubr.bf16.gmra.mrb[0].mxu0 %v2860
        %v2952 = vpop.f32.mrb[0].mxu0
        %v2953 = vadd.f32 0.0, %v2952
        %v2954 = vpop.f32.mrb[0].mxu0
        %v2955 = vpop.f32.mrb[0].mxu0
        %v2956 = vadd.f32 0.0, %v2955
        %v2957 = vpop.f32.mrb[0].mxu0
        %2958 = vdwg.mxu0
        %v2959 = vadd.f32 %v2765, %v2897
        %v2960 = vadd.f32 %v2766, %v2900
        %v2961 = vadd.f32 %v2767, %v2905
        %v2962 = vadd.f32 %v2768, %v2908
        %v2963 = vadd.f32 %v2769, %v2913
        %v2964 = vadd.f32 %v2770, %v2916
        %v2965 = vadd.f32 %v2771, %v2921
        %v2966 = vadd.f32 %v2772, %v2924
        %v2967 = vadd.f32 %v2773, %v2929
        %v2968 = vadd.f32 %v2774, %v2932
        %v2969 = vadd.f32 %v2775, %v2937
        %v2970 = vadd.f32 %v2776, %v2940
        %v2971 = vadd.f32 %v2777, %v2945
        %v2972 = vadd.f32 %v2778, %v2948
        %v2973 = vadd.f32 %v2779, %v2953
        %v2974 = vadd.f32 %v2780, %v2956
        %v2975 = vrot.slane %v1136, 4
        %v2976 = vshrl.u32 %v287, 16
        %v2978 = vrot.slane %v2976, 5
        %v2979 = vrot.slane %v2559, 6
        %v2980 = vor.u32 %v2978, %v2979
        %v2981 = vsel %vm1122, %v2975, %v2980
        %v2982 = vrot.slane %v1151, 4
        %v2983 = vshrl.u32 %v291, 16
        %v2985 = vrot.slane %v2983, 5
        %v2986 = vrot.slane %v2567, 6
        %v2987 = vor.u32 %v2985, %v2986
        %v2988 = vsel %vm1122, %v2982, %v2987
        %v2989 = vrot.slane %v1166, 4
        %v2990 = vshrl.u32 %v295, 16
        %v2992 = vrot.slane %v2990, 5
        %v2993 = vrot.slane %v2575, 6
        %v2994 = vor.u32 %v2992, %v2993
        %v2995 = vsel %vm1122, %v2989, %v2994
        %v2996 = vrot.slane %v1181, 4
        %v2997 = vshrl.u32 %v299, 16
        %v2999 = vrot.slane %v2997, 5
        %v3000 = vrot.slane %v2583, 6
        %v3001 = vor.u32 %v2999, %v3000
        %v3002 = vsel %vm1122, %v2996, %v3001
        %v3003 = vrot.slane %v1196, 4
        %v3004 = vshrl.u32 %v303, 16
        %v3006 = vrot.slane %v3004, 5
        %v3007 = vrot.slane %v2591, 6
        %v3008 = vor.u32 %v3006, %v3007
        %v3009 = vsel %vm1122, %v3003, %v3008
        %v3010 = vrot.slane %v1211, 4
        %v3011 = vshrl.u32 %v307, 16
        %v3013 = vrot.slane %v3011, 5
        %v3014 = vrot.slane %v2599, 6
        %v3015 = vor.u32 %v3013, %v3014
        %v3016 = vsel %vm1122, %v3010, %v3015
        %v3017 = vrot.slane %v1226, 4
        %v3018 = vshrl.u32 %v311, 16
        %v3020 = vrot.slane %v3018, 5
        %v3021 = vrot.slane %v2607, 6
        %v3022 = vor.u32 %v3020, %v3021
        %v3023 = vsel %vm1122, %v3017, %v3022
        %v3024 = vrot.slane %v1241, 4
        %v3025 = vshrl.u32 %v315, 16
        %v3027 = vrot.slane %v3025, 5
        %v3028 = vrot.slane %v2615, 6
        %v3029 = vor.u32 %v3027, %v3028
        %v3030 = vsel %vm1122, %v3024, %v3029
        %s3031 = scalar_lea.vmem %s217, 88 [#allocation3]
        %v3032 = vld [vmem:[%s3031] sm:$0xf]
        %v3033 = vld [vmem:[%s3031 + $0x4] sm:$0xf]
        %v3034 = vunpack.c.l.b16 %v2981
        %v3035 = vunpack.c.l.b16 %v2988
        %v3036 = vunpack.c.l.b16 %v2995
        %v3037 = vunpack.c.l.b16 %v3002
        %v3038 = vunpack.c.l.b16 %v3009
        %v3039 = vunpack.c.l.b16 %v3016
        %v3040 = vunpack.c.l.b16 %v3023
        %v3041 = vunpack.c.l.b16 %v3030
        %v3042 = vpack.c.b16 %v3034, %v1247
        %v3043 = vpack.c.b16 %v3035, %v1249
        %v3044 = vpack.c.b16 %v3036, %v1251
        %v3045 = vpack.c.b16 %v3037, %v1253
        %v3046 = vpack.c.b16 %v3038, %v1255
        %v3047 = vpack.c.b16 %v3039, %v1257
        %v3048 = vpack.c.b16 %v3040, %v1259
        %v3049 = vpack.c.b16 %v3041, %v1261
        %v3052 = vunpack.c.l.b16 %v3032
        %v3053 = vunpack.c.l.b16 %v3033
        %v3054 = vpack.c.b16 %v3053, %v3052
        %v3057 = vsel %vm380, %v3042, 0
        %v3060 = vsel %vm380, %v3043, 0
        %v3063 = vsel %vm380, %v3044, 0
        %v3066 = vsel %vm380, %v3045, 0
        %v3069 = vsel %vm380, %v3046, 0
        %v3072 = vsel %vm380, %v3047, 0
        %v3075 = vsel %vm380, %v3048, 0
        %v3078 = vsel %vm380, %v3049, 0
        %3080 = vmatprep.subr.bf16.mxu0 0
        %3081 = vmatpush1.bf16.msra.mxu0 %v3054
        %3082 = vmatprep.subr.bf16.mxu0 0
        %3083 = vmatpush1.bf16.msra.mxu0 0
        %3084 = vmatprep.subr.bf16.mxu0 0
        %3085 = vmatpush1.bf16.msra.mxu0 0
        %3086 = vmatprep.subr.bf16.mxu0 0
        %3087 = vmatpush1.bf16.msra.mxu0 0
        %3088 = vmatprep.subr.bf16.mxu0 0
        %3089 = vmatpush1.bf16.msra.mxu0 0
        %3090 = vmatprep.subr.bf16.mxu0 0
        %3091 = vmatpush1.bf16.msra.mxu0 0
        %3092 = vmatprep.subr.bf16.mxu0 0
        %3093 = vmatpush1.bf16.msra.mxu0 0
        %3094 = vmatprep.subr.bf16.mxu0 0
        %3095 = vmatpush1.bf16.msra.mxu0 0
        %3096 = vmatprep.subr.bf16.mxu0 0
        %3097 = vmatpush1.bf16.msra.mxu0 0
        %3098 = vmatprep.subr.bf16.mxu0 0
        %3099 = vmatpush1.bf16.msra.mxu0 0
        %3100 = vmatprep.subr.bf16.mxu0 0
        %3101 = vmatpush1.bf16.msra.mxu0 0
        %3102 = vmatprep.subr.bf16.mxu0 0
        %3103 = vmatpush1.bf16.msra.mxu0 0
        %3104 = vmatprep.subr.bf16.mxu0 0
        %3105 = vmatpush1.bf16.msra.mxu0 0
        %3106 = vmatprep.subr.bf16.mxu0 0
        %3107 = vmatpush1.bf16.msra.mxu0 0
        %3108 = vmatprep.subr.bf16.mxu0 0
        %3109 = vmatpush1.bf16.msra.mxu0 0
        %3110 = vmatprep.subr.bf16.mxu0 0
        %3111 = vmatpush1.bf16.msra.mxu0 0
        %3112 = vmatprep.mubr.bf16.mxu0 0
        %3113 = vmatmul.mubr.bf16.gmra.mrb[0].mxu0 %v3057
        %v3114 = vpop.f32.mrb[0].mxu0
        %v3115 = vadd.f32 0.0, %v3114
        %v3116 = vpop.f32.mrb[0].mxu0
        %v3117 = vpop.f32.mrb[0].mxu0
        %v3118 = vadd.f32 0.0, %v3117
        %v3119 = vpop.f32.mrb[0].mxu0
        %3120 = vmatprep.mubr.bf16.mxu0 0
        %3121 = vmatmul.mubr.bf16.gmra.mrb[0].mxu0 %v3060
        %v3122 = vpop.f32.mrb[0].mxu0
        %v3123 = vadd.f32 0.0, %v3122
        %v3124 = vpop.f32.mrb[0].mxu0
        %v3125 = vpop.f32.mrb[0].mxu0
        %v3126 = vadd.f32 0.0, %v3125
        %v3127 = vpop.f32.mrb[0].mxu0
        %3128 = vmatprep.mubr.bf16.mxu0 0
        %3129 = vmatmul.mubr.bf16.gmra.mrb[0].mxu0 %v3063
        %v3130 = vpop.f32.mrb[0].mxu0
        %v3131 = vadd.f32 0.0, %v3130
        %v3132 = vpop.f32.mrb[0].mxu0
        %v3133 = vpop.f32.mrb[0].mxu0
        %v3134 = vadd.f32 0.0, %v3133
        %v3135 = vpop.f32.mrb[0].mxu0
        %3136 = vmatprep.mubr.bf16.mxu0 0
        %3137 = vmatmul.mubr.bf16.gmra.mrb[0].mxu0 %v3066
        %v3138 = vpop.f32.mrb[0].mxu0
        %v3139 = vadd.f32 0.0, %v3138
        %v3140 = vpop.f32.mrb[0].mxu0
        %v3141 = vpop.f32.mrb[0].mxu0
        %v3142 = vadd.f32 0.0, %v3141
        %v3143 = vpop.f32.mrb[0].mxu0
        %3144 = vmatprep.mubr.bf16.mxu0 0
        %3145 = vmatmul.mubr.bf16.gmra.mrb[0].mxu0 %v3069
        %v3146 = vpop.f32.mrb[0].mxu0
        %v3147 = vadd.f32 0.0, %v3146
        %v3148 = vpop.f32.mrb[0].mxu0
        %v3149 = vpop.f32.mrb[0].mxu0
        %v3150 = vadd.f32 0.0, %v3149
        %v3151 = vpop.f32.mrb[0].mxu0
        %3152 = vmatprep.mubr.bf16.mxu0 0
        %3153 = vmatmul.mubr.bf16.gmra.mrb[0].mxu0 %v3072
        %v3154 = vpop.f32.mrb[0].mxu0
        %v3155 = vadd.f32 0.0, %v3154
        %v3156 = vpop.f32.mrb[0].mxu0
        %v3157 = vpop.f32.mrb[0].mxu0
        %v3158 = vadd.f32 0.0, %v3157
        %v3159 = vpop.f32.mrb[0].mxu0
        %3160 = vmatprep.mubr.bf16.mxu0 0
        %3161 = vmatmul.mubr.bf16.gmra.mrb[0].mxu0 %v3075
        %v3162 = vpop.f32.mrb[0].mxu0
        %v3163 = vadd.f32 0.0, %v3162
        %v3164 = vpop.f32.mrb[0].mxu0
        %v3165 = vpop.f32.mrb[0].mxu0
        %v3166 = vadd.f32 0.0, %v3165
        %v3167 = vpop.f32.mrb[0].mxu0
        %3168 = vmatprep.mubr.bf16.mxu0 0
        %3169 = vmatmul.mubr.bf16.gmra.mrb[0].mxu0 %v3078
        %v3170 = vpop.f32.mrb[0].mxu0
        %v3171 = vadd.f32 0.0, %v3170
        %v3172 = vpop.f32.mrb[0].mxu0
        %v3173 = vpop.f32.mrb[0].mxu0
        %v3174 = vadd.f32 0.0, %v3173
        %v3175 = vpop.f32.mrb[0].mxu0
        %3176 = vdwg.mxu0
        %v3177 = vadd.f32 %v2959, %v3115
        %v3178 = vadd.f32 %v2960, %v3118
        %v3179 = vadd.f32 %v2961, %v3123
        %v3180 = vadd.f32 %v2962, %v3126
        %v3181 = vadd.f32 %v2963, %v3131
        %v3182 = vadd.f32 %v2964, %v3134
        %v3183 = vadd.f32 %v2965, %v3139
        %v3184 = vadd.f32 %v2966, %v3142
        %v3185 = vadd.f32 %v2967, %v3147
        %v3186 = vadd.f32 %v2968, %v3150
        %v3187 = vadd.f32 %v2969, %v3155
        %v3188 = vadd.f32 %v2970, %v3158
        %v3189 = vadd.f32 %v2971, %v3163
        %v3190 = vadd.f32 %v2972, %v3166
        %v3191 = vadd.f32 %v2973, %v3171
        %v3192 = vadd.f32 %v2974, %v3174
        %v3193 = vrot.slane %v1421, 4
        %v3194 = vrot.slane %v287, 6
        %v3195 = vsel %vm1415, %v3193, %v3194
        %v3196 = vrot.slane %v1428, 4
        %v3197 = vrot.slane %v291, 6
        %v3198 = vsel %vm1415, %v3196, %v3197
        %v3199 = vrot.slane %v1435, 4
        %v3200 = vrot.slane %v295, 6
        %v3201 = vsel %vm1415, %v3199, %v3200
        %v3202 = vrot.slane %v1442, 4
        %v3203 = vrot.slane %v299, 6
        %v3204 = vsel %vm1415, %v3202, %v3203
        %v3205 = vrot.slane %v1449, 4
        %v3206 = vrot.slane %v303, 6
        %v3207 = vsel %vm1415, %v3205, %v3206
        %v3208 = vrot.slane %v1456, 4
        %v3209 = vrot.slane %v307, 6
        %v3210 = vsel %vm1415, %v3208, %v3209
        %v3211 = vrot.slane %v1463, 4
        %v3212 = vrot.slane %v311, 6
        %v3213 = vsel %vm1415, %v3211, %v3212
        %v3214 = vrot.slane %v1470, 4
        %v3215 = vrot.slane %v315, 6
        %v3216 = vsel %vm1415, %v3214, %v3215
        %s3217 = scalar_lea.vmem %s217, 96 [#allocation3]
        %v3218 = vld [vmem:[%s3217] sm:$0xf]
        %v3219 = vld [vmem:[%s3217 + $0x4] sm:$0xf]
        %v3220 = vunpack.c.l.b16 %v3195
        %v3221 = vunpack.c.l.b16 %v3198
        %v3222 = vunpack.c.l.b16 %v3201
        %v3223 = vunpack.c.l.b16 %v3204
        %v3224 = vunpack.c.l.b16 %v3207
        %v3225 = vunpack.c.l.b16 %v3210
        %v3226 = vunpack.c.l.b16 %v3213
        %v3227 = vunpack.c.l.b16 %v3216
        %v3228 = vpack.c.b16 %v3220, %v1476
        %v3229 = vpack.c.b16 %v3221, %v1478
        %v3230 = vpack.c.b16 %v3222, %v1480
        %v3231 = vpack.c.b16 %v3223, %v1482
        %v3232 = vpack.c.b16 %v3224, %v1484
        %v3233 = vpack.c.b16 %v3225, %v1486
        %v3234 = vpack.c.b16 %v3226, %v1488
        %v3235 = vpack.c.b16 %v3227, %v1490
        %v3238 = vunpack.c.l.b16 %v3218
        %v3239 = vunpack.c.l.b16 %v3219
        %v3240 = vpack.c.b16 %v3239, %v3238
        %v3243 = vsel %vm380, %v3228, 0
        %v3246 = vsel %vm380, %v3229, 0
        %v3249 = vsel %vm380, %v3230, 0
        %v3252 = vsel %vm380, %v3231, 0
        %v3255 = vsel %vm380, %v3232, 0
        %v3258 = vsel %vm380, %v3233, 0
        %v3261 = vsel %vm380, %v3234, 0
        %v3264 = vsel %vm380, %v3235, 0
        %3266 = vmatprep.subr.bf16.mxu0 0
        %3267 = vmatpush1.bf16.msra.mxu0 %v3240
        %3268 = vmatprep.subr.bf16.mxu0 0
        %3269 = vmatpush1.bf16.msra.mxu0 0
        %3270 = vmatprep.subr.bf16.mxu0 0
        %3271 = vmatpush1.bf16.msra.mxu0 0
        %3272 = vmatprep.subr.bf16.mxu0 0
        %3273 = vmatpush1.bf16.msra.mxu0 0
        %3274 = vmatprep.subr.bf16.mxu0 0
        %3275 = vmatpush1.bf16.msra.mxu0 0
        %3276 = vmatprep.subr.bf16.mxu0 0
        %3277 = vmatpush1.bf16.msra.mxu0 0
        %3278 = vmatprep.subr.bf16.mxu0 0
        %3279 = vmatpush1.bf16.msra.mxu0 0
        %3280 = vmatprep.subr.bf16.mxu0 0
        %3281 = vmatpush1.bf16.msra.mxu0 0
        %3282 = vmatprep.subr.bf16.mxu0 0
        %3283 = vmatpush1.bf16.msra.mxu0 0
        %3284 = vmatprep.subr.bf16.mxu0 0
        %3285 = vmatpush1.bf16.msra.mxu0 0
        %3286 = vmatprep.subr.bf16.mxu0 0
        %3287 = vmatpush1.bf16.msra.mxu0 0
        %3288 = vmatprep.subr.bf16.mxu0 0
        %3289 = vmatpush1.bf16.msra.mxu0 0
        %3290 = vmatprep.subr.bf16.mxu0 0
        %3291 = vmatpush1.bf16.msra.mxu0 0
        %3292 = vmatprep.subr.bf16.mxu0 0
        %3293 = vmatpush1.bf16.msra.mxu0 0
        %3294 = vmatprep.subr.bf16.mxu0 0
        %3295 = vmatpush1.bf16.msra.mxu0 0
        %3296 = vmatprep.subr.bf16.mxu0 0
        %3297 = vmatpush1.bf16.msra.mxu0 0
        %3298 = vmatprep.mubr.bf16.mxu0 0
        %3299 = vmatmul.mubr.bf16.gmra.mrb[0].mxu0 %v3243
        %v3300 = vpop.f32.mrb[0].mxu0
        %v3301 = vadd.f32 0.0, %v3300
        %v3302 = vpop.f32.mrb[0].mxu0
        %v3303 = vpop.f32.mrb[0].mxu0
        %v3304 = vadd.f32 0.0, %v3303
        %v3305 = vpop.f32.mrb[0].mxu0
        %3306 = vmatprep.mubr.bf16.mxu0 0
        %3307 = vmatmul.mubr.bf16.gmra.mrb[0].mxu0 %v3246
        %v3308 = vpop.f32.mrb[0].mxu0
        %v3309 = vadd.f32 0.0, %v3308
        %v3310 = vpop.f32.mrb[0].mxu0
        %v3311 = vpop.f32.mrb[0].mxu0
        %v3312 = vadd.f32 0.0, %v3311
        %v3313 = vpop.f32.mrb[0].mxu0
        %3314 = vmatprep.mubr.bf16.mxu0 0
        %3315 = vmatmul.mubr.bf16.gmra.mrb[0].mxu0 %v3249
        %v3316 = vpop.f32.mrb[0].mxu0
        %v3317 = vadd.f32 0.0, %v3316
        %v3318 = vpop.f32.mrb[0].mxu0
        %v3319 = vpop.f32.mrb[0].mxu0
        %v3320 = vadd.f32 0.0, %v3319
        %v3321 = vpop.f32.mrb[0].mxu0
        %3322 = vmatprep.mubr.bf16.mxu0 0
        %3323 = vmatmul.mubr.bf16.gmra.mrb[0].mxu0 %v3252
        %v3324 = vpop.f32.mrb[0].mxu0
        %v3325 = vadd.f32 0.0, %v3324
        %v3326 = vpop.f32.mrb[0].mxu0
        %v3327 = vpop.f32.mrb[0].mxu0
        %v3328 = vadd.f32 0.0, %v3327
        %v3329 = vpop.f32.mrb[0].mxu0
        %3330 = vmatprep.mubr.bf16.mxu0 0
        %3331 = vmatmul.mubr.bf16.gmra.mrb[0].mxu0 %v3255
        %v3332 = vpop.f32.mrb[0].mxu0
        %v3333 = vadd.f32 0.0, %v3332
        %v3334 = vpop.f32.mrb[0].mxu0
        %v3335 = vpop.f32.mrb[0].mxu0
        %v3336 = vadd.f32 0.0, %v3335
        %v3337 = vpop.f32.mrb[0].mxu0
        %3338 = vmatprep.mubr.bf16.mxu0 0
        %3339 = vmatmul.mubr.bf16.gmra.mrb[0].mxu0 %v3258
        %v3340 = vpop.f32.mrb[0].mxu0
        %v3341 = vadd.f32 0.0, %v3340
        %v3342 = vpop.f32.mrb[0].mxu0
        %v3343 = vpop.f32.mrb[0].mxu0
        %v3344 = vadd.f32 0.0, %v3343
        %v3345 = vpop.f32.mrb[0].mxu0
        %3346 = vmatprep.mubr.bf16.mxu0 0
        %3347 = vmatmul.mubr.bf16.gmra.mrb[0].mxu0 %v3261
        %v3348 = vpop.f32.mrb[0].mxu0
        %v3349 = vadd.f32 0.0, %v3348
        %v3350 = vpop.f32.mrb[0].mxu0
        %v3351 = vpop.f32.mrb[0].mxu0
        %v3352 = vadd.f32 0.0, %v3351
        %v3353 = vpop.f32.mrb[0].mxu0
        %3354 = vmatprep.mubr.bf16.mxu0 0
        %3355 = vmatmul.mubr.bf16.gmra.mrb[0].mxu0 %v3264
        %v3356 = vpop.f32.mrb[0].mxu0
        %v3357 = vadd.f32 0.0, %v3356
        %v3358 = vpop.f32.mrb[0].mxu0
        %v3359 = vpop.f32.mrb[0].mxu0
        %v3360 = vadd.f32 0.0, %v3359
        %v3361 = vpop.f32.mrb[0].mxu0
        %3362 = vdwg.mxu0
        %v3363 = vadd.f32 %v3177, %v3301
        %v3364 = vadd.f32 %v3178, %v3304
        %v3365 = vadd.f32 %v3179, %v3309
        %v3366 = vadd.f32 %v3180, %v3312
        %v3367 = vadd.f32 %v3181, %v3317
        %v3368 = vadd.f32 %v3182, %v3320
        %v3369 = vadd.f32 %v3183, %v3325
        %v3370 = vadd.f32 %v3184, %v3328
        %v3371 = vadd.f32 %v3185, %v3333
        %v3372 = vadd.f32 %v3186, %v3336
        %v3373 = vadd.f32 %v3187, %v3341
        %v3374 = vadd.f32 %v3188, %v3344
        %v3375 = vadd.f32 %v3189, %v3349
        %v3376 = vadd.f32 %v3190, %v3352
        %v3377 = vadd.f32 %v3191, %v3357
        %v3378 = vadd.f32 %v3192, %v3360
        %v3379 = vrot.slane %v1656, 4
        %v3380 = vrot.slane %v2976, 6
        %v3381 = vrot.slane %v2559, 7
        %v3382 = vor.u32 %v3380, %v3381
        %v3383 = vsel %vm1644, %v3379, %v3382
        %v3384 = vrot.slane %v1669, 4
        %v3385 = vrot.slane %v2983, 6
        %v3386 = vrot.slane %v2567, 7
        %v3387 = vor.u32 %v3385, %v3386
        %v3388 = vsel %vm1644, %v3384, %v3387
        %v3389 = vrot.slane %v1682, 4
        %v3390 = vrot.slane %v2990, 6
        %v3391 = vrot.slane %v2575, 7
        %v3392 = vor.u32 %v3390, %v3391
        %v3393 = vsel %vm1644, %v3389, %v3392
        %v3394 = vrot.slane %v1695, 4
        %v3395 = vrot.slane %v2997, 6
        %v3396 = vrot.slane %v2583, 7
        %v3397 = vor.u32 %v3395, %v3396
        %v3398 = vsel %vm1644, %v3394, %v3397
        %v3399 = vrot.slane %v1708, 4
        %v3400 = vrot.slane %v3004, 6
        %v3401 = vrot.slane %v2591, 7
        %v3402 = vor.u32 %v3400, %v3401
        %v3403 = vsel %vm1644, %v3399, %v3402
        %v3404 = vrot.slane %v1721, 4
        %v3405 = vrot.slane %v3011, 6
        %v3406 = vrot.slane %v2599, 7
        %v3407 = vor.u32 %v3405, %v3406
        %v3408 = vsel %vm1644, %v3404, %v3407
        %v3409 = vrot.slane %v1734, 4
        %v3410 = vrot.slane %v3018, 6
        %v3411 = vrot.slane %v2607, 7
        %v3412 = vor.u32 %v3410, %v3411
        %v3413 = vsel %vm1644, %v3409, %v3412
        %v3414 = vrot.slane %v1747, 4
        %v3415 = vrot.slane %v3025, 6
        %v3416 = vrot.slane %v2615, 7
        %v3417 = vor.u32 %v3415, %v3416
        %v3418 = vsel %vm1644, %v3414, %v3417
        %s3419 = scalar_lea.vmem %s217, 104 [#allocation3]
        %v3420 = vld [vmem:[%s3419] sm:$0xf]
        %v3421 = vld [vmem:[%s3419 + $0x4] sm:$0xf]
        %v3422 = vunpack.c.l.b16 %v3383
        %v3423 = vunpack.c.l.b16 %v3388
        %v3424 = vunpack.c.l.b16 %v3393
        %v3425 = vunpack.c.l.b16 %v3398
        %v3426 = vunpack.c.l.b16 %v3403
        %v3427 = vunpack.c.l.b16 %v3408
        %v3428 = vunpack.c.l.b16 %v3413
        %v3429 = vunpack.c.l.b16 %v3418
        %v3430 = vpack.c.b16 %v3422, %v1753
        %v3431 = vpack.c.b16 %v3423, %v1755
        %v3432 = vpack.c.b16 %v3424, %v1757
        %v3433 = vpack.c.b16 %v3425, %v1759
        %v3434 = vpack.c.b16 %v3426, %v1761
        %v3435 = vpack.c.b16 %v3427, %v1763
        %v3436 = vpack.c.b16 %v3428, %v1765
        %v3437 = vpack.c.b16 %v3429, %v1767
        %v3440 = vunpack.c.l.b16 %v3420
        %v3441 = vunpack.c.l.b16 %v3421
        %v3442 = vpack.c.b16 %v3441, %v3440
        %v3445 = vsel %vm380, %v3430, 0
        %v3448 = vsel %vm380, %v3431, 0
        %v3451 = vsel %vm380, %v3432, 0
        %v3454 = vsel %vm380, %v3433, 0
        %v3457 = vsel %vm380, %v3434, 0
        %v3460 = vsel %vm380, %v3435, 0
        %v3463 = vsel %vm380, %v3436, 0
        %v3466 = vsel %vm380, %v3437, 0
        %3468 = vmatprep.subr.bf16.mxu0 0
        %3469 = vmatpush1.bf16.msra.mxu0 %v3442
        %3470 = vmatprep.subr.bf16.mxu0 0
        %3471 = vmatpush1.bf16.msra.mxu0 0
        %3472 = vmatprep.subr.bf16.mxu0 0
        %3473 = vmatpush1.bf16.msra.mxu0 0
        %3474 = vmatprep.subr.bf16.mxu0 0
        %3475 = vmatpush1.bf16.msra.mxu0 0
        %3476 = vmatprep.subr.bf16.mxu0 0
        %3477 = vmatpush1.bf16.msra.mxu0 0
        %3478 = vmatprep.subr.bf16.mxu0 0
        %3479 = vmatpush1.bf16.msra.mxu0 0
        %3480 = vmatprep.subr.bf16.mxu0 0
        %3481 = vmatpush1.bf16.msra.mxu0 0
        %3482 = vmatprep.subr.bf16.mxu0 0
        %3483 = vmatpush1.bf16.msra.mxu0 0
        %3484 = vmatprep.subr.bf16.mxu0 0
        %3485 = vmatpush1.bf16.msra.mxu0 0
        %3486 = vmatprep.subr.bf16.mxu0 0
        %3487 = vmatpush1.bf16.msra.mxu0 0
        %3488 = vmatprep.subr.bf16.mxu0 0
        %3489 = vmatpush1.bf16.msra.mxu0 0
        %3490 = vmatprep.subr.bf16.mxu0 0
        %3491 = vmatpush1.bf16.msra.mxu0 0
        %3492 = vmatprep.subr.bf16.mxu0 0
        %3493 = vmatpush1.bf16.msra.mxu0 0
        %3494 = vmatprep.subr.bf16.mxu0 0
        %3495 = vmatpush1.bf16.msra.mxu0 0
        %3496 = vmatprep.subr.bf16.mxu0 0
        %3497 = vmatpush1.bf16.msra.mxu0 0
        %3498 = vmatprep.subr.bf16.mxu0 0
        %3499 = vmatpush1.bf16.msra.mxu0 0
        %3500 = vmatprep.mubr.bf16.mxu0 0
        %3501 = vmatmul.mubr.bf16.gmra.mrb[0].mxu0 %v3445
        %v3502 = vpop.f32.mrb[0].mxu0
        %v3503 = vadd.f32 0.0, %v3502
        %v3504 = vpop.f32.mrb[0].mxu0
        %v3505 = vpop.f32.mrb[0].mxu0
        %v3506 = vadd.f32 0.0, %v3505
        %v3507 = vpop.f32.mrb[0].mxu0
        %3508 = vmatprep.mubr.bf16.mxu0 0
        %3509 = vmatmul.mubr.bf16.gmra.mrb[0].mxu0 %v3448
        %v3510 = vpop.f32.mrb[0].mxu0
        %v3511 = vadd.f32 0.0, %v3510
        %v3512 = vpop.f32.mrb[0].mxu0
        %v3513 = vpop.f32.mrb[0].mxu0
        %v3514 = vadd.f32 0.0, %v3513
        %v3515 = vpop.f32.mrb[0].mxu0
        %3516 = vmatprep.mubr.bf16.mxu0 0
        %3517 = vmatmul.mubr.bf16.gmra.mrb[0].mxu0 %v3451
        %v3518 = vpop.f32.mrb[0].mxu0
        %v3519 = vadd.f32 0.0, %v3518
        %v3520 = vpop.f32.mrb[0].mxu0
        %v3521 = vpop.f32.mrb[0].mxu0
        %v3522 = vadd.f32 0.0, %v3521
        %v3523 = vpop.f32.mrb[0].mxu0
        %3524 = vmatprep.mubr.bf16.mxu0 0
        %3525 = vmatmul.mubr.bf16.gmra.mrb[0].mxu0 %v3454
        %v3526 = vpop.f32.mrb[0].mxu0
        %v3527 = vadd.f32 0.0, %v3526
        %v3528 = vpop.f32.mrb[0].mxu0
        %v3529 = vpop.f32.mrb[0].mxu0
        %v3530 = vadd.f32 0.0, %v3529
        %v3531 = vpop.f32.mrb[0].mxu0
        %3532 = vmatprep.mubr.bf16.mxu0 0
        %3533 = vmatmul.mubr.bf16.gmra.mrb[0].mxu0 %v3457
        %v3534 = vpop.f32.mrb[0].mxu0
        %v3535 = vadd.f32 0.0, %v3534
        %v3536 = vpop.f32.mrb[0].mxu0
        %v3537 = vpop.f32.mrb[0].mxu0
        %v3538 = vadd.f32 0.0, %v3537
        %v3539 = vpop.f32.mrb[0].mxu0
        %3540 = vmatprep.mubr.bf16.mxu0 0
        %3541 = vmatmul.mubr.bf16.gmra.mrb[0].mxu0 %v3460
        %v3542 = vpop.f32.mrb[0].mxu0
        %v3543 = vadd.f32 0.0, %v3542
        %v3544 = vpop.f32.mrb[0].mxu0
        %v3545 = vpop.f32.mrb[0].mxu0
        %v3546 = vadd.f32 0.0, %v3545
        %v3547 = vpop.f32.mrb[0].mxu0
        %3548 = vmatprep.mubr.bf16.mxu0 0
        %3549 = vmatmul.mubr.bf16.gmra.mrb[0].mxu0 %v3463
        %v3550 = vpop.f32.mrb[0].mxu0
        %v3551 = vadd.f32 0.0, %v3550
        %v3552 = vpop.f32.mrb[0].mxu0
        %v3553 = vpop.f32.mrb[0].mxu0
        %v3554 = vadd.f32 0.0, %v3553
        %v3555 = vpop.f32.mrb[0].mxu0
        %3556 = vmatprep.mubr.bf16.mxu0 0
        %3557 = vmatmul.mubr.bf16.gmra.mrb[0].mxu0 %v3466
        %v3558 = vpop.f32.mrb[0].mxu0
        %v3559 = vadd.f32 0.0, %v3558
        %v3560 = vpop.f32.mrb[0].mxu0
        %v3561 = vpop.f32.mrb[0].mxu0
        %v3562 = vadd.f32 0.0, %v3561
        %v3563 = vpop.f32.mrb[0].mxu0
        %3564 = vdwg.mxu0
        %v3565 = vadd.f32 %v3363, %v3503
        %v3566 = vadd.f32 %v3364, %v3506
        %v3567 = vadd.f32 %v3365, %v3511
        %v3568 = vadd.f32 %v3366, %v3514
        %v3569 = vadd.f32 %v3367, %v3519
        %v3570 = vadd.f32 %v3368, %v3522
        %v3571 = vadd.f32 %v3369, %v3527
        %v3572 = vadd.f32 %v3370, %v3530
        %v3573 = vadd.f32 %v3371, %v3535
        %v3574 = vadd.f32 %v3372, %v3538
        %v3575 = vadd.f32 %v3373, %v3543
        %v3576 = vadd.f32 %v3374, %v3546
        %v3577 = vadd.f32 %v3375, %v3551
        %v3578 = vadd.f32 %v3376, %v3554
        %v3579 = vadd.f32 %v3377, %v3559
        %v3580 = vadd.f32 %v3378, %v3562
        %v3581 = vrot.slane %v1927, 4
        %v3582 = vrot.slane %v287, 7
        %v3583 = vsel %vm1921, %v3581, %v3582
        %v3584 = vrot.slane %v1934, 4
        %v3585 = vrot.slane %v291, 7
        %v3586 = vsel %vm1921, %v3584, %v3585
        %v3587 = vrot.slane %v1941, 4
        %v3588 = vrot.slane %v295, 7
        %v3589 = vsel %vm1921, %v3587, %v3588
        %v3590 = vrot.slane %v1948, 4
        %v3591 = vrot.slane %v299, 7
        %v3592 = vsel %vm1921, %v3590, %v3591
        %v3593 = vrot.slane %v1955, 4
        %v3594 = vrot.slane %v303, 7
        %v3595 = vsel %vm1921, %v3593, %v3594
        %v3596 = vrot.slane %v1962, 4
        %v3597 = vrot.slane %v307, 7
        %v3598 = vsel %vm1921, %v3596, %v3597
        %v3599 = vrot.slane %v1969, 4
        %v3600 = vrot.slane %v311, 7
        %v3601 = vsel %vm1921, %v3599, %v3600
        %v3602 = vrot.slane %v1976, 4
        %v3603 = vrot.slane %v315, 7
        %v3604 = vsel %vm1921, %v3602, %v3603
        %s3605 = scalar_lea.vmem %s217, 112 [#allocation3]
        %v3606 = vld [vmem:[%s3605] sm:$0xf]
        %v3607 = vld [vmem:[%s3605 + $0x4] sm:$0xf]
        %v3608 = vunpack.c.l.b16 %v3583
        %v3609 = vunpack.c.l.b16 %v3586
        %v3610 = vunpack.c.l.b16 %v3589
        %v3611 = vunpack.c.l.b16 %v3592
        %v3612 = vunpack.c.l.b16 %v3595
        %v3613 = vunpack.c.l.b16 %v3598
        %v3614 = vunpack.c.l.b16 %v3601
        %v3615 = vunpack.c.l.b16 %v3604
        %v3616 = vpack.c.b16 %v3608, %v1982
        %v3617 = vpack.c.b16 %v3609, %v1984
        %v3618 = vpack.c.b16 %v3610, %v1986
        %v3619 = vpack.c.b16 %v3611, %v1988
        %v3620 = vpack.c.b16 %v3612, %v1990
        %v3621 = vpack.c.b16 %v3613, %v1992
        %v3622 = vpack.c.b16 %v3614, %v1994
        %v3623 = vpack.c.b16 %v3615, %v1996
        %v3626 = vunpack.c.l.b16 %v3606
        %v3627 = vunpack.c.l.b16 %v3607
        %v3628 = vpack.c.b16 %v3627, %v3626
        %v3631 = vsel %vm380, %v3616, 0
        %v3634 = vsel %vm380, %v3617, 0
        %v3637 = vsel %vm380, %v3618, 0
        %v3640 = vsel %vm380, %v3619, 0
        %v3643 = vsel %vm380, %v3620, 0
        %v3646 = vsel %vm380, %v3621, 0
        %v3649 = vsel %vm380, %v3622, 0
        %v3652 = vsel %vm380, %v3623, 0
        %3654 = vmatprep.subr.bf16.mxu0 0
        %3655 = vmatpush1.bf16.msra.mxu0 %v3628
        %3656 = vmatprep.subr.bf16.mxu0 0
        %3657 = vmatpush1.bf16.msra.mxu0 0
        %3658 = vmatprep.subr.bf16.mxu0 0
        %3659 = vmatpush1.bf16.msra.mxu0 0
        %3660 = vmatprep.subr.bf16.mxu0 0
        %3661 = vmatpush1.bf16.msra.mxu0 0
        %3662 = vmatprep.subr.bf16.mxu0 0
        %3663 = vmatpush1.bf16.msra.mxu0 0
        %3664 = vmatprep.subr.bf16.mxu0 0
        %3665 = vmatpush1.bf16.msra.mxu0 0
        %3666 = vmatprep.subr.bf16.mxu0 0
        %3667 = vmatpush1.bf16.msra.mxu0 0
        %3668 = vmatprep.subr.bf16.mxu0 0
        %3669 = vmatpush1.bf16.msra.mxu0 0
        %3670 = vmatprep.subr.bf16.mxu0 0
        %3671 = vmatpush1.bf16.msra.mxu0 0
        %3672 = vmatprep.subr.bf16.mxu0 0
        %3673 = vmatpush1.bf16.msra.mxu0 0
        %3674 = vmatprep.subr.bf16.mxu0 0
        %3675 = vmatpush1.bf16.msra.mxu0 0
        %3676 = vmatprep.subr.bf16.mxu0 0
        %3677 = vmatpush1.bf16.msra.mxu0 0
        %3678 = vmatprep.subr.bf16.mxu0 0
        %3679 = vmatpush1.bf16.msra.mxu0 0
        %3680 = vmatprep.subr.bf16.mxu0 0
        %3681 = vmatpush1.bf16.msra.mxu0 0
        %3682 = vmatprep.subr.bf16.mxu0 0
        %3683 = vmatpush1.bf16.msra.mxu0 0
        %3684 = vmatprep.subr.bf16.mxu0 0
        %3685 = vmatpush1.bf16.msra.mxu0 0
        %3686 = vmatprep.mubr.bf16.mxu0 0
        %3687 = vmatmul.mubr.bf16.gmra.mrb[0].mxu0 %v3631
        %v3688 = vpop.f32.mrb[0].mxu0
        %v3689 = vadd.f32 0.0, %v3688
        %v3690 = vpop.f32.mrb[0].mxu0
        %v3691 = vpop.f32.mrb[0].mxu0
        %v3692 = vadd.f32 0.0, %v3691
        %v3693 = vpop.f32.mrb[0].mxu0
        %3694 = vmatprep.mubr.bf16.mxu0 0
        %3695 = vmatmul.mubr.bf16.gmra.mrb[0].mxu0 %v3634
        %v3696 = vpop.f32.mrb[0].mxu0
        %v3697 = vadd.f32 0.0, %v3696
        %v3698 = vpop.f32.mrb[0].mxu0
        %v3699 = vpop.f32.mrb[0].mxu0
        %v3700 = vadd.f32 0.0, %v3699
        %v3701 = vpop.f32.mrb[0].mxu0
        %3702 = vmatprep.mubr.bf16.mxu0 0
        %3703 = vmatmul.mubr.bf16.gmra.mrb[0].mxu0 %v3637
        %v3704 = vpop.f32.mrb[0].mxu0
        %v3705 = vadd.f32 0.0, %v3704
        %v3706 = vpop.f32.mrb[0].mxu0
        %v3707 = vpop.f32.mrb[0].mxu0
        %v3708 = vadd.f32 0.0, %v3707
        %v3709 = vpop.f32.mrb[0].mxu0
        %3710 = vmatprep.mubr.bf16.mxu0 0
        %3711 = vmatmul.mubr.bf16.gmra.mrb[0].mxu0 %v3640
        %v3712 = vpop.f32.mrb[0].mxu0
        %v3713 = vadd.f32 0.0, %v3712
        %v3714 = vpop.f32.mrb[0].mxu0
        %v3715 = vpop.f32.mrb[0].mxu0
        %v3716 = vadd.f32 0.0, %v3715
        %v3717 = vpop.f32.mrb[0].mxu0
        %3718 = vmatprep.mubr.bf16.mxu0 0
        %3719 = vmatmul.mubr.bf16.gmra.mrb[0].mxu0 %v3643
        %v3720 = vpop.f32.mrb[0].mxu0
        %v3721 = vadd.f32 0.0, %v3720
        %v3722 = vpop.f32.mrb[0].mxu0
        %v3723 = vpop.f32.mrb[0].mxu0
        %v3724 = vadd.f32 0.0, %v3723
        %v3725 = vpop.f32.mrb[0].mxu0
        %3726 = vmatprep.mubr.bf16.mxu0 0
        %3727 = vmatmul.mubr.bf16.gmra.mrb[0].mxu0 %v3646
        %v3728 = vpop.f32.mrb[0].mxu0
        %v3729 = vadd.f32 0.0, %v3728
        %v3730 = vpop.f32.mrb[0].mxu0
        %v3731 = vpop.f32.mrb[0].mxu0
        %v3732 = vadd.f32 0.0, %v3731
        %v3733 = vpop.f32.mrb[0].mxu0
        %3734 = vmatprep.mubr.bf16.mxu0 0
        %3735 = vmatmul.mubr.bf16.gmra.mrb[0].mxu0 %v3649
        %v3736 = vpop.f32.mrb[0].mxu0
        %v3737 = vadd.f32 0.0, %v3736
        %v3738 = vpop.f32.mrb[0].mxu0
        %v3739 = vpop.f32.mrb[0].mxu0
        %v3740 = vadd.f32 0.0, %v3739
        %v3741 = vpop.f32.mrb[0].mxu0
        %3742 = vmatprep.mubr.bf16.mxu0 0
        %3743 = vmatmul.mubr.bf16.gmra.mrb[0].mxu0 %v3652
        %v3744 = vpop.f32.mrb[0].mxu0
        %v3745 = vadd.f32 0.0, %v3744
        %v3746 = vpop.f32.mrb[0].mxu0
        %v3747 = vpop.f32.mrb[0].mxu0
        %v3748 = vadd.f32 0.0, %v3747
        %v3749 = vpop.f32.mrb[0].mxu0
        %3750 = vdwg.mxu0
        %v3751 = vadd.f32 %v3565, %v3689
        %v3752 = vadd.f32 %v3566, %v3692
        %v3753 = vadd.f32 %v3567, %v3697
        %v3754 = vadd.f32 %v3568, %v3700
        %v3755 = vadd.f32 %v3569, %v3705
        %v3756 = vadd.f32 %v3570, %v3708
        %v3757 = vadd.f32 %v3571, %v3713
        %v3758 = vadd.f32 %v3572, %v3716
        %v3759 = vadd.f32 %v3573, %v3721
        %v3760 = vadd.f32 %v3574, %v3724
        %v3761 = vadd.f32 %v3575, %v3729
        %v3762 = vadd.f32 %v3576, %v3732
        %v3763 = vadd.f32 %v3577, %v3737
        %v3764 = vadd.f32 %v3578, %v3740
        %v3765 = vadd.f32 %v3579, %v3745
        %v3766 = vadd.f32 %v3580, %v3748
        %3767 = vst.msk [vmem:[#allocation2] sm:$0xff] %vm380, %v3751
        %3768 = vst.msk [vmem:[#allocation2 + $0x8] sm:$0xff] %vm380, %v3752
        %3769 = vst.msk [vmem:[#allocation2 + $0x10] sm:$0xff] %vm380, %v3753
        %3770 = vst.msk [vmem:[#allocation2 + $0x18] sm:$0xff] %vm380, %v3754
        %3771 = vst.msk [vmem:[#allocation2 + $0x20] sm:$0xff] %vm380, %v3755
        %3772 = vst.msk [vmem:[#allocation2 + $0x28] sm:$0xff] %vm380, %v3756
        %3773 = vst.msk [vmem:[#allocation2 + $0x30] sm:$0xff] %vm380, %v3757
        %3774 = vst.msk [vmem:[#allocation2 + $0x38] sm:$0xff] %vm380, %v3758
        %3775 = vst.msk [vmem:[#allocation2 + $0x40] sm:$0xff] %vm380, %v3759
        %3776 = vst.msk [vmem:[#allocation2 + $0x48] sm:$0xff] %vm380, %v3760
        %3777 = vst.msk [vmem:[#allocation2 + $0x50] sm:$0xff] %vm380, %v3761
        %3778 = vst.msk [vmem:[#allocation2 + $0x58] sm:$0xff] %vm380, %v3762
        %3779 = vst.msk [vmem:[#allocation2 + $0x60] sm:$0xff] %vm380, %v3763
        %3780 = vst.msk [vmem:[#allocation2 + $0x68] sm:$0xff] %vm380, %v3764
        %3781 = vst.msk [vmem:[#allocation2 + $0x70] sm:$0xff] %vm380, %v3765
        %3782 = vst.msk [vmem:[#allocation2 + $0x78] sm:$0xff] %vm380, %v3766
        %p3783 = scmp.eq.s32.totalorder %s29, 14
        // Predicated region
        $region41: #{tpu_custom_call.1} parent=31 // pred_check
          %p3784 = pneg %p3783
        $region42: #{tpu_custom_call.1} parent=31 // pred_check_branch
          %3786 = sbr.rel (%p3784) target = $region44
        $region43: #{tpu_custom_call.1} parent=31 // pred_region
          %v3787 = vld [vmem:[#allocation2] sm:$0xff]
          %v3788 = vld [vmem:[#allocation2 + $0x8] sm:$0xff]
          %v3789 = vld [vmem:[#allocation2 + $0x10] sm:$0xff]
          %v3790 = vld [vmem:[#allocation2 + $0x18] sm:$0xff]
          %v3791 = vld [vmem:[#allocation2 + $0x20] sm:$0xff]
          %v3792 = vld [vmem:[#allocation2 + $0x28] sm:$0xff]
          %v3793 = vld [vmem:[#allocation2 + $0x30] sm:$0xff]
          %v3794 = vld [vmem:[#allocation2 + $0x38] sm:$0xff]
          %v3795 = vld [vmem:[#allocation2 + $0x40] sm:$0xff]
          %v3796 = vld [vmem:[#allocation2 + $0x48] sm:$0xff]
          %v3797 = vld [vmem:[#allocation2 + $0x50] sm:$0xff]
          %v3798 = vld [vmem:[#allocation2 + $0x58] sm:$0xff]
          %v3799 = vld [vmem:[#allocation2 + $0x60] sm:$0xff]
          %v3800 = vld [vmem:[#allocation2 + $0x68] sm:$0xff]
          %v3801 = vld [vmem:[#allocation2 + $0x70] sm:$0xff]
          %v3802 = vld [vmem:[#allocation2 + $0x78] sm:$0xff]
          %v3803 = vld [vmem:[%s255] sm:$0x1]
          %v3805 = vlaneseq
          %v3806 = vshrl.u32 %v3805, 7
          %v3807 = vsub.s32 0, %v3806
          %v3808 = vrot.slane %v3803, %v3807
          %v3810 = vadd.f32 %v3787, %v3808
          %v3811 = vadd.f32 %v3788, %v3808
          %v3812 = vadd.f32 %v3789, %v3808
          %v3813 = vadd.f32 %v3790, %v3808
          %v3814 = vadd.f32 %v3791, %v3808
          %v3815 = vadd.f32 %v3792, %v3808
          %v3816 = vadd.f32 %v3793, %v3808
          %v3817 = vadd.f32 %v3794, %v3808
          %v3818 = vadd.f32 %v3795, %v3808
          %v3819 = vadd.f32 %v3796, %v3808
          %v3820 = vadd.f32 %v3797, %v3808
          %v3821 = vadd.f32 %v3798, %v3808
          %v3822 = vadd.f32 %v3799, %v3808
          %v3823 = vadd.f32 %v3800, %v3808
          %v3824 = vadd.f32 %v3801, %v3808
          %v3825 = vadd.f32 %v3802, %v3808
          %3826 = vst.msk [vmem:[%s247] sm:$0xff] %vm380, %v3810
          %3827 = vst.msk [vmem:[%s247 + $0x8] sm:$0xff] %vm380, %v3811
          %3828 = vst.msk [vmem:[%s247 + $0x10] sm:$0xff] %vm380, %v3812
          %3829 = vst.msk [vmem:[%s247 + $0x18] sm:$0xff] %vm380, %v3813
          %3830 = vst.msk [vmem:[%s247 + $0x20] sm:$0xff] %vm380, %v3814
          %3831 = vst.msk [vmem:[%s247 + $0x28] sm:$0xff] %vm380, %v3815
          %3832 = vst.msk [vmem:[%s247 + $0x30] sm:$0xff] %vm380, %v3816
          %3833 = vst.msk [vmem:[%s247 + $0x38] sm:$0xff] %vm380, %v3817
          %3834 = vst.msk [vmem:[%s247 + $0x40] sm:$0xff] %vm380, %v3818
          %3835 = vst.msk [vmem:[%s247 + $0x48] sm:$0xff] %vm380, %v3819
          %3836 = vst.msk [vmem:[%s247 + $0x50] sm:$0xff] %vm380, %v3820
          %3837 = vst.msk [vmem:[%s247 + $0x58] sm:$0xff] %vm380, %v3821
          %3838 = vst.msk [vmem:[%s247 + $0x60] sm:$0xff] %vm380, %v3822
          %3839 = vst.msk [vmem:[%s247 + $0x68] sm:$0xff] %vm380, %v3823
          %3840 = vst.msk [vmem:[%s247 + $0x70] sm:$0xff] %vm380, %v3824
          %3841 = vst.msk [vmem:[%s247 + $0x78] sm:$0xff] %vm380, %v3825
        $region44: #{tpu_custom_call.1} parent=31 // pred_fallthru
          _
        %s3842 = sand.u32 %s138, 1
        %s3843 = scalar_lea.sflag [#allocation5], %s3842
        %s3844 = sand.u32 %s138, 1
        %s3845 = smul.addr %s3844, 128
        %s3846 = scalar_lea.vmem [#allocation6], %s3845
        // Predicated region
        $region45: #{tpu_custom_call.1} parent=31 // pred_check
          %p3847 = pneg %p148
        $region46: #{tpu_custom_call.1} parent=31 // pred_check_branch
          %3849 = sbr.rel (%p3847) target = $region48
        $region47: #{tpu_custom_call.1} parent=31 // pred_region
          %s3850 = smul.u32 8, %s27
          %s3852 = ssub.s32 2048, 2048
          %3853 = vsyncadd %s3843, %s3852
          %s3854 = smul.addr %s3850, 2
          %s3855 = sadd.s32 %s28, %s3854
          %s3856 = smul.addr %s26, 32
          %s3857 = sadd.s32 %s3855, %s3856
          %s3858 = smul.addr %s3857, 128
          %s3859 = scalar_lea.hbm %s3, %s3858
          %s3860 = sshll.u32 %s3846, 4
          %s3861 = int_to_ptr.vmem [resolvable:$true] %s3860
          %3866 = dma.vmem_to_hbm [thread:$0]  %s3861, 2048, %s3859, %s3843, 128, 128, 8
        $region48: #{tpu_custom_call.1} parent=31 // pred_fallthru
          _
      $region32: #{tpu_custom_call.1} parent=5 // pred_fallthru
        _
      %p3867 = scmp.le.s32.totalorder 2, %s15
      // Predicated region
      $region49: #{tpu_custom_call.1} parent=5 // pred_check
        %p3868 = pneg %p3867
      $region50: #{tpu_custom_call.1} parent=5 // pred_check_branch
        %3870 = sbr.rel (%p3868) target = $region52
      $region51: #{tpu_custom_call.1} parent=5 // pred_region
        %s3871 = ssub.s32 %s15, 2
        // Predicated region
        $region53: #{tpu_custom_call.1} parent=51 // pred_check
          %p3872 = pneg %p154
        $region54: #{tpu_custom_call.1} parent=51 // pred_check_branch
          %3874 = sbr.rel (%p3872) target = $region56
        $region55: #{tpu_custom_call.1} parent=51 // pred_region
          %s3875 = sand.u32 %s139, 1
          %s3876 = scalar_lea.sflag [#allocation5], %s3875
          %s3877 = sand.u32 %s139, 1
          %s3878 = smul.addr %s3877, 128
          %s3879 = scalar_lea.vmem [#allocation6], %s3878
          %3880 = dma.done %s3876, 2048
        $region56: #{tpu_custom_call.1} parent=51 // pred_fallthru
          _
      $region52: #{tpu_custom_call.1} parent=5 // pred_fallthru
        _
    $region6: #{tpu_custom_call.1} parent=1 // loop_footer
      %s19 = sadd.s32 1, %s15
    $region7: #{tpu_custom_call.1} parent=1 // loop_footer_branch
      %14 = sbr.rel target = $region3
    $region8: #{tpu_custom_call.1} parent=1 // loop_exit
      _
    %3881 = vsyncpa [#allocation4], 1
    %s3882 = scalar_lea.sflag [#allocation4], 1
    %3883 = vsyncpa %s3882, 1
    %3884 = vsyncpa [#allocation5], 1
    %s3885 = scalar_lea.sflag [#allocation5], 1
    %3886 = vsyncpa %s3885, 1

</llo_original>
